<compile_context>
chip_gen: v6e
topology: v6e:2x2x1
jax: 0.10.0
libtpu: 0.0.40
codegen_flags: <defaults>
</compile_context>

<pallas_src>
import jax
import jax.numpy as jnp
from jax import lax
from jax.experimental import pallas as pl
from jax.experimental.pallas import tpu as pltpu


def _round_up(n, m):
    return ((n + m - 1) // m) * m


# --------------------- shared matmul + bias kernel (MXU) ---------------------
def _matmul_bias_kernel(x_ref, wT_ref, b_ref, o_ref):
    # x: (TN, K) bf16, wT: (K, M) bf16, b: (1, M) f32 -> o: (TN, M) f32
    o_ref[...] = (
        jnp.dot(x_ref[...], wT_ref[...], preferred_element_type=jnp.float32)
        + b_ref[...]
    ).astype(o_ref.dtype)


def matmul_bias(x2d, wT, b, *, max_tile_n=512):
    """x2d: (N, K) bf16, wT: (K, M) bf16 (pre-transposed), b: (1, M) f32.

    K and M must be multiples of 128 (caller pads).  Tiled over N, weights
    stay resident (constant index map)."""
    N, K = x2d.shape
    M = wT.shape[1]
    TN = min(_round_up(N, 8), max_tile_n)
    Np = _round_up(N, TN)
    if Np != N:
        x2d = jnp.pad(x2d, ((0, Np - N), (0, 0)))
    out = pl.pallas_call(
        _matmul_bias_kernel,
        out_shape=jax.ShapeDtypeStruct((Np, M), jnp.float32),
        grid=(Np // TN,),
        in_specs=[
            pl.BlockSpec((TN, K), lambda i: (i, 0)),   # activations, streamed
            pl.BlockSpec((K, M), lambda i: (0, 0)),    # W^T, resident
            pl.BlockSpec((1, M), lambda i: (0, 0)),    # bias, resident
        ],
        out_specs=pl.BlockSpec((TN, M), lambda i: (i, 0)),
        compiler_params=pltpu.CompilerParams(
            dimension_semantics=("parallel",),
            vmem_limit_bytes=64 * 1024 * 1024,
        ),
    )(x2d, wT, b)
    return out[:N]


# --------------------------- LSTM recurrence kernel ---------------------------
def _lstm_recurrence_kernel(xproj_ref, whhT_ref, hseq_ref, h_scr, c_scr):
    """Recurrence over one time tile; h/c carried in scratch across the grid.

    xproj_ref: (TS, Bp, 4*Hp) f32   -- x_t @ W_ih^T + (b_ih + b_hh), precomputed
    whhT_ref:  (Hp, 4*Hp)     bf16  -- pre-transposed recurrent weight (resident)
    hseq_ref:  (TS, Bp, Hp)   f32   -- output hidden sequence tile
    PyTorch gate order: i, f, g, o (each padded to Hp lanes).
    """
    TS = xproj_ref.shape[0]
    Hp = whhT_ref.shape[0]

    @pl.when(pl.program_id(0) == 0)
    def _():
        h_scr[...] = jnp.zeros_like(h_scr)
        c_scr[...] = jnp.zeros_like(c_scr)

    def step(t, carry):
        h_prev = h_scr[...]
        c_prev = c_scr[...]
        # Single MXU matmul per step; bias already folded into xproj.
        gates = xproj_ref[t] + jnp.dot(
            h_prev.astype(jnp.bfloat16), whhT_ref[...],
            preferred_element_type=jnp.float32)
        # Lane-aligned (multiples of 128) gate slices.
        i_g = jax.nn.sigmoid(gates[:, 0 * Hp:1 * Hp])
        f_g = jax.nn.sigmoid(gates[:, 1 * Hp:2 * Hp])
        g_g = jnp.tanh(gates[:, 2 * Hp:3 * Hp])
        o_g = jax.nn.sigmoid(gates[:, 3 * Hp:4 * Hp])
        c_new = f_g * c_prev + i_g * g_g
        h_new = o_g * jnp.tanh(c_new)
        c_scr[...] = c_new
        h_scr[...] = h_new
        hseq_ref[t] = h_new.astype(hseq_ref.dtype)
        return carry

    # Short fixed trip-count: unroll for LLO scheduler visibility.
    lax.fori_loop(0, TS, step, 0, unroll=True)


def lstm_layer(x_pad, wihT, whhT, bias, Hp, ts):
    """One LSTM layer. x_pad: (Sp, Bp, Dp) f32 -> (Sp, Bp, Hp) f32.

    Sp must be a multiple of ts (wrapper guarantees it)."""
    Sp, Bp, Dp = x_pad.shape
    # Hoisted input projection for all timesteps: one big MXU matmul.
    xproj = matmul_bias(
        x_pad.reshape(Sp * Bp, Dp).astype(jnp.bfloat16), wihT, bias)
    xproj = xproj.reshape(Sp, Bp, 4 * Hp)
    return pl.pallas_call(
        _lstm_recurrence_kernel,
        out_shape=jax.ShapeDtypeStruct((Sp, Bp, Hp), jnp.float32),
        grid=(Sp // ts,),
        in_specs=[
            pl.BlockSpec((ts, Bp, 4 * Hp), lambda s: (s, 0, 0)),  # streamed
            pl.BlockSpec((Hp, 4 * Hp), lambda s: (0, 0)),         # resident
        ],
        out_specs=pl.BlockSpec((ts, Bp, Hp), lambda s: (s, 0, 0)),
        scratch_shapes=[
            pltpu.VMEM((Bp, Hp), jnp.float32),   # h state (persists across grid)
            pltpu.VMEM((Bp, Hp), jnp.float32),   # c state (persists across grid)
        ],
        compiler_params=pltpu.CompilerParams(
            dimension_semantics=("arbitrary",),   # sequential recurrence
            vmem_limit_bytes=64 * 1024 * 1024),
    )(xproj, whhT)


# ------------------------- weight packing (wrapper side) -------------------------
def _pack_gate_weightT(w, H, Hp, rows_pad):
    """PyTorch (4H, Din) weight -> transposed, per-gate zero-padded (rows_pad, 4Hp)."""
    Din = w.shape[1]
    wT = w.astype(jnp.float32).T                      # (Din, 4H)
    out = jnp.zeros((rows_pad, 4 * Hp), jnp.float32)
    for k in range(4):
        out = out.at[:Din, k * Hp:k * Hp + H].set(wT[:, k * H:(k + 1) * H])
    return out


def _pack_gate_bias(b, H, Hp):
    out = jnp.zeros((1, 4 * Hp), jnp.float32)
    for k in range(4):
        out = out.at[0, k * Hp:k * Hp + H].set(
            b[k * H:(k + 1) * H].astype(jnp.float32))
    return out


def _pack_params(params, input_size):
    H = params["lstm_layers"][0]["w_hh"].shape[1]
    O = params["fc_w"].shape[0]
    Hp = _round_up(H, 128)
    D0p = _round_up(input_size, 128)
    Op = _round_up(O, 128)

    packed_layers = []
    for l, layer in enumerate(params["lstm_layers"]):
        rows_pad = D0p if l == 0 else Hp
        wihT = _pack_gate_weightT(layer["w_ih"], H, Hp, rows_pad)
        whhT = _pack_gate_weightT(layer["w_hh"], H, Hp, Hp)
        bias = _pack_gate_bias(layer["b_ih"] + layer["b_hh"], H, Hp)
        packed_layers.append(
            (wihT.astype(jnp.bfloat16), whhT.astype(jnp.bfloat16), bias))

    fcwT = jnp.zeros((Hp, Op), jnp.float32)
    fcwT = fcwT.at[:H, :O].set(params["fc_w"].astype(jnp.float32).T)
    fcb = jnp.zeros((1, Op), jnp.float32).at[0, :O].set(
        params["fc_b"].astype(jnp.float32))
    return packed_layers, fcwT.astype(jnp.bfloat16), fcb, Hp, D0p, Op, O


# ----------------------------- Full module forward -----------------------------
def lstm_model_forward(x, params, *, time_tile=8):
    """Forward pass of _LSTM. x: (seq, batch, input_size) -> (seq, batch, output)."""
    S, B, D = x.shape
    packed_layers, fcwT, fcb, Hp, D0p, Op, O = _pack_params(params, D)
    Bp = _round_up(B, 8)
    TS = min(S, time_tile)
    Sp = _round_up(S, TS)

    # Zero-pad batch (sublanes), feature (lanes), and trailing time steps;
    # padding stays inert (padded steps are after all real steps).
    h = jnp.zeros((Sp, Bp, D0p), jnp.float32).at[:S, :B, :D].set(
        x.astype(jnp.float32))

    for wihT, whhT, bias in packed_layers:
        h = lstm_layer(h, wihT, whhT, bias, Hp, TS)
        # dropout between layers is a no-op at inference time

    out = matmul_bias(h.reshape(Sp * Bp, Hp).astype(jnp.bfloat16), fcwT, fcb)
    out = out.reshape(Sp, Bp, Op)[:S, :B, :O]
    return out


# ----------------------------- Parameter init -----------------------------
def init_params(key, input_size, hidden_sizes, output_size):
    """Deterministic init matching nn.LSTM/nn.Linear shapes (uniform +/- 1/sqrt(H))."""
    H = hidden_sizes[-1]
    num_layers = len(hidden_sizes)
    bound = 1.0 / jnp.sqrt(jnp.float32(H))
    layers = []
    for l in range(num_layers):
        d_in = input_size if l == 0 else H
        key, k1, k2, k3, k4 = jax.random.split(key, 5)
        layers.append({
            "w_ih": jax.random.uniform(k1, (4 * H, d_in), jnp.float32, -bound, bound),
            "w_hh": jax.random.uniform(k2, (4 * H, H), jnp.float32, -bound, bound),
            "b_ih": jax.random.uniform(k3, (4 * H,), jnp.float32, -bound, bound),
            "b_hh": jax.random.uniform(k4, (4 * H,), jnp.float32, -bound, bound),
        })
    key, k5, k6 = jax.random.split(key, 3)
    return {
        "lstm_layers": layers,
        "fc_w": jax.random.uniform(k5, (output_size, H), jnp.float32, -bound, bound),
        "fc_b": jax.random.uniform(k6, (output_size,), jnp.float32, -bound, bound),
    }


# ----------------------------- Pure-JAX reference -----------------------------
def lstm_reference(x, params):
    S, B, _ = x.shape
    h_seq = x.astype(jnp.float32)
    for layer in params["lstm_layers"]:
        w_ih, w_hh = layer["w_ih"], layer["w_hh"]
        b = layer["b_ih"] + layer["b_hh"]
        H = w_hh.shape[1]
        h = jnp.zeros((B, H), jnp.float32)
        c = jnp.zeros((B, H), jnp.float32)
        outs = []
        for t in range(S):
            gates = h_seq[t] @ w_ih.T + h @ w_hh.T + b
            i = jax.nn.sigmoid(gates[:, 0 * H:1 * H])
            f = jax.nn.sigmoid(gates[:, 1 * H:2 * H])
            g = jnp.tanh(gates[:, 2 * H:3 * H])
            o = jax.nn.sigmoid(gates[:, 3 * H:4 * H])
            c = f * c + i * g
            h = o * jnp.tanh(c)
            outs.append(h)
        h_seq = jnp.stack(outs)
    return h_seq @ params["fc_w"].T + params["fc_b"]


if __name__ == "__main__":
    # Small shapes consistent with the module's forward:
    # x: (seq=8, batch=2, input_size=4); hidden_sizes=[32, 32]; output_size=4.
    seq, batch, input_size = 8, 2, 4
    hidden_sizes = [32, 32]
    output_size = 4

    key = jax.random.PRNGKey(0)
    key, kx = jax.random.split(key)
    x = jax.random.normal(kx, (seq, batch, input_size), jnp.float32)
    params = init_params(key, input_size, hidden_sizes, output_size)

    fwd = jax.jit(lstm_model_forward)
    out = jax.block_until_ready(fwd(x, params))
    assert out.shape == (seq, batch, output_size), out.shape
    assert bool(jnp.all(jnp.isfinite(out)))

    # Correctness check against a pure-JAX f32 reference (bf16 MXU tolerance).
    ref = lstm_reference(x, params)
    max_err = float(jnp.max(jnp.abs(out - ref)))
    assert max_err < 5e-2, f"max abs err vs reference: {max_err}"

    print("KERNEL_OK")
</pallas_src>

<mosaic_0001>
module attributes {stable_mosaic.version = 11 : i64} {
  func.func @_matmul_bias_kernel(%arg0: i32, %arg1: memref<64x128xbf16, #tpu.memory_space<vmem>>, %arg2: memref<128x512xbf16, #tpu.memory_space<vmem>>, %arg3: memref<1x512xf32, #tpu.memory_space<vmem>>, %arg4: memref<64x512xf32, #tpu.memory_space<vmem>>) attributes {dimension_semantics = [#tpu.dimension_semantics<parallel>], iteration_bounds = array<i64: 1>, scalar_prefetch = 0 : i64, scratch_operands = 0 : i64, tpu.core_type = #tpu.core_type<tc>, window_params = [{transform_indices = @transform_0, window_bounds = array<i64: 64, 128>}, {pipeline_mode = #tpu.pipeline_mode<synchronous>, transform_indices = @transform_1, window_bounds = array<i64: 128, 512>}, {pipeline_mode = #tpu.pipeline_mode<synchronous>, transform_indices = @transform_2, window_bounds = array<i64: 1, 512>}, {transform_indices = @transform_3, window_bounds = array<i64: 64, 512>}]} {
    %c0 = arith.constant 0 : index
    %c0_0 = arith.constant 0 : index
    %0 = vector.load %arg1[%c0, %c0_0] : memref<64x128xbf16, #tpu.memory_space<vmem>>, vector<64x128xbf16>
    %c0_1 = arith.constant 0 : index
    %c0_2 = arith.constant 0 : index
    %1 = vector.load %arg2[%c0_1, %c0_2] : memref<128x512xbf16, #tpu.memory_space<vmem>>, vector<128x512xbf16>
    %cst = arith.constant dense<0.000000e+00> : vector<64x512xf32>
    %2 = tpu.matmul %0, %1, %cst {dimension_numbers = #tpu.dot_dimension_numbers<[1], [0], [0], [1], [0, 0, 1, 1], [], []>} : vector<64x128xbf16>, vector<128x512xbf16>, vector<64x512xf32> -> vector<64x512xf32>
    %c0_3 = arith.constant 0 : index
    %c0_4 = arith.constant 0 : index
    %3 = vector.load %arg3[%c0_3, %c0_4] : memref<1x512xf32, #tpu.memory_space<vmem>>, vector<1x512xf32>
    %4 = vector.broadcast %3 : vector<1x512xf32> to vector<64x512xf32>
    %5 = arith.addf %2, %4 : vector<64x512xf32>
    %c0_5 = arith.constant 0 : index
    %c0_6 = arith.constant 0 : index
    %6 = vector.load %arg4[%c0_5, %c0_6] : memref<64x512xf32, #tpu.memory_space<vmem>>, vector<64x512xf32>
    tpu.vector_store %arg4[%c0_5, %c0_6], %5 {strides = array<i32>} : memref<64x512xf32, #tpu.memory_space<vmem>>, vector<64x512xf32>,
    return
  }
  func.func @transform_0(%arg0: i32) -> (i32, i32) {
    %c0_i32 = arith.constant 0 : i32
    %c0_i32_0 = arith.constant 0 : i32
    return %arg0, %c0_i32 : i32, i32
  }
  func.func @transform_1(%arg0: i32) -> (i32, i32) {
    %c0_i32 = arith.constant 0 : i32
    %c0_i32_0 = arith.constant 0 : i32
    %c0_i32_1 = arith.constant 0 : i32
    return %c0_i32, %c0_i32_0 : i32, i32
  }
  func.func @transform_2(%arg0: i32) -> (i32, i32) {
    %c0_i32 = arith.constant 0 : i32
    %c0_i32_0 = arith.constant 0 : i32
    %c0_i32_1 = arith.constant 0 : i32
    return %c0_i32, %c0_i32_0 : i32, i32
  }
  func.func @transform_3(%arg0: i32) -> (i32, i32) {
    %c0_i32 = arith.constant 0 : i32
    %c0_i32_0 = arith.constant 0 : i32
    return %arg0, %c0_i32 : i32, i32
  }
}

module attributes {stable_mosaic.version = 11 : i64} {
  func.func @_lstm_recurrence_kernel(%arg0: i32, %arg1: memref<8x8x512xf32, #tpu.memory_space<vmem>>, %arg2: memref<128x512xbf16, #tpu.memory_space<vmem>>, %arg3: memref<8x8x128xf32, #tpu.memory_space<vmem>>, %arg4: memref<8x128xf32, #tpu.memory_space<vmem>>, %arg5: memref<8x128xf32, #tpu.memory_space<vmem>>) attributes {dimension_semantics = [#tpu.dimension_semantics<arbitrary>], iteration_bounds = array<i64: 1>, scalar_prefetch = 0 : i64, scratch_operands = 2 : i64, tpu.core_type = #tpu.core_type<tc>, window_params = [{transform_indices = @transform_0, window_bounds = array<i64: 8, 8, 512>}, {pipeline_mode = #tpu.pipeline_mode<synchronous>, transform_indices = @transform_1, window_bounds = array<i64: 128, 512>}, {transform_indices = @transform_2, window_bounds = array<i64: 8, 8, 128>}]} {
    %c0_i32 = arith.constant 0 : i32
    %0 = arith.cmpi eq, %arg0, %c0_i32 : i32
    %1 = arith.extui %0 : i1 to i32
    %c0_i32_0 = arith.constant 0 : i32
    %2 = arith.cmpi ne, %1, %c0_i32_0 : i32
    scf.if %2 {
      %cst_144 = arith.constant 0.000000e+00 : f32
      %323 = vector.broadcast %cst_144 : f32 to vector<8x128xf32>
      %c0_145 = arith.constant 0 : index
      %c0_146 = arith.constant 0 : index
      %324 = vector.load %arg4[%c0_145, %c0_146] : memref<8x128xf32, #tpu.memory_space<vmem>>, vector<8x128xf32>
      tpu.vector_store %arg4[%c0_145, %c0_146], %323 {strides = array<i32>} : memref<8x128xf32, #tpu.memory_space<vmem>>, vector<8x128xf32>,
      %cst_147 = arith.constant 0.000000e+00 : f32
      %325 = vector.broadcast %cst_147 : f32 to vector<8x128xf32>
      %c0_148 = arith.constant 0 : index
      %c0_149 = arith.constant 0 : index
      %326 = vector.load %arg5[%c0_148, %c0_149] : memref<8x128xf32, #tpu.memory_space<vmem>>, vector<8x128xf32>
      tpu.vector_store %arg5[%c0_148, %c0_149], %325 {strides = array<i32>} : memref<8x128xf32, #tpu.memory_space<vmem>>, vector<8x128xf32>,
    } else {
    }
    %c0_i32_1 = arith.constant 0 : i32
    %c0 = arith.constant 0 : index
    %c0_2 = arith.constant 0 : index
    %3 = vector.load %arg4[%c0, %c0_2] : memref<8x128xf32, #tpu.memory_space<vmem>>, vector<8x128xf32>
    %c0_3 = arith.constant 0 : index
    %c0_4 = arith.constant 0 : index
    %4 = vector.load %arg5[%c0_3, %c0_4] : memref<8x128xf32, #tpu.memory_space<vmem>>, vector<8x128xf32>
    %5 = arith.index_cast %c0_i32_1 : i32 to index
    %c0_5 = arith.constant 0 : index
    %c0_6 = arith.constant 0 : index
    %6 = vector.load %arg1[%5, %c0_5, %c0_6] : memref<8x8x512xf32, #tpu.memory_space<vmem>>, vector<1x8x512xf32>
    %7 = vector.shape_cast %6 : vector<1x8x512xf32> to vector<8x512xf32>
    %8 = arith.truncf %3 : vector<8x128xf32> to vector<8x128xbf16>
    %c0_7 = arith.constant 0 : index
    %c0_8 = arith.constant 0 : index
    %9 = vector.load %arg2[%c0_7, %c0_8] : memref<128x512xbf16, #tpu.memory_space<vmem>>, vector<128x512xbf16>
    %cst = arith.constant dense<0.000000e+00> : vector<8x512xf32>
    %10 = tpu.matmul %8, %9, %cst {dimension_numbers = #tpu.dot_dimension_numbers<[1], [0], [0], [1], [0, 0, 1, 1], [], []>} : vector<8x128xbf16>, vector<128x512xbf16>, vector<8x512xf32> -> vector<8x512xf32>
    %11 = arith.addf %7, %10 : vector<8x512xf32>
    %12 = vector.extract_strided_slice %11 {offsets = [0, 0], sizes = [8, 128], strides = [1, 1]} : vector<8x512xf32> to vector<8x128xf32>
    %13 = arith.negf %12 : vector<8x128xf32>
    %14 = math.exp %13 : vector<8x128xf32>
    %cst_9 = arith.constant 1.000000e+00 : f32
    %15 = vector.broadcast %cst_9 : f32 to vector<8x128xf32>
    %16 = arith.addf %15, %14 : vector<8x128xf32>
    %17 = arith.divf %15, %16 : vector<8x128xf32>
    %18 = vector.extract_strided_slice %11 {offsets = [0, 128], sizes = [8, 128], strides = [1, 1]} : vector<8x512xf32> to vector<8x128xf32>
    %19 = arith.negf %18 : vector<8x128xf32>
    %20 = math.exp %19 : vector<8x128xf32>
    %cst_10 = arith.constant 1.000000e+00 : f32
    %21 = vector.broadcast %cst_10 : f32 to vector<8x128xf32>
    %22 = arith.addf %21, %20 : vector<8x128xf32>
    %23 = arith.divf %21, %22 : vector<8x128xf32>
    %24 = vector.extract_strided_slice %11 {offsets = [0, 256], sizes = [8, 128], strides = [1, 1]} : vector<8x512xf32> to vector<8x128xf32>
    %25 = math.tanh %24 : vector<8x128xf32>
    %26 = vector.extract_strided_slice %11 {offsets = [0, 384], sizes = [8, 128], strides = [1, 1]} : vector<8x512xf32> to vector<8x128xf32>
    %27 = arith.negf %26 : vector<8x128xf32>
    %28 = math.exp %27 : vector<8x128xf32>
    %cst_11 = arith.constant 1.000000e+00 : f32
    %29 = vector.broadcast %cst_11 : f32 to vector<8x128xf32>
    %30 = arith.addf %29, %28 : vector<8x128xf32>
    %31 = arith.divf %29, %30 : vector<8x128xf32>
    %32 = arith.mulf %23, %4 : vector<8x128xf32>
    %33 = arith.mulf %17, %25 : vector<8x128xf32>
    %34 = arith.addf %32, %33 : vector<8x128xf32>
    %35 = math.tanh %34 : vector<8x128xf32>
    %36 = arith.mulf %31, %35 : vector<8x128xf32>
    %c0_12 = arith.constant 0 : index
    %c0_13 = arith.constant 0 : index
    %37 = vector.load %arg5[%c0_12, %c0_13] : memref<8x128xf32, #tpu.memory_space<vmem>>, vector<8x128xf32>
    tpu.vector_store %arg5[%c0_12, %c0_13], %34 {strides = array<i32>} : memref<8x128xf32, #tpu.memory_space<vmem>>, vector<8x128xf32>,
    %c0_14 = arith.constant 0 : index
    %c0_15 = arith.constant 0 : index
    %38 = vector.load %arg4[%c0_14, %c0_15] : memref<8x128xf32, #tpu.memory_space<vmem>>, vector<8x128xf32>
    tpu.vector_store %arg4[%c0_14, %c0_15], %36 {strides = array<i32>} : memref<8x128xf32, #tpu.memory_space<vmem>>, vector<8x128xf32>,
    %39 = arith.index_cast %c0_i32_1 : i32 to index
    %c0_16 = arith.constant 0 : index
    %c0_17 = arith.constant 0 : index
    %40 = vector.load %arg3[%39, %c0_16, %c0_17] : memref<8x8x128xf32, #tpu.memory_space<vmem>>, vector<1x8x128xf32>
    %41 = vector.shape_cast %40 : vector<1x8x128xf32> to vector<8x128xf32>
    %42 = vector.shape_cast %36 : vector<8x128xf32> to vector<1x8x128xf32>
    tpu.vector_store %arg3[%39, %c0_16, %c0_17], %42 {strides = array<i32>} : memref<8x8x128xf32, #tpu.memory_space<vmem>>, vector<1x8x128xf32>,
    %c1_i32 = arith.constant 1 : i32
    %c0_18 = arith.constant 0 : index
    %c0_19 = arith.constant 0 : index
    %43 = vector.load %arg4[%c0_18, %c0_19] : memref<8x128xf32, #tpu.memory_space<vmem>>, vector<8x128xf32>
    %c0_20 = arith.constant 0 : index
    %c0_21 = arith.constant 0 : index
    %44 = vector.load %arg5[%c0_20, %c0_21] : memref<8x128xf32, #tpu.memory_space<vmem>>, vector<8x128xf32>
    %45 = arith.index_cast %c1_i32 : i32 to index
    %c0_22 = arith.constant 0 : index
    %c0_23 = arith.constant 0 : index
    %46 = vector.load %arg1[%45, %c0_22, %c0_23] : memref<8x8x512xf32, #tpu.memory_space<vmem>>, vector<1x8x512xf32>
    %47 = vector.shape_cast %46 : vector<1x8x512xf32> to vector<8x512xf32>
    %48 = arith.truncf %43 : vector<8x128xf32> to vector<8x128xbf16>
    %c0_24 = arith.constant 0 : index
    %c0_25 = arith.constant 0 : index
    %49 = vector.load %arg2[%c0_24, %c0_25] : memref<128x512xbf16, #tpu.memory_space<vmem>>, vector<128x512xbf16>
    %cst_26 = arith.constant dense<0.000000e+00> : vector<8x512xf32>
    %50 = tpu.matmul %48, %49, %cst_26 {dimension_numbers = #tpu.dot_dimension_numbers<[1], [0], [0], [1], [0, 0, 1, 1], [], []>} : vector<8x128xbf16>, vector<128x512xbf16>, vector<8x512xf32> -> vector<8x512xf32>
    %51 = arith.addf %47, %50 : vector<8x512xf32>
    %52 = vector.extract_strided_slice %51 {offsets = [0, 0], sizes = [8, 128], strides = [1, 1]} : vector<8x512xf32> to vector<8x128xf32>
    %53 = arith.negf %52 : vector<8x128xf32>
    %54 = math.exp %53 : vector<8x128xf32>
    %cst_27 = arith.constant 1.000000e+00 : f32
    %55 = vector.broadcast %cst_27 : f32 to vector<8x128xf32>
    %56 = arith.addf %55, %54 : vector<8x128xf32>
    %57 = arith.divf %55, %56 : vector<8x128xf32>
    %58 = vector.extract_strided_slice %51 {offsets = [0, 128], sizes = [8, 128], strides = [1, 1]} : vector<8x512xf32> to vector<8x128xf32>
    %59 = arith.negf %58 : vector<8x128xf32>
    %60 = math.exp %59 : vector<8x128xf32>
    %cst_28 = arith.constant 1.000000e+00 : f32
    %61 = vector.broadcast %cst_28 : f32 to vector<8x128xf32>
    %62 = arith.addf %61, %60 : vector<8x128xf32>
    %63 = arith.divf %61, %62 : vector<8x128xf32>
    %64 = vector.extract_strided_slice %51 {offsets = [0, 256], sizes = [8, 128], strides = [1, 1]} : vector<8x512xf32> to vector<8x128xf32>
    %65 = math.tanh %64 : vector<8x128xf32>
    %66 = vector.extract_strided_slice %51 {offsets = [0, 384], sizes = [8, 128], strides = [1, 1]} : vector<8x512xf32> to vector<8x128xf32>
    %67 = arith.negf %66 : vector<8x128xf32>
    %68 = math.exp %67 : vector<8x128xf32>
    %cst_29 = arith.constant 1.000000e+00 : f32
    %69 = vector.broadcast %cst_29 : f32 to vector<8x128xf32>
    %70 = arith.addf %69, %68 : vector<8x128xf32>
    %71 = arith.divf %69, %70 : vector<8x128xf32>
    %72 = arith.mulf %63, %44 : vector<8x128xf32>
    %73 = arith.mulf %57, %65 : vector<8x128xf32>
    %74 = arith.addf %72, %73 : vector<8x128xf32>
    %75 = math.tanh %74 : vector<8x128xf32>
    %76 = arith.mulf %71, %75 : vector<8x128xf32>
    %c0_30 = arith.constant 0 : index
    %c0_31 = arith.constant 0 : index
    %77 = vector.load %arg5[%c0_30, %c0_31] : memref<8x128xf32, #tpu.memory_space<vmem>>, vector<8x128xf32>
    tpu.vector_store %arg5[%c0_30, %c0_31], %74 {strides = array<i32>} : memref<8x128xf32, #tpu.memory_space<vmem>>, vector<8x128xf32>,
    %c0_32 = arith.constant 0 : index
    %c0_33 = arith.constant 0 : index
    %78 = vector.load %arg4[%c0_32, %c0_33] : memref<8x128xf32, #tpu.memory_space<vmem>>, vector<8x128xf32>
    tpu.vector_store %arg4[%c0_32, %c0_33], %76 {strides = array<i32>} : memref<8x128xf32, #tpu.memory_space<vmem>>, vector<8x128xf32>,
    %79 = arith.index_cast %c1_i32 : i32 to index
    %c0_34 = arith.constant 0 : index
    %c0_35 = arith.constant 0 : index
    %80 = vector.load %arg3[%79, %c0_34, %c0_35] : memref<8x8x128xf32, #tpu.memory_space<vmem>>, vector<1x8x128xf32>
    %81 = vector.shape_cast %80 : vector<1x8x128xf32> to vector<8x128xf32>
    %82 = vector.shape_cast %76 : vector<8x128xf32> to vector<1x8x128xf32>
    tpu.vector_store %arg3[%79, %c0_34, %c0_35], %82 {strides = array<i32>} : memref<8x8x128xf32, #tpu.memory_space<vmem>>, vector<1x8x128xf32>,
    %c2_i32 = arith.constant 2 : i32
    %c0_36 = arith.constant 0 : index
    %c0_37 = arith.constant 0 : index
    %83 = vector.load %arg4[%c0_36, %c0_37] : memref<8x128xf32, #tpu.memory_space<vmem>>, vector<8x128xf32>
    %c0_38 = arith.constant 0 : index
    %c0_39 = arith.constant 0 : index
    %84 = vector.load %arg5[%c0_38, %c0_39] : memref<8x128xf32, #tpu.memory_space<vmem>>, vector<8x128xf32>
    %85 = arith.index_cast %c2_i32 : i32 to index
    %c0_40 = arith.constant 0 : index
    %c0_41 = arith.constant 0 : index
    %86 = vector.load %arg1[%85, %c0_40, %c0_41] : memref<8x8x512xf32, #tpu.memory_space<vmem>>, vector<1x8x512xf32>
    %87 = vector.shape_cast %86 : vector<1x8x512xf32> to vector<8x512xf32>
    %88 = arith.truncf %83 : vector<8x128xf32> to vector<8x128xbf16>
    %c0_42 = arith.constant 0 : index
    %c0_43 = arith.constant 0 : index
    %89 = vector.load %arg2[%c0_42, %c0_43] : memref<128x512xbf16, #tpu.memory_space<vmem>>, vector<128x512xbf16>
    %cst_44 = arith.constant dense<0.000000e+00> : vector<8x512xf32>
    %90 = tpu.matmul %88, %89, %cst_44 {dimension_numbers = #tpu.dot_dimension_numbers<[1], [0], [0], [1], [0, 0, 1, 1], [], []>} : vector<8x128xbf16>, vector<128x512xbf16>, vector<8x512xf32> -> vector<8x512xf32>
    %91 = arith.addf %87, %90 : vector<8x512xf32>
    %92 = vector.extract_strided_slice %91 {offsets = [0, 0], sizes = [8, 128], strides = [1, 1]} : vector<8x512xf32> to vector<8x128xf32>
    %93 = arith.negf %92 : vector<8x128xf32>
    %94 = math.exp %93 : vector<8x128xf32>
    %cst_45 = arith.constant 1.000000e+00 : f32
    %95 = vector.broadcast %cst_45 : f32 to vector<8x128xf32>
    %96 = arith.addf %95, %94 : vector<8x128xf32>
    %97 = arith.divf %95, %96 : vector<8x128xf32>
    %98 = vector.extract_strided_slice %91 {offsets = [0, 128], sizes = [8, 128], strides = [1, 1]} : vector<8x512xf32> to vector<8x128xf32>
    %99 = arith.negf %98 : vector<8x128xf32>
    %100 = math.exp %99 : vector<8x128xf32>
    %cst_46 = arith.constant 1.000000e+00 : f32
    %101 = vector.broadcast %cst_46 : f32 to vector<8x128xf32>
    %102 = arith.addf %101, %100 : vector<8x128xf32>
    %103 = arith.divf %101, %102 : vector<8x128xf32>
    %104 = vector.extract_strided_slice %91 {offsets = [0, 256], sizes = [8, 128], strides = [1, 1]} : vector<8x512xf32> to vector<8x128xf32>
    %105 = math.tanh %104 : vector<8x128xf32>
    %106 = vector.extract_strided_slice %91 {offsets = [0, 384], sizes = [8, 128], strides = [1, 1]} : vector<8x512xf32> to vector<8x128xf32>
    %107 = arith.negf %106 : vector<8x128xf32>
    %108 = math.exp %107 : vector<8x128xf32>
    %cst_47 = arith.constant 1.000000e+00 : f32
    %109 = vector.broadcast %cst_47 : f32 to vector<8x128xf32>
    %110 = arith.addf %109, %108 : vector<8x128xf32>
    %111 = arith.divf %109, %110 : vector<8x128xf32>
    %112 = arith.mulf %103, %84 : vector<8x128xf32>
    %113 = arith.mulf %97, %105 : vector<8x128xf32>
    %114 = arith.addf %112, %113 : vector<8x128xf32>
    %115 = math.tanh %114 : vector<8x128xf32>
    %116 = arith.mulf %111, %115 : vector<8x128xf32>
    %c0_48 = arith.constant 0 : index
    %c0_49 = arith.constant 0 : index
    %117 = vector.load %arg5[%c0_48, %c0_49] : memref<8x128xf32, #tpu.memory_space<vmem>>, vector<8x128xf32>
    tpu.vector_store %arg5[%c0_48, %c0_49], %114 {strides = array<i32>} : memref<8x128xf32, #tpu.memory_space<vmem>>, vector<8x128xf32>,
    %c0_50 = arith.constant 0 : index
    %c0_51 = arith.constant 0 : index
    %118 = vector.load %arg4[%c0_50, %c0_51] : memref<8x128xf32, #tpu.memory_space<vmem>>, vector<8x128xf32>
    tpu.vector_store %arg4[%c0_50, %c0_51], %116 {strides = array<i32>} : memref<8x128xf32, #tpu.memory_space<vmem>>, vector<8x128xf32>,
    %119 = arith.index_cast %c2_i32 : i32 to index
    %c0_52 = arith.constant 0 : index
    %c0_53 = arith.constant 0 : index
    %120 = vector.load %arg3[%119, %c0_52, %c0_53] : memref<8x8x128xf32, #tpu.memory_space<vmem>>, vector<1x8x128xf32>
    %121 = vector.shape_cast %120 : vector<1x8x128xf32> to vector<8x128xf32>
    %122 = vector.shape_cast %116 : vector<8x128xf32> to vector<1x8x128xf32>
    tpu.vector_store %arg3[%119, %c0_52, %c0_53], %122 {strides = array<i32>} : memref<8x8x128xf32, #tpu.memory_space<vmem>>, vector<1x8x128xf32>,
    %c3_i32 = arith.constant 3 : i32
    %c0_54 = arith.constant 0 : index
    %c0_55 = arith.constant 0 : index
    %123 = vector.load %arg4[%c0_54, %c0_55] : memref<8x128xf32, #tpu.memory_space<vmem>>, vector<8x128xf32>
    %c0_56 = arith.constant 0 : index
    %c0_57 = arith.constant 0 : index
    %124 = vector.load %arg5[%c0_56, %c0_57] : memref<8x128xf32, #tpu.memory_space<vmem>>, vector<8x128xf32>
    %125 = arith.index_cast %c3_i32 : i32 to index
    %c0_58 = arith.constant 0 : index
    %c0_59 = arith.constant 0 : index
    %126 = vector.load %arg1[%125, %c0_58, %c0_59] : memref<8x8x512xf32, #tpu.memory_space<vmem>>, vector<1x8x512xf32>
    %127 = vector.shape_cast %126 : vector<1x8x512xf32> to vector<8x512xf32>
    %128 = arith.truncf %123 : vector<8x128xf32> to vector<8x128xbf16>
    %c0_60 = arith.constant 0 : index
    %c0_61 = arith.constant 0 : index
    %129 = vector.load %arg2[%c0_60, %c0_61] : memref<128x512xbf16, #tpu.memory_space<vmem>>, vector<128x512xbf16>
    %cst_62 = arith.constant dense<0.000000e+00> : vector<8x512xf32>
    %130 = tpu.matmul %128, %129, %cst_62 {dimension_numbers = #tpu.dot_dimension_numbers<[1], [0], [0], [1], [0, 0, 1, 1], [], []>} : vector<8x128xbf16>, vector<128x512xbf16>, vector<8x512xf32> -> vector<8x512xf32>
    %131 = arith.addf %127, %130 : vector<8x512xf32>
    %132 = vector.extract_strided_slice %131 {offsets = [0, 0], sizes = [8, 128], strides = [1, 1]} : vector<8x512xf32> to vector<8x128xf32>
    %133 = arith.negf %132 : vector<8x128xf32>
    %134 = math.exp %133 : vector<8x128xf32>
    %cst_63 = arith.constant 1.000000e+00 : f32
    %135 = vector.broadcast %cst_63 : f32 to vector<8x128xf32>
    %136 = arith.addf %135, %134 : vector<8x128xf32>
    %137 = arith.divf %135, %136 : vector<8x128xf32>
    %138 = vector.extract_strided_slice %131 {offsets = [0, 128], sizes = [8, 128], strides = [1, 1]} : vector<8x512xf32> to vector<8x128xf32>
    %139 = arith.negf %138 : vector<8x128xf32>
    %140 = math.exp %139 : vector<8x128xf32>
    %cst_64 = arith.constant 1.000000e+00 : f32
    %141 = vector.broadcast %cst_64 : f32 to vector<8x128xf32>
    %142 = arith.addf %141, %140 : vector<8x128xf32>
    %143 = arith.divf %141, %142 : vector<8x128xf32>
    %144 = vector.extract_strided_slice %131 {offsets = [0, 256], sizes = [8, 128], strides = [1, 1]} : vector<8x512xf32> to vector<8x128xf32>
    %145 = math.tanh %144 : vector<8x128xf32>
    %146 = vector.extract_strided_slice %131 {offsets = [0, 384], sizes = [8, 128], strides = [1, 1]} : vector<8x512xf32> to vector<8x128xf32>
    %147 = arith.negf %146 : vector<8x128xf32>
    %148 = math.exp %147 : vector<8x128xf32>
    %cst_65 = arith.constant 1.000000e+00 : f32
    %149 = vector.broadcast %cst_65 : f32 to vector<8x128xf32>
    %150 = arith.addf %149, %148 : vector<8x128xf32>
    %151 = arith.divf %149, %150 : vector<8x128xf32>
    %152 = arith.mulf %143, %124 : vector<8x128xf32>
    %153 = arith.mulf %137, %145 : vector<8x128xf32>
    %154 = arith.addf %152, %153 : vector<8x128xf32>
    %155 = math.tanh %154 : vector<8x128xf32>
    %156 = arith.mulf %151, %155 : vector<8x128xf32>
    %c0_66 = arith.constant 0 : index
    %c0_67 = arith.constant 0 : index
    %157 = vector.load %arg5[%c0_66, %c0_67] : memref<8x128xf32, #tpu.memory_space<vmem>>, vector<8x128xf32>
    tpu.vector_store %arg5[%c0_66, %c0_67], %154 {strides = array<i32>} : memref<8x128xf32, #tpu.memory_space<vmem>>, vector<8x128xf32>,
    %c0_68 = arith.constant 0 : index
    %c0_69 = arith.constant 0 : index
    %158 = vector.load %arg4[%c0_68, %c0_69] : memref<8x128xf32, #tpu.memory_space<vmem>>, vector<8x128xf32>
    tpu.vector_store %arg4[%c0_68, %c0_69], %156 {strides = array<i32>} : memref<8x128xf32, #tpu.memory_space<vmem>>, vector<8x128xf32>,
    %159 = arith.index_cast %c3_i32 : i32 to index
    %c0_70 = arith.constant 0 : index
    %c0_71 = arith.constant 0 : index
    %160 = vector.load %arg3[%159, %c0_70, %c0_71] : memref<8x8x128xf32, #tpu.memory_space<vmem>>, vector<1x8x128xf32>
    %161 = vector.shape_cast %160 : vector<1x8x128xf32> to vector<8x128xf32>
    %162 = vector.shape_cast %156 : vector<8x128xf32> to vector<1x8x128xf32>
    tpu.vector_store %arg3[%159, %c0_70, %c0_71], %162 {strides = array<i32>} : memref<8x8x128xf32, #tpu.memory_space<vmem>>, vector<1x8x128xf32>,
    %c4_i32 = arith.constant 4 : i32
    %c0_72 = arith.constant 0 : index
    %c0_73 = arith.constant 0 : index
    %163 = vector.load %arg4[%c0_72, %c0_73] : memref<8x128xf32, #tpu.memory_space<vmem>>, vector<8x128xf32>
    %c0_74 = arith.constant 0 : index
    %c0_75 = arith.constant 0 : index
    %164 = vector.load %arg5[%c0_74, %c0_75] : memref<8x128xf32, #tpu.memory_space<vmem>>, vector<8x128xf32>
    %165 = arith.index_cast %c4_i32 : i32 to index
    %c0_76 = arith.constant 0 : index
    %c0_77 = arith.constant 0 : index
    %166 = vector.load %arg1[%165, %c0_76, %c0_77] : memref<8x8x512xf32, #tpu.memory_space<vmem>>, vector<1x8x512xf32>
    %167 = vector.shape_cast %166 : vector<1x8x512xf32> to vector<8x512xf32>
    %168 = arith.truncf %163 : vector<8x128xf32> to vector<8x128xbf16>
    %c0_78 = arith.constant 0 : index
    %c0_79 = arith.constant 0 : index
    %169 = vector.load %arg2[%c0_78, %c0_79] : memref<128x512xbf16, #tpu.memory_space<vmem>>, vector<128x512xbf16>
    %cst_80 = arith.constant dense<0.000000e+00> : vector<8x512xf32>
    %170 = tpu.matmul %168, %169, %cst_80 {dimension_numbers = #tpu.dot_dimension_numbers<[1], [0], [0], [1], [0, 0, 1, 1], [], []>} : vector<8x128xbf16>, vector<128x512xbf16>, vector<8x512xf32> -> vector<8x512xf32>
    %171 = arith.addf %167, %170 : vector<8x512xf32>
    %172 = vector.extract_strided_slice %171 {offsets = [0, 0], sizes = [8, 128], strides = [1, 1]} : vector<8x512xf32> to vector<8x128xf32>
    %173 = arith.negf %172 : vector<8x128xf32>
    %174 = math.exp %173 : vector<8x128xf32>
    %cst_81 = arith.constant 1.000000e+00 : f32
    %175 = vector.broadcast %cst_81 : f32 to vector<8x128xf32>
    %176 = arith.addf %175, %174 : vector<8x128xf32>
    %177 = arith.divf %175, %176 : vector<8x128xf32>
    %178 = vector.extract_strided_slice %171 {offsets = [0, 128], sizes = [8, 128], strides = [1, 1]} : vector<8x512xf32> to vector<8x128xf32>
    %179 = arith.negf %178 : vector<8x128xf32>
    %180 = math.exp %179 : vector<8x128xf32>
    %cst_82 = arith.constant 1.000000e+00 : f32
    %181 = vector.broadcast %cst_82 : f32 to vector<8x128xf32>
    %182 = arith.addf %181, %180 : vector<8x128xf32>
    %183 = arith.divf %181, %182 : vector<8x128xf32>
    %184 = vector.extract_strided_slice %171 {offsets = [0, 256], sizes = [8, 128], strides = [1, 1]} : vector<8x512xf32> to vector<8x128xf32>
    %185 = math.tanh %184 : vector<8x128xf32>
    %186 = vector.extract_strided_slice %171 {offsets = [0, 384], sizes = [8, 128], strides = [1, 1]} : vector<8x512xf32> to vector<8x128xf32>
    %187 = arith.negf %186 : vector<8x128xf32>
    %188 = math.exp %187 : vector<8x128xf32>
    %cst_83 = arith.constant 1.000000e+00 : f32
    %189 = vector.broadcast %cst_83 : f32 to vector<8x128xf32>
    %190 = arith.addf %189, %188 : vector<8x128xf32>
    %191 = arith.divf %189, %190 : vector<8x128xf32>
    %192 = arith.mulf %183, %164 : vector<8x128xf32>
    %193 = arith.mulf %177, %185 : vector<8x128xf32>
    %194 = arith.addf %192, %193 : vector<8x128xf32>
    %195 = math.tanh %194 : vector<8x128xf32>
    %196 = arith.mulf %191, %195 : vector<8x128xf32>
    %c0_84 = arith.constant 0 : index
    %c0_85 = arith.constant 0 : index
    %197 = vector.load %arg5[%c0_84, %c0_85] : memref<8x128xf32, #tpu.memory_space<vmem>>, vector<8x128xf32>
    tpu.vector_store %arg5[%c0_84, %c0_85], %194 {strides = array<i32>} : memref<8x128xf32, #tpu.memory_space<vmem>>, vector<8x128xf32>,
    %c0_86 = arith.constant 0 : index
    %c0_87 = arith.constant 0 : index
    %198 = vector.load %arg4[%c0_86, %c0_87] : memref<8x128xf32, #tpu.memory_space<vmem>>, vector<8x128xf32>
    tpu.vector_store %arg4[%c0_86, %c0_87], %196 {strides = array<i32>} : memref<8x128xf32, #tpu.memory_space<vmem>>, vector<8x128xf32>,
    %199 = arith.index_cast %c4_i32 : i32 to index
    %c0_88 = arith.constant 0 : index
    %c0_89 = arith.constant 0 : index
    %200 = vector.load %arg3[%199, %c0_88, %c0_89] : memref<8x8x128xf32, #tpu.memory_space<vmem>>, vector<1x8x128xf32>
    %201 = vector.shape_cast %200 : vector<1x8x128xf32> to vector<8x128xf32>
    %202 = vector.shape_cast %196 : vector<8x128xf32> to vector<1x8x128xf32>
    tpu.vector_store %arg3[%199, %c0_88, %c0_89], %202 {strides = array<i32>} : memref<8x8x128xf32, #tpu.memory_space<vmem>>, vector<1x8x128xf32>,
    %c5_i32 = arith.constant 5 : i32
    %c0_90 = arith.constant 0 : index
    %c0_91 = arith.constant 0 : index
    %203 = vector.load %arg4[%c0_90, %c0_91] : memref<8x128xf32, #tpu.memory_space<vmem>>, vector<8x128xf32>
    %c0_92 = arith.constant 0 : index
    %c0_93 = arith.constant 0 : index
    %204 = vector.load %arg5[%c0_92, %c0_93] : memref<8x128xf32, #tpu.memory_space<vmem>>, vector<8x128xf32>
    %205 = arith.index_cast %c5_i32 : i32 to index
    %c0_94 = arith.constant 0 : index
    %c0_95 = arith.constant 0 : index
    %206 = vector.load %arg1[%205, %c0_94, %c0_95] : memref<8x8x512xf32, #tpu.memory_space<vmem>>, vector<1x8x512xf32>
    %207 = vector.shape_cast %206 : vector<1x8x512xf32> to vector<8x512xf32>
    %208 = arith.truncf %203 : vector<8x128xf32> to vector<8x128xbf16>
    %c0_96 = arith.constant 0 : index
    %c0_97 = arith.constant 0 : index
    %209 = vector.load %arg2[%c0_96, %c0_97] : memref<128x512xbf16, #tpu.memory_space<vmem>>, vector<128x512xbf16>
    %cst_98 = arith.constant dense<0.000000e+00> : vector<8x512xf32>
    %210 = tpu.matmul %208, %209, %cst_98 {dimension_numbers = #tpu.dot_dimension_numbers<[1], [0], [0], [1], [0, 0, 1, 1], [], []>} : vector<8x128xbf16>, vector<128x512xbf16>, vector<8x512xf32> -> vector<8x512xf32>
    %211 = arith.addf %207, %210 : vector<8x512xf32>
    %212 = vector.extract_strided_slice %211 {offsets = [0, 0], sizes = [8, 128], strides = [1, 1]} : vector<8x512xf32> to vector<8x128xf32>
    %213 = arith.negf %212 : vector<8x128xf32>
    %214 = math.exp %213 : vector<8x128xf32>
    %cst_99 = arith.constant 1.000000e+00 : f32
    %215 = vector.broadcast %cst_99 : f32 to vector<8x128xf32>
    %216 = arith.addf %215, %214 : vector<8x128xf32>
    %217 = arith.divf %215, %216 : vector<8x128xf32>
    %218 = vector.extract_strided_slice %211 {offsets = [0, 128], sizes = [8, 128], strides = [1, 1]} : vector<8x512xf32> to vector<8x128xf32>
    %219 = arith.negf %218 : vector<8x128xf32>
    %220 = math.exp %219 : vector<8x128xf32>
    %cst_100 = arith.constant 1.000000e+00 : f32
    %221 = vector.broadcast %cst_100 : f32 to vector<8x128xf32>
    %222 = arith.addf %221, %220 : vector<8x128xf32>
    %223 = arith.divf %221, %222 : vector<8x128xf32>
    %224 = vector.extract_strided_slice %211 {offsets = [0, 256], sizes = [8, 128], strides = [1, 1]} : vector<8x512xf32> to vector<8x128xf32>
    %225 = math.tanh %224 : vector<8x128xf32>
    %226 = vector.extract_strided_slice %211 {offsets = [0, 384], sizes = [8, 128], strides = [1, 1]} : vector<8x512xf32> to vector<8x128xf32>
    %227 = arith.negf %226 : vector<8x128xf32>
    %228 = math.exp %227 : vector<8x128xf32>
    %cst_101 = arith.constant 1.000000e+00 : f32
    %229 = vector.broadcast %cst_101 : f32 to vector<8x128xf32>
    %230 = arith.addf %229, %228 : vector<8x128xf32>
    %231 = arith.divf %229, %230 : vector<8x128xf32>
    %232 = arith.mulf %223, %204 : vector<8x128xf32>
    %233 = arith.mulf %217, %225 : vector<8x128xf32>
    %234 = arith.addf %232, %233 : vector<8x128xf32>
    %235 = math.tanh %234 : vector<8x128xf32>
    %236 = arith.mulf %231, %235 : vector<8x128xf32>
    %c0_102 = arith.constant 0 : index
    %c0_103 = arith.constant 0 : index
    %237 = vector.load %arg5[%c0_102, %c0_103] : memref<8x128xf32, #tpu.memory_space<vmem>>, vector<8x128xf32>
    tpu.vector_store %arg5[%c0_102, %c0_103], %234 {strides = array<i32>} : memref<8x128xf32, #tpu.memory_space<vmem>>, vector<8x128xf32>,
    %c0_104 = arith.constant 0 : index
    %c0_105 = arith.constant 0 : index
    %238 = vector.load %arg4[%c0_104, %c0_105] : memref<8x128xf32, #tpu.memory_space<vmem>>, vector<8x128xf32>
    tpu.vector_store %arg4[%c0_104, %c0_105], %236 {strides = array<i32>} : memref<8x128xf32, #tpu.memory_space<vmem>>, vector<8x128xf32>,
    %239 = arith.index_cast %c5_i32 : i32 to index
    %c0_106 = arith.constant 0 : index
    %c0_107 = arith.constant 0 : index
    %240 = vector.load %arg3[%239, %c0_106, %c0_107] : memref<8x8x128xf32, #tpu.memory_space<vmem>>, vector<1x8x128xf32>
    %241 = vector.shape_cast %240 : vector<1x8x128xf32> to vector<8x128xf32>
    %242 = vector.shape_cast %236 : vector<8x128xf32> to vector<1x8x128xf32>
    tpu.vector_store %arg3[%239, %c0_106, %c0_107], %242 {strides = array<i32>} : memref<8x8x128xf32, #tpu.memory_space<vmem>>, vector<1x8x128xf32>,
    %c6_i32 = arith.constant 6 : i32
    %c0_108 = arith.constant 0 : index
    %c0_109 = arith.constant 0 : index
    %243 = vector.load %arg4[%c0_108, %c0_109] : memref<8x128xf32, #tpu.memory_space<vmem>>, vector<8x128xf32>
    %c0_110 = arith.constant 0 : index
    %c0_111 = arith.constant 0 : index
    %244 = vector.load %arg5[%c0_110, %c0_111] : memref<8x128xf32, #tpu.memory_space<vmem>>, vector<8x128xf32>
    %245 = arith.index_cast %c6_i32 : i32 to index
    %c0_112 = arith.constant 0 : index
    %c0_113 = arith.constant 0 : index
    %246 = vector.load %arg1[%245, %c0_112, %c0_113] : memref<8x8x512xf32, #tpu.memory_space<vmem>>, vector<1x8x512xf32>
    %247 = vector.shape_cast %246 : vector<1x8x512xf32> to vector<8x512xf32>
    %248 = arith.truncf %243 : vector<8x128xf32> to vector<8x128xbf16>
    %c0_114 = arith.constant 0 : index
    %c0_115 = arith.constant 0 : index
    %249 = vector.load %arg2[%c0_114, %c0_115] : memref<128x512xbf16, #tpu.memory_space<vmem>>, vector<128x512xbf16>
    %cst_116 = arith.constant dense<0.000000e+00> : vector<8x512xf32>
    %250 = tpu.matmul %248, %249, %cst_116 {dimension_numbers = #tpu.dot_dimension_numbers<[1], [0], [0], [1], [0, 0, 1, 1], [], []>} : vector<8x128xbf16>, vector<128x512xbf16>, vector<8x512xf32> -> vector<8x512xf32>
    %251 = arith.addf %247, %250 : vector<8x512xf32>
    %252 = vector.extract_strided_slice %251 {offsets = [0, 0], sizes = [8, 128], strides = [1, 1]} : vector<8x512xf32> to vector<8x128xf32>
    %253 = arith.negf %252 : vector<8x128xf32>
    %254 = math.exp %253 : vector<8x128xf32>
    %cst_117 = arith.constant 1.000000e+00 : f32
    %255 = vector.broadcast %cst_117 : f32 to vector<8x128xf32>
    %256 = arith.addf %255, %254 : vector<8x128xf32>
    %257 = arith.divf %255, %256 : vector<8x128xf32>
    %258 = vector.extract_strided_slice %251 {offsets = [0, 128], sizes = [8, 128], strides = [1, 1]} : vector<8x512xf32> to vector<8x128xf32>
    %259 = arith.negf %258 : vector<8x128xf32>
    %260 = math.exp %259 : vector<8x128xf32>
    %cst_118 = arith.constant 1.000000e+00 : f32
    %261 = vector.broadcast %cst_118 : f32 to vector<8x128xf32>
    %262 = arith.addf %261, %260 : vector<8x128xf32>
    %263 = arith.divf %261, %262 : vector<8x128xf32>
    %264 = vector.extract_strided_slice %251 {offsets = [0, 256], sizes = [8, 128], strides = [1, 1]} : vector<8x512xf32> to vector<8x128xf32>
    %265 = math.tanh %264 : vector<8x128xf32>
    %266 = vector.extract_strided_slice %251 {offsets = [0, 384], sizes = [8, 128], strides = [1, 1]} : vector<8x512xf32> to vector<8x128xf32>
    %267 = arith.negf %266 : vector<8x128xf32>
    %268 = math.exp %267 : vector<8x128xf32>
    %cst_119 = arith.constant 1.000000e+00 : f32
    %269 = vector.broadcast %cst_119 : f32 to vector<8x128xf32>
    %270 = arith.addf %269, %268 : vector<8x128xf32>
    %271 = arith.divf %269, %270 : vector<8x128xf32>
    %272 = arith.mulf %263, %244 : vector<8x128xf32>
    %273 = arith.mulf %257, %265 : vector<8x128xf32>
    %274 = arith.addf %272, %273 : vector<8x128xf32>
    %275 = math.tanh %274 : vector<8x128xf32>
    %276 = arith.mulf %271, %275 : vector<8x128xf32>
    %c0_120 = arith.constant 0 : index
    %c0_121 = arith.constant 0 : index
    %277 = vector.load %arg5[%c0_120, %c0_121] : memref<8x128xf32, #tpu.memory_space<vmem>>, vector<8x128xf32>
    tpu.vector_store %arg5[%c0_120, %c0_121], %274 {strides = array<i32>} : memref<8x128xf32, #tpu.memory_space<vmem>>, vector<8x128xf32>,
    %c0_122 = arith.constant 0 : index
    %c0_123 = arith.constant 0 : index
    %278 = vector.load %arg4[%c0_122, %c0_123] : memref<8x128xf32, #tpu.memory_space<vmem>>, vector<8x128xf32>
    tpu.vector_store %arg4[%c0_122, %c0_123], %276 {strides = array<i32>} : memref<8x128xf32, #tpu.memory_space<vmem>>, vector<8x128xf32>,
    %279 = arith.index_cast %c6_i32 : i32 to index
    %c0_124 = arith.constant 0 : index
    %c0_125 = arith.constant 0 : index
    %280 = vector.load %arg3[%279, %c0_124, %c0_125] : memref<8x8x128xf32, #tpu.memory_space<vmem>>, vector<1x8x128xf32>
    %281 = vector.shape_cast %280 : vector<1x8x128xf32> to vector<8x128xf32>
    %282 = vector.shape_cast %276 : vector<8x128xf32> to vector<1x8x128xf32>
    tpu.vector_store %arg3[%279, %c0_124, %c0_125], %282 {strides = array<i32>} : memref<8x8x128xf32, #tpu.memory_space<vmem>>, vector<1x8x128xf32>,
    %c7_i32 = arith.constant 7 : i32
    %c0_126 = arith.constant 0 : index
    %c0_127 = arith.constant 0 : index
    %283 = vector.load %arg4[%c0_126, %c0_127] : memref<8x128xf32, #tpu.memory_space<vmem>>, vector<8x128xf32>
    %c0_128 = arith.constant 0 : index
    %c0_129 = arith.constant 0 : index
    %284 = vector.load %arg5[%c0_128, %c0_129] : memref<8x128xf32, #tpu.memory_space<vmem>>, vector<8x128xf32>
    %285 = arith.index_cast %c7_i32 : i32 to index
    %c0_130 = arith.constant 0 : index
    %c0_131 = arith.constant 0 : index
    %286 = vector.load %arg1[%285, %c0_130, %c0_131] : memref<8x8x512xf32, #tpu.memory_space<vmem>>, vector<1x8x512xf32>
    %287 = vector.shape_cast %286 : vector<1x8x512xf32> to vector<8x512xf32>
    %288 = arith.truncf %283 : vector<8x128xf32> to vector<8x128xbf16>
    %c0_132 = arith.constant 0 : index
    %c0_133 = arith.constant 0 : index
    %289 = vector.load %arg2[%c0_132, %c0_133] : memref<128x512xbf16, #tpu.memory_space<vmem>>, vector<128x512xbf16>
    %cst_134 = arith.constant dense<0.000000e+00> : vector<8x512xf32>
    %290 = tpu.matmul %288, %289, %cst_134 {dimension_numbers = #tpu.dot_dimension_numbers<[1], [0], [0], [1], [0, 0, 1, 1], [], []>} : vector<8x128xbf16>, vector<128x512xbf16>, vector<8x512xf32> -> vector<8x512xf32>
    %291 = arith.addf %287, %290 : vector<8x512xf32>
    %292 = vector.extract_strided_slice %291 {offsets = [0, 0], sizes = [8, 128], strides = [1, 1]} : vector<8x512xf32> to vector<8x128xf32>
    %293 = arith.negf %292 : vector<8x128xf32>
    %294 = math.exp %293 : vector<8x128xf32>
    %cst_135 = arith.constant 1.000000e+00 : f32
    %295 = vector.broadcast %cst_135 : f32 to vector<8x128xf32>
    %296 = arith.addf %295, %294 : vector<8x128xf32>
    %297 = arith.divf %295, %296 : vector<8x128xf32>
    %298 = vector.extract_strided_slice %291 {offsets = [0, 128], sizes = [8, 128], strides = [1, 1]} : vector<8x512xf32> to vector<8x128xf32>
    %299 = arith.negf %298 : vector<8x128xf32>
    %300 = math.exp %299 : vector<8x128xf32>
    %cst_136 = arith.constant 1.000000e+00 : f32
    %301 = vector.broadcast %cst_136 : f32 to vector<8x128xf32>
    %302 = arith.addf %301, %300 : vector<8x128xf32>
    %303 = arith.divf %301, %302 : vector<8x128xf32>
    %304 = vector.extract_strided_slice %291 {offsets = [0, 256], sizes = [8, 128], strides = [1, 1]} : vector<8x512xf32> to vector<8x128xf32>
    %305 = math.tanh %304 : vector<8x128xf32>
    %306 = vector.extract_strided_slice %291 {offsets = [0, 384], sizes = [8, 128], strides = [1, 1]} : vector<8x512xf32> to vector<8x128xf32>
    %307 = arith.negf %306 : vector<8x128xf32>
    %308 = math.exp %307 : vector<8x128xf32>
    %cst_137 = arith.constant 1.000000e+00 : f32
    %309 = vector.broadcast %cst_137 : f32 to vector<8x128xf32>
    %310 = arith.addf %309, %308 : vector<8x128xf32>
    %311 = arith.divf %309, %310 : vector<8x128xf32>
    %312 = arith.mulf %303, %284 : vector<8x128xf32>
    %313 = arith.mulf %297, %305 : vector<8x128xf32>
    %314 = arith.addf %312, %313 : vector<8x128xf32>
    %315 = math.tanh %314 : vector<8x128xf32>
    %316 = arith.mulf %311, %315 : vector<8x128xf32>
    %c0_138 = arith.constant 0 : index
    %c0_139 = arith.constant 0 : index
    %317 = vector.load %arg5[%c0_138, %c0_139] : memref<8x128xf32, #tpu.memory_space<vmem>>, vector<8x128xf32>
    tpu.vector_store %arg5[%c0_138, %c0_139], %314 {strides = array<i32>} : memref<8x128xf32, #tpu.memory_space<vmem>>, vector<8x128xf32>,
    %c0_140 = arith.constant 0 : index
    %c0_141 = arith.constant 0 : index
    %318 = vector.load %arg4[%c0_140, %c0_141] : memref<8x128xf32, #tpu.memory_space<vmem>>, vector<8x128xf32>
    tpu.vector_store %arg4[%c0_140, %c0_141], %316 {strides = array<i32>} : memref<8x128xf32, #tpu.memory_space<vmem>>, vector<8x128xf32>,
    %319 = arith.index_cast %c7_i32 : i32 to index
    %c0_142 = arith.constant 0 : index
    %c0_143 = arith.constant 0 : index
    %320 = vector.load %arg3[%319, %c0_142, %c0_143] : memref<8x8x128xf32, #tpu.memory_space<vmem>>, vector<1x8x128xf32>
    %321 = vector.shape_cast %320 : vector<1x8x128xf32> to vector<8x128xf32>
    %322 = vector.shape_cast %316 : vector<8x128xf32> to vector<1x8x128xf32>
    tpu.vector_store %arg3[%319, %c0_142, %c0_143], %322 {strides = array<i32>} : memref<8x8x128xf32, #tpu.memory_space<vmem>>, vector<1x8x128xf32>,
    %c8_i32 = arith.constant 8 : i32
    return
  }
  func.func @transform_0(%arg0: i32) -> (i32, i32, i32) {
    %c0_i32 = arith.constant 0 : i32
    %c0_i32_0 = arith.constant 0 : i32
    %c0_i32_1 = arith.constant 0 : i32
    return %arg0, %c0_i32, %c0_i32_0 : i32, i32, i32
  }
  func.func @transform_1(%arg0: i32) -> (i32, i32) {
    %c0_i32 = arith.constant 0 : i32
    %c0_i32_0 = arith.constant 0 : i32
    %c0_i32_1 = arith.constant 0 : i32
    return %c0_i32, %c0_i32_0 : i32, i32
  }
  func.func @transform_2(%arg0: i32) -> (i32, i32, i32) {
    %c0_i32 = arith.constant 0 : i32
    %c0_i32_0 = arith.constant 0 : i32
    %c0_i32_1 = arith.constant 0 : i32
    return %arg0, %c0_i32, %c0_i32_0 : i32, i32, i32
  }
}

module attributes {stable_mosaic.version = 11 : i64} {
  func.func @_matmul_bias_kernel(%arg0: i32, %arg1: memref<64x128xbf16, #tpu.memory_space<vmem>>, %arg2: memref<128x128xbf16, #tpu.memory_space<vmem>>, %arg3: memref<1x128xf32, #tpu.memory_space<vmem>>, %arg4: memref<64x128xf32, #tpu.memory_space<vmem>>) attributes {dimension_semantics = [#tpu.dimension_semantics<parallel>], iteration_bounds = array<i64: 1>, scalar_prefetch = 0 : i64, scratch_operands = 0 : i64, tpu.core_type = #tpu.core_type<tc>, window_params = [{transform_indices = @transform_0, window_bounds = array<i64: 64, 128>}, {pipeline_mode = #tpu.pipeline_mode<synchronous>, transform_indices = @transform_1, window_bounds = array<i64: 128, 128>}, {pipeline_mode = #tpu.pipeline_mode<synchronous>, transform_indices = @transform_2, window_bounds = array<i64: 1, 128>}, {transform_indices = @transform_3, window_bounds = array<i64: 64, 128>}]} {
    %c0 = arith.constant 0 : index
    %c0_0 = arith.constant 0 : index
    %0 = vector.load %arg1[%c0, %c0_0] : memref<64x128xbf16, #tpu.memory_space<vmem>>, vector<64x128xbf16>
    %c0_1 = arith.constant 0 : index
    %c0_2 = arith.constant 0 : index
    %1 = vector.load %arg2[%c0_1, %c0_2] : memref<128x128xbf16, #tpu.memory_space<vmem>>, vector<128x128xbf16>
    %cst = arith.constant dense<0.000000e+00> : vector<64x128xf32>
    %2 = tpu.matmul %0, %1, %cst {dimension_numbers = #tpu.dot_dimension_numbers<[1], [0], [0], [1], [0, 0, 1, 1], [], []>} : vector<64x128xbf16>, vector<128x128xbf16>, vector<64x128xf32> -> vector<64x128xf32>
    %c0_3 = arith.constant 0 : index
    %c0_4 = arith.constant 0 : index
    %3 = vector.load %arg3[%c0_3, %c0_4] : memref<1x128xf32, #tpu.memory_space<vmem>>, vector<1x128xf32>
    %4 = vector.broadcast %3 : vector<1x128xf32> to vector<64x128xf32>
    %5 = arith.addf %2, %4 : vector<64x128xf32>
    %c0_5 = arith.constant 0 : index
    %c0_6 = arith.constant 0 : index
    %6 = vector.load %arg4[%c0_5, %c0_6] : memref<64x128xf32, #tpu.memory_space<vmem>>, vector<64x128xf32>
    tpu.vector_store %arg4[%c0_5, %c0_6], %5 {strides = array<i32>} : memref<64x128xf32, #tpu.memory_space<vmem>>, vector<64x128xf32>,
    return
  }
  func.func @transform_0(%arg0: i32) -> (i32, i32) {
    %c0_i32 = arith.constant 0 : i32
    %c0_i32_0 = arith.constant 0 : i32
    return %arg0, %c0_i32 : i32, i32
  }
  func.func @transform_1(%arg0: i32) -> (i32, i32) {
    %c0_i32 = arith.constant 0 : i32
    %c0_i32_0 = arith.constant 0 : i32
    %c0_i32_1 = arith.constant 0 : i32
    return %c0_i32, %c0_i32_0 : i32, i32
  }
  func.func @transform_2(%arg0: i32) -> (i32, i32) {
    %c0_i32 = arith.constant 0 : i32
    %c0_i32_0 = arith.constant 0 : i32
    %c0_i32_1 = arith.constant 0 : i32
    return %c0_i32, %c0_i32_0 : i32, i32
  }
  func.func @transform_3(%arg0: i32) -> (i32, i32) {
    %c0_i32 = arith.constant 0 : i32
    %c0_i32_0 = arith.constant 0 : i32
    return %arg0, %c0_i32 : i32, i32
  }
}

</mosaic_0001>

<llo_original>
// kernel: lstm_model_forward.5
$region0: #{lstm_model_forward.5}
  #allocation0 [shape = 'u32[]', space=smem, size = 0x4, offset = 0x4, fixed_abs, tag = 'smem constant byte address 0x4 - core index']
  #allocation1 [shape = 'u32[144,128]{1,0:T(1,128)}', space=vmem, size = 0x12000, scoped, tag = 'internal scratch']
  %s0 = inlined_call_operand.vmem [shape: bf16[64,128], index: 0, kind: input, shape index: {}]
  %s1 = inlined_call_operand.vmem [shape: bf16[128,512], index: 1, kind: input, shape index: {}]
  %s2 = inlined_call_operand.vmem [shape: f32[1,512], index: 2, kind: input, shape index: {}]
  %s3 = inlined_call_operand.vmem [shape: f32[64,512], index: 3, kind: output, shape index: {}]
  %s4 = sld [smem:[#allocation0]]
  $region22: #{lstm_model_forward.5} parent=0
    _
  %s6 = ssub.s32 1, %s4
  %s7 = scalar_select 0, %s6, %s4
  // Predicated region
  $region2: #{lstm_model_forward.5} parent=0 // pred_check
    _
  $region3: #{lstm_model_forward.5} parent=0 // pred_check_branch
    %9 = sbr.rel (0) target = $region5
  $region4: #{lstm_model_forward.5} parent=0 // pred_region
    _
  $region5: #{lstm_model_forward.5} parent=0 // pred_fallthru
    _
  // Predicated region
  $region6: #{lstm_model_forward.5} parent=0 // pred_check
    _
  $region7: #{lstm_model_forward.5} parent=0 // pred_check_branch
    %11 = sbr.rel (0) target = $region9
  $region8: #{lstm_model_forward.5} parent=0 // pred_region
    _
  $region9: #{lstm_model_forward.5} parent=0 // pred_fallthru
    _
  // Predicated region
  $region10: #{lstm_model_forward.5} parent=0 // pred_check
    _
  $region11: #{lstm_model_forward.5} parent=0 // pred_check_branch
    %13 = sbr.rel (0) target = $region13
  $region12: #{lstm_model_forward.5} parent=0 // pred_region
    _
  $region13: #{lstm_model_forward.5} parent=0 // pred_fallthru
    _
  %v15 = vld [vmem:[%s0] sm:$0xf]
  %v16 = vld [vmem:[%s0 + $0x4] sm:$0xf]
  %v17 = vld [vmem:[%s0 + $0x8] sm:$0xf]
  %v18 = vld [vmem:[%s0 + $0xc] sm:$0xf]
  %v19 = vld [vmem:[%s0 + $0x10] sm:$0xf]
  %v20 = vld [vmem:[%s0 + $0x14] sm:$0xf]
  %v21 = vld [vmem:[%s0 + $0x18] sm:$0xf]
  %v22 = vld [vmem:[%s0 + $0x1c] sm:$0xf]
  %v23 = vld [vmem:[%s1] sm:$0xff]
  %v24 = vld [vmem:[%s1 + $0x8] sm:$0xff]
  %v25 = vld [vmem:[%s1 + $0x10] sm:$0xff]
  %v26 = vld [vmem:[%s1 + $0x18] sm:$0xff]
  %v27 = vld [vmem:[%s1 + $0x20] sm:$0xff]
  %v28 = vld [vmem:[%s1 + $0x28] sm:$0xff]
  %v29 = vld [vmem:[%s1 + $0x30] sm:$0xff]
  %v30 = vld [vmem:[%s1 + $0x38] sm:$0xff]
  %v31 = vld [vmem:[%s1 + $0x40] sm:$0xff]
  %v32 = vld [vmem:[%s1 + $0x48] sm:$0xff]
  %v33 = vld [vmem:[%s1 + $0x50] sm:$0xff]
  %v34 = vld [vmem:[%s1 + $0x58] sm:$0xff]
  %v35 = vld [vmem:[%s1 + $0x60] sm:$0xff]
  %v36 = vld [vmem:[%s1 + $0x68] sm:$0xff]
  %v37 = vld [vmem:[%s1 + $0x70] sm:$0xff]
  %v38 = vld [vmem:[%s1 + $0x78] sm:$0xff]
  %v39 = vld [vmem:[%s1 + $0x80] sm:$0xff]
  %v40 = vld [vmem:[%s1 + $0x88] sm:$0xff]
  %v41 = vld [vmem:[%s1 + $0x90] sm:$0xff]
  %v42 = vld [vmem:[%s1 + $0x98] sm:$0xff]
  %v43 = vld [vmem:[%s1 + $0xa0] sm:$0xff]
  %v44 = vld [vmem:[%s1 + $0xa8] sm:$0xff]
  %v45 = vld [vmem:[%s1 + $0xb0] sm:$0xff]
  %v46 = vld [vmem:[%s1 + $0xb8] sm:$0xff]
  %v47 = vld [vmem:[%s1 + $0xc0] sm:$0xff]
  %v48 = vld [vmem:[%s1 + $0xc8] sm:$0xff]
  %v49 = vld [vmem:[%s1 + $0xd0] sm:$0xff]
  %v50 = vld [vmem:[%s1 + $0xd8] sm:$0xff]
  %v51 = vld [vmem:[%s1 + $0xe0] sm:$0xff]
  %v52 = vld [vmem:[%s1 + $0xe8] sm:$0xff]
  %v53 = vld [vmem:[%s1 + $0xf0] sm:$0xff]
  %v54 = vld [vmem:[%s1 + $0xf8] sm:$0xff]
  %v55 = vld [vmem:[%s2] sm:$0xf]
  %v57 = vlaneseq
  %v58 = vshrl.u32 %v57, 7
  %v59 = vsub.s32 0, %v58
  %v60 = vrot.slane %v55, %v59
  %v61 = vlaneseq
  %v62 = vshrl.u32 %v61, 7
  %v63 = vsub.s32 1, %v62
  %v64 = vrot.slane %v55, %v63
  %v65 = vlaneseq
  %v66 = vshrl.u32 %v65, 7
  %v67 = vsub.s32 2, %v66
  %v68 = vrot.slane %v55, %v67
  %v69 = vlaneseq
  %v70 = vshrl.u32 %v69, 7
  %v71 = vsub.s32 3, %v70
  %v72 = vrot.slane %v55, %v71
  %v85 = vunpack.c.l.b16 %v15
  %v86 = vunpack.c.l.b16 %v16
  %v87 = vunpack.c.l.b16 %v17
  %v88 = vunpack.c.l.b16 %v18
  %v89 = vunpack.c.l.b16 %v19
  %v90 = vunpack.c.l.b16 %v20
  %v91 = vunpack.c.l.b16 %v21
  %v92 = vunpack.c.l.b16 %v22
  %v93 = vpack.c.b16 %v86, %v85
  %v94 = vpack.c.b16 %v88, %v87
  %v95 = vpack.c.b16 %v90, %v89
  %v96 = vpack.c.b16 %v92, %v91
  %v133 = vunpack.c.l.b16 %v23
  %v134 = vunpack.c.h.b16 %v23
  %v135 = vunpack.c.l.b16 %v24
  %v136 = vunpack.c.h.b16 %v24
  %v137 = vunpack.c.l.b16 %v25
  %v138 = vunpack.c.h.b16 %v25
  %v139 = vunpack.c.l.b16 %v26
  %v140 = vunpack.c.h.b16 %v26
  %v141 = vunpack.c.l.b16 %v27
  %v142 = vunpack.c.h.b16 %v27
  %v143 = vunpack.c.l.b16 %v28
  %v144 = vunpack.c.h.b16 %v28
  %v145 = vunpack.c.l.b16 %v29
  %v146 = vunpack.c.h.b16 %v29
  %v147 = vunpack.c.l.b16 %v30
  %v148 = vunpack.c.h.b16 %v30
  %v149 = vunpack.c.l.b16 %v31
  %v150 = vunpack.c.h.b16 %v31
  %v151 = vunpack.c.l.b16 %v32
  %v152 = vunpack.c.h.b16 %v32
  %v153 = vunpack.c.l.b16 %v33
  %v154 = vunpack.c.h.b16 %v33
  %v155 = vunpack.c.l.b16 %v34
  %v156 = vunpack.c.h.b16 %v34
  %v157 = vunpack.c.l.b16 %v35
  %v158 = vunpack.c.h.b16 %v35
  %v159 = vunpack.c.l.b16 %v36
  %v160 = vunpack.c.h.b16 %v36
  %v161 = vunpack.c.l.b16 %v37
  %v162 = vunpack.c.h.b16 %v37
  %v163 = vunpack.c.l.b16 %v38
  %v164 = vunpack.c.h.b16 %v38
  %v165 = vunpack.c.l.b16 %v39
  %v166 = vunpack.c.h.b16 %v39
  %v167 = vunpack.c.l.b16 %v40
  %v168 = vunpack.c.h.b16 %v40
  %v169 = vunpack.c.l.b16 %v41
  %v170 = vunpack.c.h.b16 %v41
  %v171 = vunpack.c.l.b16 %v42
  %v172 = vunpack.c.h.b16 %v42
  %v173 = vunpack.c.l.b16 %v43
  %v174 = vunpack.c.h.b16 %v43
  %v175 = vunpack.c.l.b16 %v44
  %v176 = vunpack.c.h.b16 %v44
  %v177 = vunpack.c.l.b16 %v45
  %v178 = vunpack.c.h.b16 %v45
  %v179 = vunpack.c.l.b16 %v46
  %v180 = vunpack.c.h.b16 %v46
  %v181 = vunpack.c.l.b16 %v47
  %v182 = vunpack.c.h.b16 %v47
  %v183 = vunpack.c.l.b16 %v48
  %v184 = vunpack.c.h.b16 %v48
  %v185 = vunpack.c.l.b16 %v49
  %v186 = vunpack.c.h.b16 %v49
  %v187 = vunpack.c.l.b16 %v50
  %v188 = vunpack.c.h.b16 %v50
  %v189 = vunpack.c.l.b16 %v51
  %v190 = vunpack.c.h.b16 %v51
  %v191 = vunpack.c.l.b16 %v52
  %v192 = vunpack.c.h.b16 %v52
  %v193 = vunpack.c.l.b16 %v53
  %v194 = vunpack.c.h.b16 %v53
  %v195 = vunpack.c.l.b16 %v54
  %v196 = vunpack.c.h.b16 %v54
  %v197 = vpack.c.b16 %v137, %v133
  %v198 = vpack.c.b16 %v138, %v134
  %v199 = vpack.c.b16 %v139, %v135
  %v200 = vpack.c.b16 %v140, %v136
  %v201 = vpack.c.b16 %v145, %v141
  %v202 = vpack.c.b16 %v146, %v142
  %v203 = vpack.c.b16 %v147, %v143
  %v204 = vpack.c.b16 %v148, %v144
  %v205 = vpack.c.b16 %v153, %v149
  %v206 = vpack.c.b16 %v154, %v150
  %v207 = vpack.c.b16 %v155, %v151
  %v208 = vpack.c.b16 %v156, %v152
  %v209 = vpack.c.b16 %v161, %v157
  %v210 = vpack.c.b16 %v162, %v158
  %v211 = vpack.c.b16 %v163, %v159
  %v212 = vpack.c.b16 %v164, %v160
  %v213 = vpack.c.b16 %v169, %v165
  %v214 = vpack.c.b16 %v170, %v166
  %v215 = vpack.c.b16 %v171, %v167
  %v216 = vpack.c.b16 %v172, %v168
  %v217 = vpack.c.b16 %v177, %v173
  %v218 = vpack.c.b16 %v178, %v174
  %v219 = vpack.c.b16 %v179, %v175
  %v220 = vpack.c.b16 %v180, %v176
  %v221 = vpack.c.b16 %v185, %v181
  %v222 = vpack.c.b16 %v186, %v182
  %v223 = vpack.c.b16 %v187, %v183
  %v224 = vpack.c.b16 %v188, %v184
  %v225 = vpack.c.b16 %v193, %v189
  %v226 = vpack.c.b16 %v194, %v190
  %v227 = vpack.c.b16 %v195, %v191
  %v228 = vpack.c.b16 %v196, %v192
  %261 = vmatprep.subr.bf16.mxu0 %v226
  %262 = vmatpush1.bf16.msra.mxu0 %v225
  %263 = vmatprep.subr.bf16.mxu0 %v222
  %264 = vmatpush1.bf16.msra.mxu0 %v221
  %265 = vmatprep.subr.bf16.mxu0 %v218
  %266 = vmatpush1.bf16.msra.mxu0 %v217
  %267 = vmatprep.subr.bf16.mxu0 %v214
  %268 = vmatpush1.bf16.msra.mxu0 %v213
  %269 = vmatprep.subr.bf16.mxu0 %v210
  %270 = vmatpush1.bf16.msra.mxu0 %v209
  %271 = vmatprep.subr.bf16.mxu0 %v206
  %272 = vmatpush1.bf16.msra.mxu0 %v205
  %273 = vmatprep.subr.bf16.mxu0 %v202
  %274 = vmatpush1.bf16.msra.mxu0 %v201
  %275 = vmatprep.subr.bf16.mxu0 %v198
  %276 = vmatpush1.bf16.msra.mxu0 %v197
  %277 = vmatprep.subr.bf16.mxu0 0
  %278 = vmatpush2.bf16.msra.mxu0 0
  %279 = vmatprep.subr.bf16.mxu0 0
  %280 = vmatpush2.bf16.msra.mxu0 0
  %281 = vmatprep.subr.bf16.mxu0 0
  %282 = vmatpush2.bf16.msra.mxu0 0
  %283 = vmatprep.subr.bf16.mxu0 0
  %284 = vmatpush2.bf16.msra.mxu0 0
  %285 = vmatprep.subr.bf16.mxu0 0
  %286 = vmatpush2.bf16.msra.mxu0 0
  %287 = vmatprep.subr.bf16.mxu0 0
  %288 = vmatpush2.bf16.msra.mxu0 0
  %289 = vmatprep.subr.bf16.mxu0 0
  %290 = vmatpush2.bf16.msra.mxu0 0
  %291 = vmatprep.subr.bf16.mxu0 0
  %292 = vmatpush2.bf16.msra.mxu0 0
  %293 = vmatprep.mubr.bf16.mxu0 0
  %294 = vmatmul.mubr.bf16.gmra.mxu0 %v93
  %v295 = vpop.f32.mrf.mxu0
  %v296 = vadd.f32 %v60, %v295
  %v297 = vpop.f32.mrf.mxu0
  %v298 = vadd.f32 %v64, %v297
  %v299 = vpop.f32.mrf.mxu0
  %v300 = vadd.f32 %v60, %v299
  %v301 = vpop.f32.mrf.mxu0
  %v302 = vadd.f32 %v64, %v301
  %303 = vmatprep.mubr.bf16.mxu0 0
  %304 = vmatmul.mubr.bf16.gmra.mxu0 %v94
  %v305 = vpop.f32.mrf.mxu0
  %v306 = vadd.f32 %v60, %v305
  %v307 = vpop.f32.mrf.mxu0
  %v308 = vadd.f32 %v64, %v307
  %v309 = vpop.f32.mrf.mxu0
  %v310 = vadd.f32 %v60, %v309
  %v311 = vpop.f32.mrf.mxu0
  %v312 = vadd.f32 %v64, %v311
  %313 = vmatprep.mubr.bf16.mxu0 0
  %314 = vmatmul.mubr.bf16.gmra.mxu0 %v95
  %v315 = vpop.f32.mrf.mxu0
  %v316 = vadd.f32 %v60, %v315
  %v317 = vpop.f32.mrf.mxu0
  %v318 = vadd.f32 %v64, %v317
  %v319 = vpop.f32.mrf.mxu0
  %v320 = vadd.f32 %v60, %v319
  %v321 = vpop.f32.mrf.mxu0
  %v322 = vadd.f32 %v64, %v321
  %323 = vmatprep.mubr.bf16.mxu0 0
  %324 = vmatmul.mubr.bf16.gmra.mxu0 %v96
  %v325 = vpop.f32.mrf.mxu0
  %v326 = vadd.f32 %v60, %v325
  %v327 = vpop.f32.mrf.mxu0
  %v328 = vadd.f32 %v64, %v327
  %v329 = vpop.f32.mrf.mxu0
  %v330 = vadd.f32 %v60, %v329
  %v331 = vpop.f32.mrf.mxu0
  %v332 = vadd.f32 %v64, %v331
  %333 = vdwg.mxu0
  %334 = vmatprep.subr.bf16.mxu0 %v228
  %335 = vmatpush1.bf16.msra.mxu0 %v227
  %336 = vmatprep.subr.bf16.mxu0 %v224
  %337 = vmatpush1.bf16.msra.mxu0 %v223
  %338 = vmatprep.subr.bf16.mxu0 %v220
  %339 = vmatpush1.bf16.msra.mxu0 %v219
  %340 = vmatprep.subr.bf16.mxu0 %v216
  %341 = vmatpush1.bf16.msra.mxu0 %v215
  %342 = vmatprep.subr.bf16.mxu0 %v212
  %343 = vmatpush1.bf16.msra.mxu0 %v211
  %344 = vmatprep.subr.bf16.mxu0 %v208
  %345 = vmatpush1.bf16.msra.mxu0 %v207
  %346 = vmatprep.subr.bf16.mxu0 %v204
  %347 = vmatpush1.bf16.msra.mxu0 %v203
  %348 = vmatprep.subr.bf16.mxu0 %v200
  %349 = vmatpush1.bf16.msra.mxu0 %v199
  %350 = vmatprep.subr.bf16.mxu0 0
  %351 = vmatpush2.bf16.msra.mxu0 0
  %352 = vmatprep.subr.bf16.mxu0 0
  %353 = vmatpush2.bf16.msra.mxu0 0
  %354 = vmatprep.subr.bf16.mxu0 0
  %355 = vmatpush2.bf16.msra.mxu0 0
  %356 = vmatprep.subr.bf16.mxu0 0
  %357 = vmatpush2.bf16.msra.mxu0 0
  %358 = vmatprep.subr.bf16.mxu0 0
  %359 = vmatpush2.bf16.msra.mxu0 0
  %360 = vmatprep.subr.bf16.mxu0 0
  %361 = vmatpush2.bf16.msra.mxu0 0
  %362 = vmatprep.subr.bf16.mxu0 0
  %363 = vmatpush2.bf16.msra.mxu0 0
  %364 = vmatprep.subr.bf16.mxu0 0
  %365 = vmatpush2.bf16.msra.mxu0 0
  %366 = vmatprep.mubr.bf16.mxu0 0
  %367 = vmatmul.mubr.bf16.gmra.mxu0 %v93
  %v368 = vpop.f32.mrf.mxu0
  %v369 = vadd.f32 %v68, %v368
  %v370 = vpop.f32.mrf.mxu0
  %v371 = vadd.f32 %v72, %v370
  %v372 = vpop.f32.mrf.mxu0
  %v373 = vadd.f32 %v68, %v372
  %v374 = vpop.f32.mrf.mxu0
  %v375 = vadd.f32 %v72, %v374
  %376 = vmatprep.mubr.bf16.mxu0 0
  %377 = vmatmul.mubr.bf16.gmra.mxu0 %v94
  %v378 = vpop.f32.mrf.mxu0
  %v379 = vadd.f32 %v68, %v378
  %v380 = vpop.f32.mrf.mxu0
  %v381 = vadd.f32 %v72, %v380
  %v382 = vpop.f32.mrf.mxu0
  %v383 = vadd.f32 %v68, %v382
  %v384 = vpop.f32.mrf.mxu0
  %v385 = vadd.f32 %v72, %v384
  %386 = vmatprep.mubr.bf16.mxu0 0
  %387 = vmatmul.mubr.bf16.gmra.mxu0 %v95
  %v388 = vpop.f32.mrf.mxu0
  %v389 = vadd.f32 %v68, %v388
  %v390 = vpop.f32.mrf.mxu0
  %v391 = vadd.f32 %v72, %v390
  %v392 = vpop.f32.mrf.mxu0
  %v393 = vadd.f32 %v68, %v392
  %v394 = vpop.f32.mrf.mxu0
  %v395 = vadd.f32 %v72, %v394
  %396 = vmatprep.mubr.bf16.mxu0 0
  %397 = vmatmul.mubr.bf16.gmra.mxu0 %v96
  %v398 = vpop.f32.mrf.mxu0
  %v399 = vadd.f32 %v68, %v398
  %v400 = vpop.f32.mrf.mxu0
  %v401 = vadd.f32 %v72, %v400
  %v402 = vpop.f32.mrf.mxu0
  %v403 = vadd.f32 %v68, %v402
  %v404 = vpop.f32.mrf.mxu0
  %v405 = vadd.f32 %v72, %v404
  %406 = vdwg.mxu0
  %407 = vst [vmem:[%s3] sm:$0xff] %v296
  %408 = vst [vmem:[%s3 + $0x8] sm:$0xff] %v298
  %409 = vst [vmem:[%s3 + $0x10] sm:$0xff] %v369
  %410 = vst [vmem:[%s3 + $0x18] sm:$0xff] %v371
  %411 = vst [vmem:[%s3 + $0x20] sm:$0xff] %v300
  %412 = vst [vmem:[%s3 + $0x28] sm:$0xff] %v302
  %413 = vst [vmem:[%s3 + $0x30] sm:$0xff] %v373
  %414 = vst [vmem:[%s3 + $0x38] sm:$0xff] %v375
  %415 = vst [vmem:[%s3 + $0x40] sm:$0xff] %v306
  %416 = vst [vmem:[%s3 + $0x48] sm:$0xff] %v308
  %417 = vst [vmem:[%s3 + $0x50] sm:$0xff] %v379
  %418 = vst [vmem:[%s3 + $0x58] sm:$0xff] %v381
  %419 = vst [vmem:[%s3 + $0x60] sm:$0xff] %v310
  %420 = vst [vmem:[%s3 + $0x68] sm:$0xff] %v312
  %421 = vst [vmem:[%s3 + $0x70] sm:$0xff] %v383
  %422 = vst [vmem:[%s3 + $0x78] sm:$0xff] %v385
  %423 = vst [vmem:[%s3 + $0x80] sm:$0xff] %v316
  %424 = vst [vmem:[%s3 + $0x88] sm:$0xff] %v318
  %425 = vst [vmem:[%s3 + $0x90] sm:$0xff] %v389
  %426 = vst [vmem:[%s3 + $0x98] sm:$0xff] %v391
  %427 = vst [vmem:[%s3 + $0xa0] sm:$0xff] %v320
  %428 = vst [vmem:[%s3 + $0xa8] sm:$0xff] %v322
  %429 = vst [vmem:[%s3 + $0xb0] sm:$0xff] %v393
  %430 = vst [vmem:[%s3 + $0xb8] sm:$0xff] %v395
  %431 = vst [vmem:[%s3 + $0xc0] sm:$0xff] %v326
  %432 = vst [vmem:[%s3 + $0xc8] sm:$0xff] %v328
  %433 = vst [vmem:[%s3 + $0xd0] sm:$0xff] %v399
  %434 = vst [vmem:[%s3 + $0xd8] sm:$0xff] %v401
  %435 = vst [vmem:[%s3 + $0xe0] sm:$0xff] %v330
  %436 = vst [vmem:[%s3 + $0xe8] sm:$0xff] %v332
  %437 = vst [vmem:[%s3 + $0xf0] sm:$0xff] %v403
  %438 = vst [vmem:[%s3 + $0xf8] sm:$0xff] %v405
  // Predicated region
  $region14: #{lstm_model_forward.5} parent=0 // pred_check
    _
  $region15: #{lstm_model_forward.5} parent=0 // pred_check_branch
    %440 = sbr.rel (0) target = $region17
  $region16: #{lstm_model_forward.5} parent=0 // pred_region
    _
  $region17: #{lstm_model_forward.5} parent=0 // pred_fallthru
    _
  // Predicated region
  $region18: #{lstm_model_forward.5} parent=0 // pred_check
    _
  $region19: #{lstm_model_forward.5} parent=0 // pred_check_branch
    %442 = sbr.rel (0) target = $region21
  $region20: #{lstm_model_forward.5} parent=0 // pred_region
    _
  $region21: #{lstm_model_forward.5} parent=0 // pred_fallthru
    _

// kernel: lstm_model_forward.9
$region0: #{lstm_model_forward.9}
  #allocation0 [shape = 'u32[]', space=smem, size = 0x4, offset = 0x4, fixed_abs, tag = 'smem constant byte address 0x4 - core index']
  #allocation1 [shape = 'u32[144,128]{1,0:T(1,128)}', space=vmem, size = 0x12000, scoped, tag = 'internal scratch']
  %s0 = inlined_call_operand.vmem [shape: bf16[64,128], index: 0, kind: input, shape index: {}]
  %s1 = inlined_call_operand.vmem [shape: bf16[128,128], index: 1, kind: input, shape index: {}]
  %s2 = inlined_call_operand.vmem [shape: f32[1,128], index: 2, kind: input, shape index: {}]
  %s3 = inlined_call_operand.vmem [shape: f32[64,128], index: 3, kind: output, shape index: {}]
  %s4 = sld [smem:[#allocation0]]
  $region22: #{lstm_model_forward.9} parent=0
    _
  %s6 = ssub.s32 1, %s4
  %s7 = scalar_select 0, %s6, %s4
  // Predicated region
  $region2: #{lstm_model_forward.9} parent=0 // pred_check
    _
  $region3: #{lstm_model_forward.9} parent=0 // pred_check_branch
    %9 = sbr.rel (0) target = $region5
  $region4: #{lstm_model_forward.9} parent=0 // pred_region
    _
  $region5: #{lstm_model_forward.9} parent=0 // pred_fallthru
    _
  // Predicated region
  $region6: #{lstm_model_forward.9} parent=0 // pred_check
    _
  $region7: #{lstm_model_forward.9} parent=0 // pred_check_branch
    %11 = sbr.rel (0) target = $region9
  $region8: #{lstm_model_forward.9} parent=0 // pred_region
    _
  $region9: #{lstm_model_forward.9} parent=0 // pred_fallthru
    _
  // Predicated region
  $region10: #{lstm_model_forward.9} parent=0 // pred_check
    _
  $region11: #{lstm_model_forward.9} parent=0 // pred_check_branch
    %13 = sbr.rel (0) target = $region13
  $region12: #{lstm_model_forward.9} parent=0 // pred_region
    _
  $region13: #{lstm_model_forward.9} parent=0 // pred_fallthru
    _
  %v15 = vld [vmem:[%s0] sm:$0xf]
  %v16 = vld [vmem:[%s0 + $0x4] sm:$0xf]
  %v17 = vld [vmem:[%s0 + $0x8] sm:$0xf]
  %v18 = vld [vmem:[%s0 + $0xc] sm:$0xf]
  %v19 = vld [vmem:[%s0 + $0x10] sm:$0xf]
  %v20 = vld [vmem:[%s0 + $0x14] sm:$0xf]
  %v21 = vld [vmem:[%s0 + $0x18] sm:$0xf]
  %v22 = vld [vmem:[%s0 + $0x1c] sm:$0xf]
  %v23 = vld [vmem:[%s1] sm:$0xf]
  %v24 = vld [vmem:[%s1 + $0x4] sm:$0xf]
  %v25 = vld [vmem:[%s1 + $0x8] sm:$0xf]
  %v26 = vld [vmem:[%s1 + $0xc] sm:$0xf]
  %v27 = vld [vmem:[%s1 + $0x10] sm:$0xf]
  %v28 = vld [vmem:[%s1 + $0x14] sm:$0xf]
  %v29 = vld [vmem:[%s1 + $0x18] sm:$0xf]
  %v30 = vld [vmem:[%s1 + $0x1c] sm:$0xf]
  %v31 = vld [vmem:[%s1 + $0x20] sm:$0xf]
  %v32 = vld [vmem:[%s1 + $0x24] sm:$0xf]
  %v33 = vld [vmem:[%s1 + $0x28] sm:$0xf]
  %v34 = vld [vmem:[%s1 + $0x2c] sm:$0xf]
  %v35 = vld [vmem:[%s1 + $0x30] sm:$0xf]
  %v36 = vld [vmem:[%s1 + $0x34] sm:$0xf]
  %v37 = vld [vmem:[%s1 + $0x38] sm:$0xf]
  %v38 = vld [vmem:[%s1 + $0x3c] sm:$0xf]
  %v39 = vld [vmem:[%s2] sm:$0x1]
  %v41 = vlaneseq
  %v42 = vshrl.u32 %v41, 7
  %v43 = vsub.s32 0, %v42
  %v44 = vrot.slane %v39, %v43
  %v54 = vunpack.c.l.b16 %v15
  %v55 = vunpack.c.l.b16 %v16
  %v56 = vunpack.c.l.b16 %v17
  %v57 = vunpack.c.l.b16 %v18
  %v58 = vunpack.c.l.b16 %v19
  %v59 = vunpack.c.l.b16 %v20
  %v60 = vunpack.c.l.b16 %v21
  %v61 = vunpack.c.l.b16 %v22
  %v62 = vpack.c.b16 %v55, %v54
  %v63 = vpack.c.b16 %v57, %v56
  %v64 = vpack.c.b16 %v59, %v58
  %v65 = vpack.c.b16 %v61, %v60
  %v86 = vunpack.c.l.b16 %v23
  %v87 = vunpack.c.l.b16 %v24
  %v88 = vunpack.c.l.b16 %v25
  %v89 = vunpack.c.l.b16 %v26
  %v90 = vunpack.c.l.b16 %v27
  %v91 = vunpack.c.l.b16 %v28
  %v92 = vunpack.c.l.b16 %v29
  %v93 = vunpack.c.l.b16 %v30
  %v94 = vunpack.c.l.b16 %v31
  %v95 = vunpack.c.l.b16 %v32
  %v96 = vunpack.c.l.b16 %v33
  %v97 = vunpack.c.l.b16 %v34
  %v98 = vunpack.c.l.b16 %v35
  %v99 = vunpack.c.l.b16 %v36
  %v100 = vunpack.c.l.b16 %v37
  %v101 = vunpack.c.l.b16 %v38
  %v102 = vpack.c.b16 %v87, %v86
  %v103 = vpack.c.b16 %v89, %v88
  %v104 = vpack.c.b16 %v91, %v90
  %v105 = vpack.c.b16 %v93, %v92
  %v106 = vpack.c.b16 %v95, %v94
  %v107 = vpack.c.b16 %v97, %v96
  %v108 = vpack.c.b16 %v99, %v98
  %v109 = vpack.c.b16 %v101, %v100
  %118 = vmatprep.subr.bf16.mxu0 0
  %119 = vmatpush1.bf16.msra.mxu0 %v109
  %120 = vmatprep.subr.bf16.mxu0 0
  %121 = vmatpush1.bf16.msra.mxu0 %v108
  %122 = vmatprep.subr.bf16.mxu0 0
  %123 = vmatpush1.bf16.msra.mxu0 %v107
  %124 = vmatprep.subr.bf16.mxu0 0
  %125 = vmatpush1.bf16.msra.mxu0 %v106
  %126 = vmatprep.subr.bf16.mxu0 0
  %127 = vmatpush1.bf16.msra.mxu0 %v105
  %128 = vmatprep.subr.bf16.mxu0 0
  %129 = vmatpush1.bf16.msra.mxu0 %v104
  %130 = vmatprep.subr.bf16.mxu0 0
  %131 = vmatpush1.bf16.msra.mxu0 %v103
  %132 = vmatprep.subr.bf16.mxu0 0
  %133 = vmatpush1.bf16.msra.mxu0 %v102
  %134 = vmatprep.subr.bf16.mxu0 0
  %135 = vmatpush2.bf16.msra.mxu0 0
  %136 = vmatprep.subr.bf16.mxu0 0
  %137 = vmatpush2.bf16.msra.mxu0 0
  %138 = vmatprep.subr.bf16.mxu0 0
  %139 = vmatpush2.bf16.msra.mxu0 0
  %140 = vmatprep.subr.bf16.mxu0 0
  %141 = vmatpush2.bf16.msra.mxu0 0
  %142 = vmatprep.subr.bf16.mxu0 0
  %143 = vmatpush2.bf16.msra.mxu0 0
  %144 = vmatprep.subr.bf16.mxu0 0
  %145 = vmatpush2.bf16.msra.mxu0 0
  %146 = vmatprep.subr.bf16.mxu0 0
  %147 = vmatpush2.bf16.msra.mxu0 0
  %148 = vmatprep.subr.bf16.mxu0 0
  %149 = vmatpush2.bf16.msra.mxu0 0
  %150 = vmatprep.mubr.bf16.mxu0 0
  %151 = vmatmul.mubr.bf16.gmra.mxu0 %v62
  %v152 = vpop.f32.mrf.mxu0
  %v153 = vadd.f32 %v44, %v152
  %v154 = vpop.f32.mrf.mxu0
  %v155 = vpop.f32.mrf.mxu0
  %v156 = vadd.f32 %v44, %v155
  %v157 = vpop.f32.mrf.mxu0
  %158 = vmatprep.mubr.bf16.mxu0 0
  %159 = vmatmul.mubr.bf16.gmra.mxu0 %v63
  %v160 = vpop.f32.mrf.mxu0
  %v161 = vadd.f32 %v44, %v160
  %v162 = vpop.f32.mrf.mxu0
  %v163 = vpop.f32.mrf.mxu0
  %v164 = vadd.f32 %v44, %v163
  %v165 = vpop.f32.mrf.mxu0
  %166 = vmatprep.mubr.bf16.mxu0 0
  %167 = vmatmul.mubr.bf16.gmra.mxu0 %v64
  %v168 = vpop.f32.mrf.mxu0
  %v169 = vadd.f32 %v44, %v168
  %v170 = vpop.f32.mrf.mxu0
  %v171 = vpop.f32.mrf.mxu0
  %v172 = vadd.f32 %v44, %v171
  %v173 = vpop.f32.mrf.mxu0
  %174 = vmatprep.mubr.bf16.mxu0 0
  %175 = vmatmul.mubr.bf16.gmra.mxu0 %v65
  %v176 = vpop.f32.mrf.mxu0
  %v177 = vadd.f32 %v44, %v176
  %v178 = vpop.f32.mrf.mxu0
  %v179 = vpop.f32.mrf.mxu0
  %v180 = vadd.f32 %v44, %v179
  %v181 = vpop.f32.mrf.mxu0
  %182 = vdwg.mxu0
  %183 = vst [vmem:[%s3] sm:$0xff] %v153
  %184 = vst [vmem:[%s3 + $0x8] sm:$0xff] %v156
  %185 = vst [vmem:[%s3 + $0x10] sm:$0xff] %v161
  %186 = vst [vmem:[%s3 + $0x18] sm:$0xff] %v164
  %187 = vst [vmem:[%s3 + $0x20] sm:$0xff] %v169
  %188 = vst [vmem:[%s3 + $0x28] sm:$0xff] %v172
  %189 = vst [vmem:[%s3 + $0x30] sm:$0xff] %v177
  %190 = vst [vmem:[%s3 + $0x38] sm:$0xff] %v180
  // Predicated region
  $region14: #{lstm_model_forward.9} parent=0 // pred_check
    _
  $region15: #{lstm_model_forward.9} parent=0 // pred_check_branch
    %192 = sbr.rel (0) target = $region17
  $region16: #{lstm_model_forward.9} parent=0 // pred_region
    _
  $region17: #{lstm_model_forward.9} parent=0 // pred_fallthru
    _
  // Predicated region
  $region18: #{lstm_model_forward.9} parent=0 // pred_check
    _
  $region19: #{lstm_model_forward.9} parent=0 // pred_check_branch
    %194 = sbr.rel (0) target = $region21
  $region20: #{lstm_model_forward.9} parent=0 // pred_region
    _
  $region21: #{lstm_model_forward.9} parent=0 // pred_fallthru
    _

// kernel: lstm_model_forward.6
$region0: #{lstm_model_forward.6}
  #allocation0 [shape = 'u32[]', space=smem, size = 0x4, offset = 0x4, fixed_abs, tag = 'smem constant byte address 0x4 - core index']
  #allocation1 [shape = 'u32[144,128]{1,0:T(1,128)}', space=vmem, size = 0x12000, scoped, tag = 'internal scratch']
  #allocation2 [shape = 'f32[8,128]{1,0:T(8,128)}', space=vmem, size = 0x1000, scoped, tag = 'scratch operand']
  #allocation3 [shape = 'f32[8,128]{1,0:T(8,128)}', space=vmem, size = 0x1000, scoped, tag = 'scratch operand']
  %s0 = inlined_call_operand.vmem [shape: f32[8,8,512], index: 0, kind: input, shape index: {}]
  %s1 = inlined_call_operand.vmem [shape: bf16[128,512], index: 1, kind: input, shape index: {}]
  %s2 = inlined_call_operand.vmem [shape: f32[8,8,128], index: 2, kind: output, shape index: {}]
  %s3 = sld [smem:[#allocation0]]
  $region22: #{lstm_model_forward.6} parent=0
    _
  %s5 = ssub.s32 1, %s3
  %s6 = scalar_select 0, %s5, %s3
  // Predicated region
  $region2: #{lstm_model_forward.6} parent=0 // pred_check
    _
  $region3: #{lstm_model_forward.6} parent=0 // pred_check_branch
    %8 = sbr.rel (0) target = $region5
  $region4: #{lstm_model_forward.6} parent=0 // pred_region
    _
  $region5: #{lstm_model_forward.6} parent=0 // pred_fallthru
    _
  // Predicated region
  $region6: #{lstm_model_forward.6} parent=0 // pred_check
    _
  $region7: #{lstm_model_forward.6} parent=0 // pred_check_branch
    %10 = sbr.rel (0) target = $region9
  $region8: #{lstm_model_forward.6} parent=0 // pred_region
    _
  $region9: #{lstm_model_forward.6} parent=0 // pred_fallthru
    _
  %p12 = scmp.eq.s32.totalorder 0, 0
  // Predicated region
  $region10: #{lstm_model_forward.6} parent=0 // pred_check
    %p13 = pneg %p12
  $region11: #{lstm_model_forward.6} parent=0 // pred_check_branch
    %15 = sbr.rel (%p13) target = $region13
  $region12: #{lstm_model_forward.6} parent=0 // pred_region
    %16 = vst [vmem:[#allocation2] sm:$0xff] 0.0
    %17 = vst [vmem:[#allocation3] sm:$0xff] 0.0
  $region13: #{lstm_model_forward.6} parent=0 // pred_fallthru
    _
  %v18 = vld [vmem:[#allocation2] sm:$0xff]
  %v19 = vld [vmem:[#allocation3] sm:$0xff]
  %v20 = vld [vmem:[%s0] sm:$0xff]
  %v21 = vld [vmem:[%s0 + $0x8] sm:$0xff]
  %v22 = vld [vmem:[%s0 + $0x10] sm:$0xff]
  %v23 = vld [vmem:[%s0 + $0x18] sm:$0xff]
  %v24 = vpack.c.bf16 %v18, %v18
  %v25 = vld [vmem:[%s1] sm:$0xff]
  %v26 = vld [vmem:[%s1 + $0x8] sm:$0xff]
  %v27 = vld [vmem:[%s1 + $0x10] sm:$0xff]
  %v28 = vld [vmem:[%s1 + $0x18] sm:$0xff]
  %v29 = vld [vmem:[%s1 + $0x20] sm:$0xff]
  %v30 = vld [vmem:[%s1 + $0x28] sm:$0xff]
  %v31 = vld [vmem:[%s1 + $0x30] sm:$0xff]
  %v32 = vld [vmem:[%s1 + $0x38] sm:$0xff]
  %v33 = vld [vmem:[%s1 + $0x40] sm:$0xff]
  %v34 = vld [vmem:[%s1 + $0x48] sm:$0xff]
  %v35 = vld [vmem:[%s1 + $0x50] sm:$0xff]
  %v36 = vld [vmem:[%s1 + $0x58] sm:$0xff]
  %v37 = vld [vmem:[%s1 + $0x60] sm:$0xff]
  %v38 = vld [vmem:[%s1 + $0x68] sm:$0xff]
  %v39 = vld [vmem:[%s1 + $0x70] sm:$0xff]
  %v40 = vld [vmem:[%s1 + $0x78] sm:$0xff]
  %v41 = vld [vmem:[%s1 + $0x80] sm:$0xff]
  %v42 = vld [vmem:[%s1 + $0x88] sm:$0xff]
  %v43 = vld [vmem:[%s1 + $0x90] sm:$0xff]
  %v44 = vld [vmem:[%s1 + $0x98] sm:$0xff]
  %v45 = vld [vmem:[%s1 + $0xa0] sm:$0xff]
  %v46 = vld [vmem:[%s1 + $0xa8] sm:$0xff]
  %v47 = vld [vmem:[%s1 + $0xb0] sm:$0xff]
  %v48 = vld [vmem:[%s1 + $0xb8] sm:$0xff]
  %v49 = vld [vmem:[%s1 + $0xc0] sm:$0xff]
  %v50 = vld [vmem:[%s1 + $0xc8] sm:$0xff]
  %v51 = vld [vmem:[%s1 + $0xd0] sm:$0xff]
  %v52 = vld [vmem:[%s1 + $0xd8] sm:$0xff]
  %v53 = vld [vmem:[%s1 + $0xe0] sm:$0xff]
  %v54 = vld [vmem:[%s1 + $0xe8] sm:$0xff]
  %v55 = vld [vmem:[%s1 + $0xf0] sm:$0xff]
  %v56 = vld [vmem:[%s1 + $0xf8] sm:$0xff]
  %v89 = vunpack.c.l.b16 %v25
  %v90 = vunpack.c.h.b16 %v25
  %v91 = vunpack.c.l.b16 %v26
  %v92 = vunpack.c.h.b16 %v26
  %v93 = vunpack.c.l.b16 %v27
  %v94 = vunpack.c.h.b16 %v27
  %v95 = vunpack.c.l.b16 %v28
  %v96 = vunpack.c.h.b16 %v28
  %v97 = vunpack.c.l.b16 %v29
  %v98 = vunpack.c.h.b16 %v29
  %v99 = vunpack.c.l.b16 %v30
  %v100 = vunpack.c.h.b16 %v30
  %v101 = vunpack.c.l.b16 %v31
  %v102 = vunpack.c.h.b16 %v31
  %v103 = vunpack.c.l.b16 %v32
  %v104 = vunpack.c.h.b16 %v32
  %v105 = vunpack.c.l.b16 %v33
  %v106 = vunpack.c.h.b16 %v33
  %v107 = vunpack.c.l.b16 %v34
  %v108 = vunpack.c.h.b16 %v34
  %v109 = vunpack.c.l.b16 %v35
  %v110 = vunpack.c.h.b16 %v35
  %v111 = vunpack.c.l.b16 %v36
  %v112 = vunpack.c.h.b16 %v36
  %v113 = vunpack.c.l.b16 %v37
  %v114 = vunpack.c.h.b16 %v37
  %v115 = vunpack.c.l.b16 %v38
  %v116 = vunpack.c.h.b16 %v38
  %v117 = vunpack.c.l.b16 %v39
  %v118 = vunpack.c.h.b16 %v39
  %v119 = vunpack.c.l.b16 %v40
  %v120 = vunpack.c.h.b16 %v40
  %v121 = vunpack.c.l.b16 %v41
  %v122 = vunpack.c.h.b16 %v41
  %v123 = vunpack.c.l.b16 %v42
  %v124 = vunpack.c.h.b16 %v42
  %v125 = vunpack.c.l.b16 %v43
  %v126 = vunpack.c.h.b16 %v43
  %v127 = vunpack.c.l.b16 %v44
  %v128 = vunpack.c.h.b16 %v44
  %v129 = vunpack.c.l.b16 %v45
  %v130 = vunpack.c.h.b16 %v45
  %v131 = vunpack.c.l.b16 %v46
  %v132 = vunpack.c.h.b16 %v46
  %v133 = vunpack.c.l.b16 %v47
  %v134 = vunpack.c.h.b16 %v47
  %v135 = vunpack.c.l.b16 %v48
  %v136 = vunpack.c.h.b16 %v48
  %v137 = vunpack.c.l.b16 %v49
  %v138 = vunpack.c.h.b16 %v49
  %v139 = vunpack.c.l.b16 %v50
  %v140 = vunpack.c.h.b16 %v50
  %v141 = vunpack.c.l.b16 %v51
  %v142 = vunpack.c.h.b16 %v51
  %v143 = vunpack.c.l.b16 %v52
  %v144 = vunpack.c.h.b16 %v52
  %v145 = vunpack.c.l.b16 %v53
  %v146 = vunpack.c.h.b16 %v53
  %v147 = vunpack.c.l.b16 %v54
  %v148 = vunpack.c.h.b16 %v54
  %v149 = vunpack.c.l.b16 %v55
  %v150 = vunpack.c.h.b16 %v55
  %v151 = vunpack.c.l.b16 %v56
  %v152 = vunpack.c.h.b16 %v56
  %v153 = vpack.c.b16 %v93, %v89
  %v154 = vpack.c.b16 %v94, %v90
  %v155 = vpack.c.b16 %v95, %v91
  %v156 = vpack.c.b16 %v96, %v92
  %v157 = vpack.c.b16 %v101, %v97
  %v158 = vpack.c.b16 %v102, %v98
  %v159 = vpack.c.b16 %v103, %v99
  %v160 = vpack.c.b16 %v104, %v100
  %v161 = vpack.c.b16 %v109, %v105
  %v162 = vpack.c.b16 %v110, %v106
  %v163 = vpack.c.b16 %v111, %v107
  %v164 = vpack.c.b16 %v112, %v108
  %v165 = vpack.c.b16 %v117, %v113
  %v166 = vpack.c.b16 %v118, %v114
  %v167 = vpack.c.b16 %v119, %v115
  %v168 = vpack.c.b16 %v120, %v116
  %v169 = vpack.c.b16 %v125, %v121
  %v170 = vpack.c.b16 %v126, %v122
  %v171 = vpack.c.b16 %v127, %v123
  %v172 = vpack.c.b16 %v128, %v124
  %v173 = vpack.c.b16 %v133, %v129
  %v174 = vpack.c.b16 %v134, %v130
  %v175 = vpack.c.b16 %v135, %v131
  %v176 = vpack.c.b16 %v136, %v132
  %v177 = vpack.c.b16 %v141, %v137
  %v178 = vpack.c.b16 %v142, %v138
  %v179 = vpack.c.b16 %v143, %v139
  %v180 = vpack.c.b16 %v144, %v140
  %v181 = vpack.c.b16 %v149, %v145
  %v182 = vpack.c.b16 %v150, %v146
  %v183 = vpack.c.b16 %v151, %v147
  %v184 = vpack.c.b16 %v152, %v148
  %217 = vmatprep.subr.bf16.mxu0 %v182
  %218 = vmatpush1.bf16.msra.mxu0 %v181
  %219 = vmatprep.subr.bf16.mxu0 %v178
  %220 = vmatpush1.bf16.msra.mxu0 %v177
  %221 = vmatprep.subr.bf16.mxu0 %v174
  %222 = vmatpush1.bf16.msra.mxu0 %v173
  %223 = vmatprep.subr.bf16.mxu0 %v170
  %224 = vmatpush1.bf16.msra.mxu0 %v169
  %225 = vmatprep.subr.bf16.mxu0 %v166
  %226 = vmatpush1.bf16.msra.mxu0 %v165
  %227 = vmatprep.subr.bf16.mxu0 %v162
  %228 = vmatpush1.bf16.msra.mxu0 %v161
  %229 = vmatprep.subr.bf16.mxu0 %v158
  %230 = vmatpush1.bf16.msra.mxu0 %v157
  %231 = vmatprep.subr.bf16.mxu0 %v154
  %232 = vmatpush1.bf16.msra.mxu0 %v153
  %233 = vmatprep.subr.bf16.mxu0 0
  %234 = vmatpush2.bf16.msra.mxu0 0
  %235 = vmatprep.subr.bf16.mxu0 0
  %236 = vmatpush2.bf16.msra.mxu0 0
  %237 = vmatprep.subr.bf16.mxu0 0
  %238 = vmatpush2.bf16.msra.mxu0 0
  %239 = vmatprep.subr.bf16.mxu0 0
  %240 = vmatpush2.bf16.msra.mxu0 0
  %241 = vmatprep.subr.bf16.mxu0 0
  %242 = vmatpush2.bf16.msra.mxu0 0
  %243 = vmatprep.subr.bf16.mxu0 0
  %244 = vmatpush2.bf16.msra.mxu0 0
  %245 = vmatprep.subr.bf16.mxu0 0
  %246 = vmatpush2.bf16.msra.mxu0 0
  %247 = vmatprep.subr.bf16.mxu0 0
  %248 = vmatpush2.bf16.msra.mxu0 0
  %249 = vmatprep.mubr.bf16.mxu0 0
  %250 = vmatmul.mubr.bf16.gmra.mxu0 %v24
  %v251 = vpop.f32.mrf.mxu0
  %v252 = vadd.f32 0.0, %v251
  %v253 = vpop.f32.mrf.mxu0
  %v254 = vadd.f32 0.0, %v253
  %v255 = vpop.f32.mrf.mxu0
  %v256 = vpop.f32.mrf.mxu0
  %257 = vdwg.mxu0
  %258 = vmatprep.subr.bf16.mxu0 %v184
  %259 = vmatpush1.bf16.msra.mxu0 %v183
  %260 = vmatprep.subr.bf16.mxu0 %v180
  %261 = vmatpush1.bf16.msra.mxu0 %v179
  %262 = vmatprep.subr.bf16.mxu0 %v176
  %263 = vmatpush1.bf16.msra.mxu0 %v175
  %264 = vmatprep.subr.bf16.mxu0 %v172
  %265 = vmatpush1.bf16.msra.mxu0 %v171
  %266 = vmatprep.subr.bf16.mxu0 %v168
  %267 = vmatpush1.bf16.msra.mxu0 %v167
  %268 = vmatprep.subr.bf16.mxu0 %v164
  %269 = vmatpush1.bf16.msra.mxu0 %v163
  %270 = vmatprep.subr.bf16.mxu0 %v160
  %271 = vmatpush1.bf16.msra.mxu0 %v159
  %272 = vmatprep.subr.bf16.mxu0 %v156
  %273 = vmatpush1.bf16.msra.mxu0 %v155
  %274 = vmatprep.subr.bf16.mxu0 0
  %275 = vmatpush2.bf16.msra.mxu0 0
  %276 = vmatprep.subr.bf16.mxu0 0
  %277 = vmatpush2.bf16.msra.mxu0 0
  %278 = vmatprep.subr.bf16.mxu0 0
  %279 = vmatpush2.bf16.msra.mxu0 0
  %280 = vmatprep.subr.bf16.mxu0 0
  %281 = vmatpush2.bf16.msra.mxu0 0
  %282 = vmatprep.subr.bf16.mxu0 0
  %283 = vmatpush2.bf16.msra.mxu0 0
  %284 = vmatprep.subr.bf16.mxu0 0
  %285 = vmatpush2.bf16.msra.mxu0 0
  %286 = vmatprep.subr.bf16.mxu0 0
  %287 = vmatpush2.bf16.msra.mxu0 0
  %288 = vmatprep.subr.bf16.mxu0 0
  %289 = vmatpush2.bf16.msra.mxu0 0
  %290 = vmatprep.mubr.bf16.mxu0 0
  %291 = vmatmul.mubr.bf16.gmra.mxu0 %v24
  %v292 = vpop.f32.mrf.mxu0
  %v293 = vadd.f32 0.0, %v292
  %v294 = vpop.f32.mrf.mxu0
  %v295 = vadd.f32 0.0, %v294
  %v296 = vpop.f32.mrf.mxu0
  %v297 = vpop.f32.mrf.mxu0
  %298 = vdwg.mxu0
  %v299 = vadd.f32 %v20, %v252
  %v300 = vadd.f32 %v21, %v254
  %v301 = vadd.f32 %v22, %v293
  %v302 = vadd.f32 %v23, %v295
  %v303 = vxor.u32 %v299, 2147483648
  %v304 = vmul.f32 %v303, 1.442695
  %v305 = vpow.pop %v304
  %v306 = vadd.f32 %v305, 1.0
  %v307 = vrcp.pop %v306
  %v308 = vmul.f32 1.0, %v307
  %v309 = vxor.u32 %v300, 2147483648
  %v310 = vmul.f32 %v309, 1.442695
  %v311 = vpow.pop %v310
  %v312 = vadd.f32 %v311, 1.0
  %v313 = vrcp.pop %v312
  %v314 = vmul.f32 1.0, %v313
  %v315 = vtanh.pop %v301
  %v316 = vxor.u32 %v302, 2147483648
  %v317 = vmul.f32 %v316, 1.442695
  %v318 = vpow.pop %v317
  %v319 = vadd.f32 %v318, 1.0
  %v320 = vrcp.pop %v319
  %v321 = vmul.f32 1.0, %v320
  %v322 = vmul.f32 %v314, %v19
  %v323 = vmul.f32 %v308, %v315
  %v324 = vadd.f32 %v322, %v323
  %v325 = vtanh.pop %v324
  %v326 = vmul.f32 %v321, %v325
  %327 = vst [vmem:[#allocation3] sm:$0xff] %v324
  %328 = vst [vmem:[#allocation2] sm:$0xff] %v326
  %329 = vst [vmem:[%s2] sm:$0xff] %v326
  %v330 = vld [vmem:[#allocation2] sm:$0xff]
  %v331 = vld [vmem:[#allocation3] sm:$0xff]
  %s332 = scalar_lea.vmem %s0, 32
  %v333 = vld [vmem:[%s332] sm:$0xff]
  %v334 = vld [vmem:[%s332 + $0x8] sm:$0xff]
  %v335 = vld [vmem:[%s332 + $0x10] sm:$0xff]
  %v336 = vld [vmem:[%s332 + $0x18] sm:$0xff]
  %v337 = vpack.c.bf16 %v330, %v330
  %v338 = vld [vmem:[%s1] sm:$0xff]
  %v339 = vld [vmem:[%s1 + $0x8] sm:$0xff]
  %v340 = vld [vmem:[%s1 + $0x10] sm:$0xff]
  %v341 = vld [vmem:[%s1 + $0x18] sm:$0xff]
  %v342 = vld [vmem:[%s1 + $0x20] sm:$0xff]
  %v343 = vld [vmem:[%s1 + $0x28] sm:$0xff]
  %v344 = vld [vmem:[%s1 + $0x30] sm:$0xff]
  %v345 = vld [vmem:[%s1 + $0x38] sm:$0xff]
  %v346 = vld [vmem:[%s1 + $0x40] sm:$0xff]
  %v347 = vld [vmem:[%s1 + $0x48] sm:$0xff]
  %v348 = vld [vmem:[%s1 + $0x50] sm:$0xff]
  %v349 = vld [vmem:[%s1 + $0x58] sm:$0xff]
  %v350 = vld [vmem:[%s1 + $0x60] sm:$0xff]
  %v351 = vld [vmem:[%s1 + $0x68] sm:$0xff]
  %v352 = vld [vmem:[%s1 + $0x70] sm:$0xff]
  %v353 = vld [vmem:[%s1 + $0x78] sm:$0xff]
  %v354 = vld [vmem:[%s1 + $0x80] sm:$0xff]
  %v355 = vld [vmem:[%s1 + $0x88] sm:$0xff]
  %v356 = vld [vmem:[%s1 + $0x90] sm:$0xff]
  %v357 = vld [vmem:[%s1 + $0x98] sm:$0xff]
  %v358 = vld [vmem:[%s1 + $0xa0] sm:$0xff]
  %v359 = vld [vmem:[%s1 + $0xa8] sm:$0xff]
  %v360 = vld [vmem:[%s1 + $0xb0] sm:$0xff]
  %v361 = vld [vmem:[%s1 + $0xb8] sm:$0xff]
  %v362 = vld [vmem:[%s1 + $0xc0] sm:$0xff]
  %v363 = vld [vmem:[%s1 + $0xc8] sm:$0xff]
  %v364 = vld [vmem:[%s1 + $0xd0] sm:$0xff]
  %v365 = vld [vmem:[%s1 + $0xd8] sm:$0xff]
  %v366 = vld [vmem:[%s1 + $0xe0] sm:$0xff]
  %v367 = vld [vmem:[%s1 + $0xe8] sm:$0xff]
  %v368 = vld [vmem:[%s1 + $0xf0] sm:$0xff]
  %v369 = vld [vmem:[%s1 + $0xf8] sm:$0xff]
  %v402 = vunpack.c.l.b16 %v338
  %v403 = vunpack.c.h.b16 %v338
  %v404 = vunpack.c.l.b16 %v339
  %v405 = vunpack.c.h.b16 %v339
  %v406 = vunpack.c.l.b16 %v340
  %v407 = vunpack.c.h.b16 %v340
  %v408 = vunpack.c.l.b16 %v341
  %v409 = vunpack.c.h.b16 %v341
  %v410 = vunpack.c.l.b16 %v342
  %v411 = vunpack.c.h.b16 %v342
  %v412 = vunpack.c.l.b16 %v343
  %v413 = vunpack.c.h.b16 %v343
  %v414 = vunpack.c.l.b16 %v344
  %v415 = vunpack.c.h.b16 %v344
  %v416 = vunpack.c.l.b16 %v345
  %v417 = vunpack.c.h.b16 %v345
  %v418 = vunpack.c.l.b16 %v346
  %v419 = vunpack.c.h.b16 %v346
  %v420 = vunpack.c.l.b16 %v347
  %v421 = vunpack.c.h.b16 %v347
  %v422 = vunpack.c.l.b16 %v348
  %v423 = vunpack.c.h.b16 %v348
  %v424 = vunpack.c.l.b16 %v349
  %v425 = vunpack.c.h.b16 %v349
  %v426 = vunpack.c.l.b16 %v350
  %v427 = vunpack.c.h.b16 %v350
  %v428 = vunpack.c.l.b16 %v351
  %v429 = vunpack.c.h.b16 %v351
  %v430 = vunpack.c.l.b16 %v352
  %v431 = vunpack.c.h.b16 %v352
  %v432 = vunpack.c.l.b16 %v353
  %v433 = vunpack.c.h.b16 %v353
  %v434 = vunpack.c.l.b16 %v354
  %v435 = vunpack.c.h.b16 %v354
  %v436 = vunpack.c.l.b16 %v355
  %v437 = vunpack.c.h.b16 %v355
  %v438 = vunpack.c.l.b16 %v356
  %v439 = vunpack.c.h.b16 %v356
  %v440 = vunpack.c.l.b16 %v357
  %v441 = vunpack.c.h.b16 %v357
  %v442 = vunpack.c.l.b16 %v358
  %v443 = vunpack.c.h.b16 %v358
  %v444 = vunpack.c.l.b16 %v359
  %v445 = vunpack.c.h.b16 %v359
  %v446 = vunpack.c.l.b16 %v360
  %v447 = vunpack.c.h.b16 %v360
  %v448 = vunpack.c.l.b16 %v361
  %v449 = vunpack.c.h.b16 %v361
  %v450 = vunpack.c.l.b16 %v362
  %v451 = vunpack.c.h.b16 %v362
  %v452 = vunpack.c.l.b16 %v363
  %v453 = vunpack.c.h.b16 %v363
  %v454 = vunpack.c.l.b16 %v364
  %v455 = vunpack.c.h.b16 %v364
  %v456 = vunpack.c.l.b16 %v365
  %v457 = vunpack.c.h.b16 %v365
  %v458 = vunpack.c.l.b16 %v366
  %v459 = vunpack.c.h.b16 %v366
  %v460 = vunpack.c.l.b16 %v367
  %v461 = vunpack.c.h.b16 %v367
  %v462 = vunpack.c.l.b16 %v368
  %v463 = vunpack.c.h.b16 %v368
  %v464 = vunpack.c.l.b16 %v369
  %v465 = vunpack.c.h.b16 %v369
  %v466 = vpack.c.b16 %v406, %v402
  %v467 = vpack.c.b16 %v407, %v403
  %v468 = vpack.c.b16 %v408, %v404
  %v469 = vpack.c.b16 %v409, %v405
  %v470 = vpack.c.b16 %v414, %v410
  %v471 = vpack.c.b16 %v415, %v411
  %v472 = vpack.c.b16 %v416, %v412
  %v473 = vpack.c.b16 %v417, %v413
  %v474 = vpack.c.b16 %v422, %v418
  %v475 = vpack.c.b16 %v423, %v419
  %v476 = vpack.c.b16 %v424, %v420
  %v477 = vpack.c.b16 %v425, %v421
  %v478 = vpack.c.b16 %v430, %v426
  %v479 = vpack.c.b16 %v431, %v427
  %v480 = vpack.c.b16 %v432, %v428
  %v481 = vpack.c.b16 %v433, %v429
  %v482 = vpack.c.b16 %v438, %v434
  %v483 = vpack.c.b16 %v439, %v435
  %v484 = vpack.c.b16 %v440, %v436
  %v485 = vpack.c.b16 %v441, %v437
  %v486 = vpack.c.b16 %v446, %v442
  %v487 = vpack.c.b16 %v447, %v443
  %v488 = vpack.c.b16 %v448, %v444
  %v489 = vpack.c.b16 %v449, %v445
  %v490 = vpack.c.b16 %v454, %v450
  %v491 = vpack.c.b16 %v455, %v451
  %v492 = vpack.c.b16 %v456, %v452
  %v493 = vpack.c.b16 %v457, %v453
  %v494 = vpack.c.b16 %v462, %v458
  %v495 = vpack.c.b16 %v463, %v459
  %v496 = vpack.c.b16 %v464, %v460
  %v497 = vpack.c.b16 %v465, %v461
  %530 = vmatprep.subr.bf16.mxu0 %v495
  %531 = vmatpush1.bf16.msra.mxu0 %v494
  %532 = vmatprep.subr.bf16.mxu0 %v491
  %533 = vmatpush1.bf16.msra.mxu0 %v490
  %534 = vmatprep.subr.bf16.mxu0 %v487
  %535 = vmatpush1.bf16.msra.mxu0 %v486
  %536 = vmatprep.subr.bf16.mxu0 %v483
  %537 = vmatpush1.bf16.msra.mxu0 %v482
  %538 = vmatprep.subr.bf16.mxu0 %v479
  %539 = vmatpush1.bf16.msra.mxu0 %v478
  %540 = vmatprep.subr.bf16.mxu0 %v475
  %541 = vmatpush1.bf16.msra.mxu0 %v474
  %542 = vmatprep.subr.bf16.mxu0 %v471
  %543 = vmatpush1.bf16.msra.mxu0 %v470
  %544 = vmatprep.subr.bf16.mxu0 %v467
  %545 = vmatpush1.bf16.msra.mxu0 %v466
  %546 = vmatprep.subr.bf16.mxu0 0
  %547 = vmatpush2.bf16.msra.mxu0 0
  %548 = vmatprep.subr.bf16.mxu0 0
  %549 = vmatpush2.bf16.msra.mxu0 0
  %550 = vmatprep.subr.bf16.mxu0 0
  %551 = vmatpush2.bf16.msra.mxu0 0
  %552 = vmatprep.subr.bf16.mxu0 0
  %553 = vmatpush2.bf16.msra.mxu0 0
  %554 = vmatprep.subr.bf16.mxu0 0
  %555 = vmatpush2.bf16.msra.mxu0 0
  %556 = vmatprep.subr.bf16.mxu0 0
  %557 = vmatpush2.bf16.msra.mxu0 0
  %558 = vmatprep.subr.bf16.mxu0 0
  %559 = vmatpush2.bf16.msra.mxu0 0
  %560 = vmatprep.subr.bf16.mxu0 0
  %561 = vmatpush2.bf16.msra.mxu0 0
  %562 = vmatprep.mubr.bf16.mxu0 0
  %563 = vmatmul.mubr.bf16.gmra.mxu0 %v337
  %v564 = vpop.f32.mrf.mxu0
  %v565 = vadd.f32 0.0, %v564
  %v566 = vpop.f32.mrf.mxu0
  %v567 = vadd.f32 0.0, %v566
  %v568 = vpop.f32.mrf.mxu0
  %v569 = vpop.f32.mrf.mxu0
  %570 = vdwg.mxu0
  %571 = vmatprep.subr.bf16.mxu0 %v497
  %572 = vmatpush1.bf16.msra.mxu0 %v496
  %573 = vmatprep.subr.bf16.mxu0 %v493
  %574 = vmatpush1.bf16.msra.mxu0 %v492
  %575 = vmatprep.subr.bf16.mxu0 %v489
  %576 = vmatpush1.bf16.msra.mxu0 %v488
  %577 = vmatprep.subr.bf16.mxu0 %v485
  %578 = vmatpush1.bf16.msra.mxu0 %v484
  %579 = vmatprep.subr.bf16.mxu0 %v481
  %580 = vmatpush1.bf16.msra.mxu0 %v480
  %581 = vmatprep.subr.bf16.mxu0 %v477
  %582 = vmatpush1.bf16.msra.mxu0 %v476
  %583 = vmatprep.subr.bf16.mxu0 %v473
  %584 = vmatpush1.bf16.msra.mxu0 %v472
  %585 = vmatprep.subr.bf16.mxu0 %v469
  %586 = vmatpush1.bf16.msra.mxu0 %v468
  %587 = vmatprep.subr.bf16.mxu0 0
  %588 = vmatpush2.bf16.msra.mxu0 0
  %589 = vmatprep.subr.bf16.mxu0 0
  %590 = vmatpush2.bf16.msra.mxu0 0
  %591 = vmatprep.subr.bf16.mxu0 0
  %592 = vmatpush2.bf16.msra.mxu0 0
  %593 = vmatprep.subr.bf16.mxu0 0
  %594 = vmatpush2.bf16.msra.mxu0 0
  %595 = vmatprep.subr.bf16.mxu0 0
  %596 = vmatpush2.bf16.msra.mxu0 0
  %597 = vmatprep.subr.bf16.mxu0 0
  %598 = vmatpush2.bf16.msra.mxu0 0
  %599 = vmatprep.subr.bf16.mxu0 0
  %600 = vmatpush2.bf16.msra.mxu0 0
  %601 = vmatprep.subr.bf16.mxu0 0
  %602 = vmatpush2.bf16.msra.mxu0 0
  %603 = vmatprep.mubr.bf16.mxu0 0
  %604 = vmatmul.mubr.bf16.gmra.mxu0 %v337
  %v605 = vpop.f32.mrf.mxu0
  %v606 = vadd.f32 0.0, %v605
  %v607 = vpop.f32.mrf.mxu0
  %v608 = vadd.f32 0.0, %v607
  %v609 = vpop.f32.mrf.mxu0
  %v610 = vpop.f32.mrf.mxu0
  %611 = vdwg.mxu0
  %v612 = vadd.f32 %v333, %v565
  %v613 = vadd.f32 %v334, %v567
  %v614 = vadd.f32 %v335, %v606
  %v615 = vadd.f32 %v336, %v608
  %v616 = vxor.u32 %v612, 2147483648
  %v617 = vmul.f32 %v616, 1.442695
  %v618 = vpow.pop %v617
  %v619 = vadd.f32 %v618, 1.0
  %v620 = vrcp.pop %v619
  %v621 = vmul.f32 1.0, %v620
  %v622 = vxor.u32 %v613, 2147483648
  %v623 = vmul.f32 %v622, 1.442695
  %v624 = vpow.pop %v623
  %v625 = vadd.f32 %v624, 1.0
  %v626 = vrcp.pop %v625
  %v627 = vmul.f32 1.0, %v626
  %v628 = vtanh.pop %v614
  %v629 = vxor.u32 %v615, 2147483648
  %v630 = vmul.f32 %v629, 1.442695
  %v631 = vpow.pop %v630
  %v632 = vadd.f32 %v631, 1.0
  %v633 = vrcp.pop %v632
  %v634 = vmul.f32 1.0, %v633
  %v635 = vmul.f32 %v627, %v331
  %v636 = vmul.f32 %v621, %v628
  %v637 = vadd.f32 %v635, %v636
  %v638 = vtanh.pop %v637
  %v639 = vmul.f32 %v634, %v638
  %640 = vst [vmem:[#allocation3] sm:$0xff] %v637
  %641 = vst [vmem:[#allocation2] sm:$0xff] %v639
  %s642 = scalar_lea.vmem %s2, 8
  %643 = vst [vmem:[%s642] sm:$0xff] %v639
  %v644 = vld [vmem:[#allocation2] sm:$0xff]
  %v645 = vld [vmem:[#allocation3] sm:$0xff]
  %s646 = scalar_lea.vmem %s0, 64
  %v647 = vld [vmem:[%s646] sm:$0xff]
  %v648 = vld [vmem:[%s646 + $0x8] sm:$0xff]
  %v649 = vld [vmem:[%s646 + $0x10] sm:$0xff]
  %v650 = vld [vmem:[%s646 + $0x18] sm:$0xff]
  %v651 = vpack.c.bf16 %v644, %v644
  %v652 = vld [vmem:[%s1] sm:$0xff]
  %v653 = vld [vmem:[%s1 + $0x8] sm:$0xff]
  %v654 = vld [vmem:[%s1 + $0x10] sm:$0xff]
  %v655 = vld [vmem:[%s1 + $0x18] sm:$0xff]
  %v656 = vld [vmem:[%s1 + $0x20] sm:$0xff]
  %v657 = vld [vmem:[%s1 + $0x28] sm:$0xff]
  %v658 = vld [vmem:[%s1 + $0x30] sm:$0xff]
  %v659 = vld [vmem:[%s1 + $0x38] sm:$0xff]
  %v660 = vld [vmem:[%s1 + $0x40] sm:$0xff]
  %v661 = vld [vmem:[%s1 + $0x48] sm:$0xff]
  %v662 = vld [vmem:[%s1 + $0x50] sm:$0xff]
  %v663 = vld [vmem:[%s1 + $0x58] sm:$0xff]
  %v664 = vld [vmem:[%s1 + $0x60] sm:$0xff]
  %v665 = vld [vmem:[%s1 + $0x68] sm:$0xff]
  %v666 = vld [vmem:[%s1 + $0x70] sm:$0xff]
  %v667 = vld [vmem:[%s1 + $0x78] sm:$0xff]
  %v668 = vld [vmem:[%s1 + $0x80] sm:$0xff]
  %v669 = vld [vmem:[%s1 + $0x88] sm:$0xff]
  %v670 = vld [vmem:[%s1 + $0x90] sm:$0xff]
  %v671 = vld [vmem:[%s1 + $0x98] sm:$0xff]
  %v672 = vld [vmem:[%s1 + $0xa0] sm:$0xff]
  %v673 = vld [vmem:[%s1 + $0xa8] sm:$0xff]
  %v674 = vld [vmem:[%s1 + $0xb0] sm:$0xff]
  %v675 = vld [vmem:[%s1 + $0xb8] sm:$0xff]
  %v676 = vld [vmem:[%s1 + $0xc0] sm:$0xff]
  %v677 = vld [vmem:[%s1 + $0xc8] sm:$0xff]
  %v678 = vld [vmem:[%s1 + $0xd0] sm:$0xff]
  %v679 = vld [vmem:[%s1 + $0xd8] sm:$0xff]
  %v680 = vld [vmem:[%s1 + $0xe0] sm:$0xff]
  %v681 = vld [vmem:[%s1 + $0xe8] sm:$0xff]
  %v682 = vld [vmem:[%s1 + $0xf0] sm:$0xff]
  %v683 = vld [vmem:[%s1 + $0xf8] sm:$0xff]
  %v716 = vunpack.c.l.b16 %v652
  %v717 = vunpack.c.h.b16 %v652
  %v718 = vunpack.c.l.b16 %v653
  %v719 = vunpack.c.h.b16 %v653
  %v720 = vunpack.c.l.b16 %v654
  %v721 = vunpack.c.h.b16 %v654
  %v722 = vunpack.c.l.b16 %v655
  %v723 = vunpack.c.h.b16 %v655
  %v724 = vunpack.c.l.b16 %v656
  %v725 = vunpack.c.h.b16 %v656
  %v726 = vunpack.c.l.b16 %v657
  %v727 = vunpack.c.h.b16 %v657
  %v728 = vunpack.c.l.b16 %v658
  %v729 = vunpack.c.h.b16 %v658
  %v730 = vunpack.c.l.b16 %v659
  %v731 = vunpack.c.h.b16 %v659
  %v732 = vunpack.c.l.b16 %v660
  %v733 = vunpack.c.h.b16 %v660
  %v734 = vunpack.c.l.b16 %v661
  %v735 = vunpack.c.h.b16 %v661
  %v736 = vunpack.c.l.b16 %v662
  %v737 = vunpack.c.h.b16 %v662
  %v738 = vunpack.c.l.b16 %v663
  %v739 = vunpack.c.h.b16 %v663
  %v740 = vunpack.c.l.b16 %v664
  %v741 = vunpack.c.h.b16 %v664
  %v742 = vunpack.c.l.b16 %v665
  %v743 = vunpack.c.h.b16 %v665
  %v744 = vunpack.c.l.b16 %v666
  %v745 = vunpack.c.h.b16 %v666
  %v746 = vunpack.c.l.b16 %v667
  %v747 = vunpack.c.h.b16 %v667
  %v748 = vunpack.c.l.b16 %v668
  %v749 = vunpack.c.h.b16 %v668
  %v750 = vunpack.c.l.b16 %v669
  %v751 = vunpack.c.h.b16 %v669
  %v752 = vunpack.c.l.b16 %v670
  %v753 = vunpack.c.h.b16 %v670
  %v754 = vunpack.c.l.b16 %v671
  %v755 = vunpack.c.h.b16 %v671
  %v756 = vunpack.c.l.b16 %v672
  %v757 = vunpack.c.h.b16 %v672
  %v758 = vunpack.c.l.b16 %v673
  %v759 = vunpack.c.h.b16 %v673
  %v760 = vunpack.c.l.b16 %v674
  %v761 = vunpack.c.h.b16 %v674
  %v762 = vunpack.c.l.b16 %v675
  %v763 = vunpack.c.h.b16 %v675
  %v764 = vunpack.c.l.b16 %v676
  %v765 = vunpack.c.h.b16 %v676
  %v766 = vunpack.c.l.b16 %v677
  %v767 = vunpack.c.h.b16 %v677
  %v768 = vunpack.c.l.b16 %v678
  %v769 = vunpack.c.h.b16 %v678
  %v770 = vunpack.c.l.b16 %v679
  %v771 = vunpack.c.h.b16 %v679
  %v772 = vunpack.c.l.b16 %v680
  %v773 = vunpack.c.h.b16 %v680
  %v774 = vunpack.c.l.b16 %v681
  %v775 = vunpack.c.h.b16 %v681
  %v776 = vunpack.c.l.b16 %v682
  %v777 = vunpack.c.h.b16 %v682
  %v778 = vunpack.c.l.b16 %v683
  %v779 = vunpack.c.h.b16 %v683
  %v780 = vpack.c.b16 %v720, %v716
  %v781 = vpack.c.b16 %v721, %v717
  %v782 = vpack.c.b16 %v722, %v718
  %v783 = vpack.c.b16 %v723, %v719
  %v784 = vpack.c.b16 %v728, %v724
  %v785 = vpack.c.b16 %v729, %v725
  %v786 = vpack.c.b16 %v730, %v726
  %v787 = vpack.c.b16 %v731, %v727
  %v788 = vpack.c.b16 %v736, %v732
  %v789 = vpack.c.b16 %v737, %v733
  %v790 = vpack.c.b16 %v738, %v734
  %v791 = vpack.c.b16 %v739, %v735
  %v792 = vpack.c.b16 %v744, %v740
  %v793 = vpack.c.b16 %v745, %v741
  %v794 = vpack.c.b16 %v746, %v742
  %v795 = vpack.c.b16 %v747, %v743
  %v796 = vpack.c.b16 %v752, %v748
  %v797 = vpack.c.b16 %v753, %v749
  %v798 = vpack.c.b16 %v754, %v750
  %v799 = vpack.c.b16 %v755, %v751
  %v800 = vpack.c.b16 %v760, %v756
  %v801 = vpack.c.b16 %v761, %v757
  %v802 = vpack.c.b16 %v762, %v758
  %v803 = vpack.c.b16 %v763, %v759
  %v804 = vpack.c.b16 %v768, %v764
  %v805 = vpack.c.b16 %v769, %v765
  %v806 = vpack.c.b16 %v770, %v766
  %v807 = vpack.c.b16 %v771, %v767
  %v808 = vpack.c.b16 %v776, %v772
  %v809 = vpack.c.b16 %v777, %v773
  %v810 = vpack.c.b16 %v778, %v774
  %v811 = vpack.c.b16 %v779, %v775
  %844 = vmatprep.subr.bf16.mxu0 %v809
  %845 = vmatpush1.bf16.msra.mxu0 %v808
  %846 = vmatprep.subr.bf16.mxu0 %v805
  %847 = vmatpush1.bf16.msra.mxu0 %v804
  %848 = vmatprep.subr.bf16.mxu0 %v801
  %849 = vmatpush1.bf16.msra.mxu0 %v800
  %850 = vmatprep.subr.bf16.mxu0 %v797
  %851 = vmatpush1.bf16.msra.mxu0 %v796
  %852 = vmatprep.subr.bf16.mxu0 %v793
  %853 = vmatpush1.bf16.msra.mxu0 %v792
  %854 = vmatprep.subr.bf16.mxu0 %v789
  %855 = vmatpush1.bf16.msra.mxu0 %v788
  %856 = vmatprep.subr.bf16.mxu0 %v785
  %857 = vmatpush1.bf16.msra.mxu0 %v784
  %858 = vmatprep.subr.bf16.mxu0 %v781
  %859 = vmatpush1.bf16.msra.mxu0 %v780
  %860 = vmatprep.subr.bf16.mxu0 0
  %861 = vmatpush2.bf16.msra.mxu0 0
  %862 = vmatprep.subr.bf16.mxu0 0
  %863 = vmatpush2.bf16.msra.mxu0 0
  %864 = vmatprep.subr.bf16.mxu0 0
  %865 = vmatpush2.bf16.msra.mxu0 0
  %866 = vmatprep.subr.bf16.mxu0 0
  %867 = vmatpush2.bf16.msra.mxu0 0
  %868 = vmatprep.subr.bf16.mxu0 0
  %869 = vmatpush2.bf16.msra.mxu0 0
  %870 = vmatprep.subr.bf16.mxu0 0
  %871 = vmatpush2.bf16.msra.mxu0 0
  %872 = vmatprep.subr.bf16.mxu0 0
  %873 = vmatpush2.bf16.msra.mxu0 0
  %874 = vmatprep.subr.bf16.mxu0 0
  %875 = vmatpush2.bf16.msra.mxu0 0
  %876 = vmatprep.mubr.bf16.mxu0 0
  %877 = vmatmul.mubr.bf16.gmra.mxu0 %v651
  %v878 = vpop.f32.mrf.mxu0
  %v879 = vadd.f32 0.0, %v878
  %v880 = vpop.f32.mrf.mxu0
  %v881 = vadd.f32 0.0, %v880
  %v882 = vpop.f32.mrf.mxu0
  %v883 = vpop.f32.mrf.mxu0
  %884 = vdwg.mxu0
  %885 = vmatprep.subr.bf16.mxu0 %v811
  %886 = vmatpush1.bf16.msra.mxu0 %v810
  %887 = vmatprep.subr.bf16.mxu0 %v807
  %888 = vmatpush1.bf16.msra.mxu0 %v806
  %889 = vmatprep.subr.bf16.mxu0 %v803
  %890 = vmatpush1.bf16.msra.mxu0 %v802
  %891 = vmatprep.subr.bf16.mxu0 %v799
  %892 = vmatpush1.bf16.msra.mxu0 %v798
  %893 = vmatprep.subr.bf16.mxu0 %v795
  %894 = vmatpush1.bf16.msra.mxu0 %v794
  %895 = vmatprep.subr.bf16.mxu0 %v791
  %896 = vmatpush1.bf16.msra.mxu0 %v790
  %897 = vmatprep.subr.bf16.mxu0 %v787
  %898 = vmatpush1.bf16.msra.mxu0 %v786
  %899 = vmatprep.subr.bf16.mxu0 %v783
  %900 = vmatpush1.bf16.msra.mxu0 %v782
  %901 = vmatprep.subr.bf16.mxu0 0
  %902 = vmatpush2.bf16.msra.mxu0 0
  %903 = vmatprep.subr.bf16.mxu0 0
  %904 = vmatpush2.bf16.msra.mxu0 0
  %905 = vmatprep.subr.bf16.mxu0 0
  %906 = vmatpush2.bf16.msra.mxu0 0
  %907 = vmatprep.subr.bf16.mxu0 0
  %908 = vmatpush2.bf16.msra.mxu0 0
  %909 = vmatprep.subr.bf16.mxu0 0
  %910 = vmatpush2.bf16.msra.mxu0 0
  %911 = vmatprep.subr.bf16.mxu0 0
  %912 = vmatpush2.bf16.msra.mxu0 0
  %913 = vmatprep.subr.bf16.mxu0 0
  %914 = vmatpush2.bf16.msra.mxu0 0
  %915 = vmatprep.subr.bf16.mxu0 0
  %916 = vmatpush2.bf16.msra.mxu0 0
  %917 = vmatprep.mubr.bf16.mxu0 0
  %918 = vmatmul.mubr.bf16.gmra.mxu0 %v651
  %v919 = vpop.f32.mrf.mxu0
  %v920 = vadd.f32 0.0, %v919
  %v921 = vpop.f32.mrf.mxu0
  %v922 = vadd.f32 0.0, %v921
  %v923 = vpop.f32.mrf.mxu0
  %v924 = vpop.f32.mrf.mxu0
  %925 = vdwg.mxu0
  %v926 = vadd.f32 %v647, %v879
  %v927 = vadd.f32 %v648, %v881
  %v928 = vadd.f32 %v649, %v920
  %v929 = vadd.f32 %v650, %v922
  %v930 = vxor.u32 %v926, 2147483648
  %v931 = vmul.f32 %v930, 1.442695
  %v932 = vpow.pop %v931
  %v933 = vadd.f32 %v932, 1.0
  %v934 = vrcp.pop %v933
  %v935 = vmul.f32 1.0, %v934
  %v936 = vxor.u32 %v927, 2147483648
  %v937 = vmul.f32 %v936, 1.442695
  %v938 = vpow.pop %v937
  %v939 = vadd.f32 %v938, 1.0
  %v940 = vrcp.pop %v939
  %v941 = vmul.f32 1.0, %v940
  %v942 = vtanh.pop %v928
  %v943 = vxor.u32 %v929, 2147483648
  %v944 = vmul.f32 %v943, 1.442695
  %v945 = vpow.pop %v944
  %v946 = vadd.f32 %v945, 1.0
  %v947 = vrcp.pop %v946
  %v948 = vmul.f32 1.0, %v947
  %v949 = vmul.f32 %v941, %v645
  %v950 = vmul.f32 %v935, %v942
  %v951 = vadd.f32 %v949, %v950
  %v952 = vtanh.pop %v951
  %v953 = vmul.f32 %v948, %v952
  %954 = vst [vmem:[#allocation3] sm:$0xff] %v951
  %955 = vst [vmem:[#allocation2] sm:$0xff] %v953
  %s956 = scalar_lea.vmem %s2, 16
  %957 = vst [vmem:[%s956] sm:$0xff] %v953
  %v958 = vld [vmem:[#allocation2] sm:$0xff]
  %v959 = vld [vmem:[#allocation3] sm:$0xff]
  %s960 = scalar_lea.vmem %s0, 96
  %v961 = vld [vmem:[%s960] sm:$0xff]
  %v962 = vld [vmem:[%s960 + $0x8] sm:$0xff]
  %v963 = vld [vmem:[%s960 + $0x10] sm:$0xff]
  %v964 = vld [vmem:[%s960 + $0x18] sm:$0xff]
  %v965 = vpack.c.bf16 %v958, %v958
  %v966 = vld [vmem:[%s1] sm:$0xff]
  %v967 = vld [vmem:[%s1 + $0x8] sm:$0xff]
  %v968 = vld [vmem:[%s1 + $0x10] sm:$0xff]
  %v969 = vld [vmem:[%s1 + $0x18] sm:$0xff]
  %v970 = vld [vmem:[%s1 + $0x20] sm:$0xff]
  %v971 = vld [vmem:[%s1 + $0x28] sm:$0xff]
  %v972 = vld [vmem:[%s1 + $0x30] sm:$0xff]
  %v973 = vld [vmem:[%s1 + $0x38] sm:$0xff]
  %v974 = vld [vmem:[%s1 + $0x40] sm:$0xff]
  %v975 = vld [vmem:[%s1 + $0x48] sm:$0xff]
  %v976 = vld [vmem:[%s1 + $0x50] sm:$0xff]
  %v977 = vld [vmem:[%s1 + $0x58] sm:$0xff]
  %v978 = vld [vmem:[%s1 + $0x60] sm:$0xff]
  %v979 = vld [vmem:[%s1 + $0x68] sm:$0xff]
  %v980 = vld [vmem:[%s1 + $0x70] sm:$0xff]
  %v981 = vld [vmem:[%s1 + $0x78] sm:$0xff]
  %v982 = vld [vmem:[%s1 + $0x80] sm:$0xff]
  %v983 = vld [vmem:[%s1 + $0x88] sm:$0xff]
  %v984 = vld [vmem:[%s1 + $0x90] sm:$0xff]
  %v985 = vld [vmem:[%s1 + $0x98] sm:$0xff]
  %v986 = vld [vmem:[%s1 + $0xa0] sm:$0xff]
  %v987 = vld [vmem:[%s1 + $0xa8] sm:$0xff]
  %v988 = vld [vmem:[%s1 + $0xb0] sm:$0xff]
  %v989 = vld [vmem:[%s1 + $0xb8] sm:$0xff]
  %v990 = vld [vmem:[%s1 + $0xc0] sm:$0xff]
  %v991 = vld [vmem:[%s1 + $0xc8] sm:$0xff]
  %v992 = vld [vmem:[%s1 + $0xd0] sm:$0xff]
  %v993 = vld [vmem:[%s1 + $0xd8] sm:$0xff]
  %v994 = vld [vmem:[%s1 + $0xe0] sm:$0xff]
  %v995 = vld [vmem:[%s1 + $0xe8] sm:$0xff]
  %v996 = vld [vmem:[%s1 + $0xf0] sm:$0xff]
  %v997 = vld [vmem:[%s1 + $0xf8] sm:$0xff]
  %v1030 = vunpack.c.l.b16 %v966
  %v1031 = vunpack.c.h.b16 %v966
  %v1032 = vunpack.c.l.b16 %v967
  %v1033 = vunpack.c.h.b16 %v967
  %v1034 = vunpack.c.l.b16 %v968
  %v1035 = vunpack.c.h.b16 %v968
  %v1036 = vunpack.c.l.b16 %v969
  %v1037 = vunpack.c.h.b16 %v969
  %v1038 = vunpack.c.l.b16 %v970
  %v1039 = vunpack.c.h.b16 %v970
  %v1040 = vunpack.c.l.b16 %v971
  %v1041 = vunpack.c.h.b16 %v971
  %v1042 = vunpack.c.l.b16 %v972
  %v1043 = vunpack.c.h.b16 %v972
  %v1044 = vunpack.c.l.b16 %v973
  %v1045 = vunpack.c.h.b16 %v973
  %v1046 = vunpack.c.l.b16 %v974
  %v1047 = vunpack.c.h.b16 %v974
  %v1048 = vunpack.c.l.b16 %v975
  %v1049 = vunpack.c.h.b16 %v975
  %v1050 = vunpack.c.l.b16 %v976
  %v1051 = vunpack.c.h.b16 %v976
  %v1052 = vunpack.c.l.b16 %v977
  %v1053 = vunpack.c.h.b16 %v977
  %v1054 = vunpack.c.l.b16 %v978
  %v1055 = vunpack.c.h.b16 %v978
  %v1056 = vunpack.c.l.b16 %v979
  %v1057 = vunpack.c.h.b16 %v979
  %v1058 = vunpack.c.l.b16 %v980
  %v1059 = vunpack.c.h.b16 %v980
  %v1060 = vunpack.c.l.b16 %v981
  %v1061 = vunpack.c.h.b16 %v981
  %v1062 = vunpack.c.l.b16 %v982
  %v1063 = vunpack.c.h.b16 %v982
  %v1064 = vunpack.c.l.b16 %v983
  %v1065 = vunpack.c.h.b16 %v983
  %v1066 = vunpack.c.l.b16 %v984
  %v1067 = vunpack.c.h.b16 %v984
  %v1068 = vunpack.c.l.b16 %v985
  %v1069 = vunpack.c.h.b16 %v985
  %v1070 = vunpack.c.l.b16 %v986
  %v1071 = vunpack.c.h.b16 %v986
  %v1072 = vunpack.c.l.b16 %v987
  %v1073 = vunpack.c.h.b16 %v987
  %v1074 = vunpack.c.l.b16 %v988
  %v1075 = vunpack.c.h.b16 %v988
  %v1076 = vunpack.c.l.b16 %v989
  %v1077 = vunpack.c.h.b16 %v989
  %v1078 = vunpack.c.l.b16 %v990
  %v1079 = vunpack.c.h.b16 %v990
  %v1080 = vunpack.c.l.b16 %v991
  %v1081 = vunpack.c.h.b16 %v991
  %v1082 = vunpack.c.l.b16 %v992
  %v1083 = vunpack.c.h.b16 %v992
  %v1084 = vunpack.c.l.b16 %v993
  %v1085 = vunpack.c.h.b16 %v993
  %v1086 = vunpack.c.l.b16 %v994
  %v1087 = vunpack.c.h.b16 %v994
  %v1088 = vunpack.c.l.b16 %v995
  %v1089 = vunpack.c.h.b16 %v995
  %v1090 = vunpack.c.l.b16 %v996
  %v1091 = vunpack.c.h.b16 %v996
  %v1092 = vunpack.c.l.b16 %v997
  %v1093 = vunpack.c.h.b16 %v997
  %v1094 = vpack.c.b16 %v1034, %v1030
  %v1095 = vpack.c.b16 %v1035, %v1031
  %v1096 = vpack.c.b16 %v1036, %v1032
  %v1097 = vpack.c.b16 %v1037, %v1033
  %v1098 = vpack.c.b16 %v1042, %v1038
  %v1099 = vpack.c.b16 %v1043, %v1039
  %v1100 = vpack.c.b16 %v1044, %v1040
  %v1101 = vpack.c.b16 %v1045, %v1041
  %v1102 = vpack.c.b16 %v1050, %v1046
  %v1103 = vpack.c.b16 %v1051, %v1047
  %v1104 = vpack.c.b16 %v1052, %v1048
  %v1105 = vpack.c.b16 %v1053, %v1049
  %v1106 = vpack.c.b16 %v1058, %v1054
  %v1107 = vpack.c.b16 %v1059, %v1055
  %v1108 = vpack.c.b16 %v1060, %v1056
  %v1109 = vpack.c.b16 %v1061, %v1057
  %v1110 = vpack.c.b16 %v1066, %v1062
  %v1111 = vpack.c.b16 %v1067, %v1063
  %v1112 = vpack.c.b16 %v1068, %v1064
  %v1113 = vpack.c.b16 %v1069, %v1065
  %v1114 = vpack.c.b16 %v1074, %v1070
  %v1115 = vpack.c.b16 %v1075, %v1071
  %v1116 = vpack.c.b16 %v1076, %v1072
  %v1117 = vpack.c.b16 %v1077, %v1073
  %v1118 = vpack.c.b16 %v1082, %v1078
  %v1119 = vpack.c.b16 %v1083, %v1079
  %v1120 = vpack.c.b16 %v1084, %v1080
  %v1121 = vpack.c.b16 %v1085, %v1081
  %v1122 = vpack.c.b16 %v1090, %v1086
  %v1123 = vpack.c.b16 %v1091, %v1087
  %v1124 = vpack.c.b16 %v1092, %v1088
  %v1125 = vpack.c.b16 %v1093, %v1089
  %1158 = vmatprep.subr.bf16.mxu0 %v1123
  %1159 = vmatpush1.bf16.msra.mxu0 %v1122
  %1160 = vmatprep.subr.bf16.mxu0 %v1119
  %1161 = vmatpush1.bf16.msra.mxu0 %v1118
  %1162 = vmatprep.subr.bf16.mxu0 %v1115
  %1163 = vmatpush1.bf16.msra.mxu0 %v1114
  %1164 = vmatprep.subr.bf16.mxu0 %v1111
  %1165 = vmatpush1.bf16.msra.mxu0 %v1110
  %1166 = vmatprep.subr.bf16.mxu0 %v1107
  %1167 = vmatpush1.bf16.msra.mxu0 %v1106
  %1168 = vmatprep.subr.bf16.mxu0 %v1103
  %1169 = vmatpush1.bf16.msra.mxu0 %v1102
  %1170 = vmatprep.subr.bf16.mxu0 %v1099
  %1171 = vmatpush1.bf16.msra.mxu0 %v1098
  %1172 = vmatprep.subr.bf16.mxu0 %v1095
  %1173 = vmatpush1.bf16.msra.mxu0 %v1094
  %1174 = vmatprep.subr.bf16.mxu0 0
  %1175 = vmatpush2.bf16.msra.mxu0 0
  %1176 = vmatprep.subr.bf16.mxu0 0
  %1177 = vmatpush2.bf16.msra.mxu0 0
  %1178 = vmatprep.subr.bf16.mxu0 0
  %1179 = vmatpush2.bf16.msra.mxu0 0
  %1180 = vmatprep.subr.bf16.mxu0 0
  %1181 = vmatpush2.bf16.msra.mxu0 0
  %1182 = vmatprep.subr.bf16.mxu0 0
  %1183 = vmatpush2.bf16.msra.mxu0 0
  %1184 = vmatprep.subr.bf16.mxu0 0
  %1185 = vmatpush2.bf16.msra.mxu0 0
  %1186 = vmatprep.subr.bf16.mxu0 0
  %1187 = vmatpush2.bf16.msra.mxu0 0
  %1188 = vmatprep.subr.bf16.mxu0 0
  %1189 = vmatpush2.bf16.msra.mxu0 0
  %1190 = vmatprep.mubr.bf16.mxu0 0
  %1191 = vmatmul.mubr.bf16.gmra.mxu0 %v965
  %v1192 = vpop.f32.mrf.mxu0
  %v1193 = vadd.f32 0.0, %v1192
  %v1194 = vpop.f32.mrf.mxu0
  %v1195 = vadd.f32 0.0, %v1194
  %v1196 = vpop.f32.mrf.mxu0
  %v1197 = vpop.f32.mrf.mxu0
  %1198 = vdwg.mxu0
  %1199 = vmatprep.subr.bf16.mxu0 %v1125
  %1200 = vmatpush1.bf16.msra.mxu0 %v1124
  %1201 = vmatprep.subr.bf16.mxu0 %v1121
  %1202 = vmatpush1.bf16.msra.mxu0 %v1120
  %1203 = vmatprep.subr.bf16.mxu0 %v1117
  %1204 = vmatpush1.bf16.msra.mxu0 %v1116
  %1205 = vmatprep.subr.bf16.mxu0 %v1113
  %1206 = vmatpush1.bf16.msra.mxu0 %v1112
  %1207 = vmatprep.subr.bf16.mxu0 %v1109
  %1208 = vmatpush1.bf16.msra.mxu0 %v1108
  %1209 = vmatprep.subr.bf16.mxu0 %v1105
  %1210 = vmatpush1.bf16.msra.mxu0 %v1104
  %1211 = vmatprep.subr.bf16.mxu0 %v1101
  %1212 = vmatpush1.bf16.msra.mxu0 %v1100
  %1213 = vmatprep.subr.bf16.mxu0 %v1097
  %1214 = vmatpush1.bf16.msra.mxu0 %v1096
  %1215 = vmatprep.subr.bf16.mxu0 0
  %1216 = vmatpush2.bf16.msra.mxu0 0
  %1217 = vmatprep.subr.bf16.mxu0 0
  %1218 = vmatpush2.bf16.msra.mxu0 0
  %1219 = vmatprep.subr.bf16.mxu0 0
  %1220 = vmatpush2.bf16.msra.mxu0 0
  %1221 = vmatprep.subr.bf16.mxu0 0
  %1222 = vmatpush2.bf16.msra.mxu0 0
  %1223 = vmatprep.subr.bf16.mxu0 0
  %1224 = vmatpush2.bf16.msra.mxu0 0
  %1225 = vmatprep.subr.bf16.mxu0 0
  %1226 = vmatpush2.bf16.msra.mxu0 0
  %1227 = vmatprep.subr.bf16.mxu0 0
  %1228 = vmatpush2.bf16.msra.mxu0 0
  %1229 = vmatprep.subr.bf16.mxu0 0
  %1230 = vmatpush2.bf16.msra.mxu0 0
  %1231 = vmatprep.mubr.bf16.mxu0 0
  %1232 = vmatmul.mubr.bf16.gmra.mxu0 %v965
  %v1233 = vpop.f32.mrf.mxu0
  %v1234 = vadd.f32 0.0, %v1233
  %v1235 = vpop.f32.mrf.mxu0
  %v1236 = vadd.f32 0.0, %v1235
  %v1237 = vpop.f32.mrf.mxu0
  %v1238 = vpop.f32.mrf.mxu0
  %1239 = vdwg.mxu0
  %v1240 = vadd.f32 %v961, %v1193
  %v1241 = vadd.f32 %v962, %v1195
  %v1242 = vadd.f32 %v963, %v1234
  %v1243 = vadd.f32 %v964, %v1236
  %v1244 = vxor.u32 %v1240, 2147483648
  %v1245 = vmul.f32 %v1244, 1.442695
  %v1246 = vpow.pop %v1245
  %v1247 = vadd.f32 %v1246, 1.0
  %v1248 = vrcp.pop %v1247
  %v1249 = vmul.f32 1.0, %v1248
  %v1250 = vxor.u32 %v1241, 2147483648
  %v1251 = vmul.f32 %v1250, 1.442695
  %v1252 = vpow.pop %v1251
  %v1253 = vadd.f32 %v1252, 1.0
  %v1254 = vrcp.pop %v1253
  %v1255 = vmul.f32 1.0, %v1254
  %v1256 = vtanh.pop %v1242
  %v1257 = vxor.u32 %v1243, 2147483648
  %v1258 = vmul.f32 %v1257, 1.442695
  %v1259 = vpow.pop %v1258
  %v1260 = vadd.f32 %v1259, 1.0
  %v1261 = vrcp.pop %v1260
  %v1262 = vmul.f32 1.0, %v1261
  %v1263 = vmul.f32 %v1255, %v959
  %v1264 = vmul.f32 %v1249, %v1256
  %v1265 = vadd.f32 %v1263, %v1264
  %v1266 = vtanh.pop %v1265
  %v1267 = vmul.f32 %v1262, %v1266
  %1268 = vst [vmem:[#allocation3] sm:$0xff] %v1265
  %1269 = vst [vmem:[#allocation2] sm:$0xff] %v1267
  %s1270 = scalar_lea.vmem %s2, 24
  %1271 = vst [vmem:[%s1270] sm:$0xff] %v1267
  %v1272 = vld [vmem:[#allocation2] sm:$0xff]
  %v1273 = vld [vmem:[#allocation3] sm:$0xff]
  %s1274 = scalar_lea.vmem %s0, 128
  %v1275 = vld [vmem:[%s1274] sm:$0xff]
  %v1276 = vld [vmem:[%s1274 + $0x8] sm:$0xff]
  %v1277 = vld [vmem:[%s1274 + $0x10] sm:$0xff]
  %v1278 = vld [vmem:[%s1274 + $0x18] sm:$0xff]
  %v1279 = vpack.c.bf16 %v1272, %v1272
  %v1280 = vld [vmem:[%s1] sm:$0xff]
  %v1281 = vld [vmem:[%s1 + $0x8] sm:$0xff]
  %v1282 = vld [vmem:[%s1 + $0x10] sm:$0xff]
  %v1283 = vld [vmem:[%s1 + $0x18] sm:$0xff]
  %v1284 = vld [vmem:[%s1 + $0x20] sm:$0xff]
  %v1285 = vld [vmem:[%s1 + $0x28] sm:$0xff]
  %v1286 = vld [vmem:[%s1 + $0x30] sm:$0xff]
  %v1287 = vld [vmem:[%s1 + $0x38] sm:$0xff]
  %v1288 = vld [vmem:[%s1 + $0x40] sm:$0xff]
  %v1289 = vld [vmem:[%s1 + $0x48] sm:$0xff]
  %v1290 = vld [vmem:[%s1 + $0x50] sm:$0xff]
  %v1291 = vld [vmem:[%s1 + $0x58] sm:$0xff]
  %v1292 = vld [vmem:[%s1 + $0x60] sm:$0xff]
  %v1293 = vld [vmem:[%s1 + $0x68] sm:$0xff]
  %v1294 = vld [vmem:[%s1 + $0x70] sm:$0xff]
  %v1295 = vld [vmem:[%s1 + $0x78] sm:$0xff]
  %v1296 = vld [vmem:[%s1 + $0x80] sm:$0xff]
  %v1297 = vld [vmem:[%s1 + $0x88] sm:$0xff]
  %v1298 = vld [vmem:[%s1 + $0x90] sm:$0xff]
  %v1299 = vld [vmem:[%s1 + $0x98] sm:$0xff]
  %v1300 = vld [vmem:[%s1 + $0xa0] sm:$0xff]
  %v1301 = vld [vmem:[%s1 + $0xa8] sm:$0xff]
  %v1302 = vld [vmem:[%s1 + $0xb0] sm:$0xff]
  %v1303 = vld [vmem:[%s1 + $0xb8] sm:$0xff]
  %v1304 = vld [vmem:[%s1 + $0xc0] sm:$0xff]
  %v1305 = vld [vmem:[%s1 + $0xc8] sm:$0xff]
  %v1306 = vld [vmem:[%s1 + $0xd0] sm:$0xff]
  %v1307 = vld [vmem:[%s1 + $0xd8] sm:$0xff]
  %v1308 = vld [vmem:[%s1 + $0xe0] sm:$0xff]
  %v1309 = vld [vmem:[%s1 + $0xe8] sm:$0xff]
  %v1310 = vld [vmem:[%s1 + $0xf0] sm:$0xff]
  %v1311 = vld [vmem:[%s1 + $0xf8] sm:$0xff]
  %v1344 = vunpack.c.l.b16 %v1280
  %v1345 = vunpack.c.h.b16 %v1280
  %v1346 = vunpack.c.l.b16 %v1281
  %v1347 = vunpack.c.h.b16 %v1281
  %v1348 = vunpack.c.l.b16 %v1282
  %v1349 = vunpack.c.h.b16 %v1282
  %v1350 = vunpack.c.l.b16 %v1283
  %v1351 = vunpack.c.h.b16 %v1283
  %v1352 = vunpack.c.l.b16 %v1284
  %v1353 = vunpack.c.h.b16 %v1284
  %v1354 = vunpack.c.l.b16 %v1285
  %v1355 = vunpack.c.h.b16 %v1285
  %v1356 = vunpack.c.l.b16 %v1286
  %v1357 = vunpack.c.h.b16 %v1286
  %v1358 = vunpack.c.l.b16 %v1287
  %v1359 = vunpack.c.h.b16 %v1287
  %v1360 = vunpack.c.l.b16 %v1288
  %v1361 = vunpack.c.h.b16 %v1288
  %v1362 = vunpack.c.l.b16 %v1289
  %v1363 = vunpack.c.h.b16 %v1289
  %v1364 = vunpack.c.l.b16 %v1290
  %v1365 = vunpack.c.h.b16 %v1290
  %v1366 = vunpack.c.l.b16 %v1291
  %v1367 = vunpack.c.h.b16 %v1291
  %v1368 = vunpack.c.l.b16 %v1292
  %v1369 = vunpack.c.h.b16 %v1292
  %v1370 = vunpack.c.l.b16 %v1293
  %v1371 = vunpack.c.h.b16 %v1293
  %v1372 = vunpack.c.l.b16 %v1294
  %v1373 = vunpack.c.h.b16 %v1294
  %v1374 = vunpack.c.l.b16 %v1295
  %v1375 = vunpack.c.h.b16 %v1295
  %v1376 = vunpack.c.l.b16 %v1296
  %v1377 = vunpack.c.h.b16 %v1296
  %v1378 = vunpack.c.l.b16 %v1297
  %v1379 = vunpack.c.h.b16 %v1297
  %v1380 = vunpack.c.l.b16 %v1298
  %v1381 = vunpack.c.h.b16 %v1298
  %v1382 = vunpack.c.l.b16 %v1299
  %v1383 = vunpack.c.h.b16 %v1299
  %v1384 = vunpack.c.l.b16 %v1300
  %v1385 = vunpack.c.h.b16 %v1300
  %v1386 = vunpack.c.l.b16 %v1301
  %v1387 = vunpack.c.h.b16 %v1301
  %v1388 = vunpack.c.l.b16 %v1302
  %v1389 = vunpack.c.h.b16 %v1302
  %v1390 = vunpack.c.l.b16 %v1303
  %v1391 = vunpack.c.h.b16 %v1303
  %v1392 = vunpack.c.l.b16 %v1304
  %v1393 = vunpack.c.h.b16 %v1304
  %v1394 = vunpack.c.l.b16 %v1305
  %v1395 = vunpack.c.h.b16 %v1305
  %v1396 = vunpack.c.l.b16 %v1306
  %v1397 = vunpack.c.h.b16 %v1306
  %v1398 = vunpack.c.l.b16 %v1307
  %v1399 = vunpack.c.h.b16 %v1307
  %v1400 = vunpack.c.l.b16 %v1308
  %v1401 = vunpack.c.h.b16 %v1308
  %v1402 = vunpack.c.l.b16 %v1309
  %v1403 = vunpack.c.h.b16 %v1309
  %v1404 = vunpack.c.l.b16 %v1310
  %v1405 = vunpack.c.h.b16 %v1310
  %v1406 = vunpack.c.l.b16 %v1311
  %v1407 = vunpack.c.h.b16 %v1311
  %v1408 = vpack.c.b16 %v1348, %v1344
  %v1409 = vpack.c.b16 %v1349, %v1345
  %v1410 = vpack.c.b16 %v1350, %v1346
  %v1411 = vpack.c.b16 %v1351, %v1347
  %v1412 = vpack.c.b16 %v1356, %v1352
  %v1413 = vpack.c.b16 %v1357, %v1353
  %v1414 = vpack.c.b16 %v1358, %v1354
  %v1415 = vpack.c.b16 %v1359, %v1355
  %v1416 = vpack.c.b16 %v1364, %v1360
  %v1417 = vpack.c.b16 %v1365, %v1361
  %v1418 = vpack.c.b16 %v1366, %v1362
  %v1419 = vpack.c.b16 %v1367, %v1363
  %v1420 = vpack.c.b16 %v1372, %v1368
  %v1421 = vpack.c.b16 %v1373, %v1369
  %v1422 = vpack.c.b16 %v1374, %v1370
  %v1423 = vpack.c.b16 %v1375, %v1371
  %v1424 = vpack.c.b16 %v1380, %v1376
  %v1425 = vpack.c.b16 %v1381, %v1377
  %v1426 = vpack.c.b16 %v1382, %v1378
  %v1427 = vpack.c.b16 %v1383, %v1379
  %v1428 = vpack.c.b16 %v1388, %v1384
  %v1429 = vpack.c.b16 %v1389, %v1385
  %v1430 = vpack.c.b16 %v1390, %v1386
  %v1431 = vpack.c.b16 %v1391, %v1387
  %v1432 = vpack.c.b16 %v1396, %v1392
  %v1433 = vpack.c.b16 %v1397, %v1393
  %v1434 = vpack.c.b16 %v1398, %v1394
  %v1435 = vpack.c.b16 %v1399, %v1395
  %v1436 = vpack.c.b16 %v1404, %v1400
  %v1437 = vpack.c.b16 %v1405, %v1401
  %v1438 = vpack.c.b16 %v1406, %v1402
  %v1439 = vpack.c.b16 %v1407, %v1403
  %1472 = vmatprep.subr.bf16.mxu0 %v1437
  %1473 = vmatpush1.bf16.msra.mxu0 %v1436
  %1474 = vmatprep.subr.bf16.mxu0 %v1433
  %1475 = vmatpush1.bf16.msra.mxu0 %v1432
  %1476 = vmatprep.subr.bf16.mxu0 %v1429
  %1477 = vmatpush1.bf16.msra.mxu0 %v1428
  %1478 = vmatprep.subr.bf16.mxu0 %v1425
  %1479 = vmatpush1.bf16.msra.mxu0 %v1424
  %1480 = vmatprep.subr.bf16.mxu0 %v1421
  %1481 = vmatpush1.bf16.msra.mxu0 %v1420
  %1482 = vmatprep.subr.bf16.mxu0 %v1417
  %1483 = vmatpush1.bf16.msra.mxu0 %v1416
  %1484 = vmatprep.subr.bf16.mxu0 %v1413
  %1485 = vmatpush1.bf16.msra.mxu0 %v1412
  %1486 = vmatprep.subr.bf16.mxu0 %v1409
  %1487 = vmatpush1.bf16.msra.mxu0 %v1408
  %1488 = vmatprep.subr.bf16.mxu0 0
  %1489 = vmatpush2.bf16.msra.mxu0 0
  %1490 = vmatprep.subr.bf16.mxu0 0
  %1491 = vmatpush2.bf16.msra.mxu0 0
  %1492 = vmatprep.subr.bf16.mxu0 0
  %1493 = vmatpush2.bf16.msra.mxu0 0
  %1494 = vmatprep.subr.bf16.mxu0 0
  %1495 = vmatpush2.bf16.msra.mxu0 0
  %1496 = vmatprep.subr.bf16.mxu0 0
  %1497 = vmatpush2.bf16.msra.mxu0 0
  %1498 = vmatprep.subr.bf16.mxu0 0
  %1499 = vmatpush2.bf16.msra.mxu0 0
  %1500 = vmatprep.subr.bf16.mxu0 0
  %1501 = vmatpush2.bf16.msra.mxu0 0
  %1502 = vmatprep.subr.bf16.mxu0 0
  %1503 = vmatpush2.bf16.msra.mxu0 0
  %1504 = vmatprep.mubr.bf16.mxu0 0
  %1505 = vmatmul.mubr.bf16.gmra.mxu0 %v1279
  %v1506 = vpop.f32.mrf.mxu0
  %v1507 = vadd.f32 0.0, %v1506
  %v1508 = vpop.f32.mrf.mxu0
  %v1509 = vadd.f32 0.0, %v1508
  %v1510 = vpop.f32.mrf.mxu0
  %v1511 = vpop.f32.mrf.mxu0
  %1512 = vdwg.mxu0
  %1513 = vmatprep.subr.bf16.mxu0 %v1439
  %1514 = vmatpush1.bf16.msra.mxu0 %v1438
  %1515 = vmatprep.subr.bf16.mxu0 %v1435
  %1516 = vmatpush1.bf16.msra.mxu0 %v1434
  %1517 = vmatprep.subr.bf16.mxu0 %v1431
  %1518 = vmatpush1.bf16.msra.mxu0 %v1430
  %1519 = vmatprep.subr.bf16.mxu0 %v1427
  %1520 = vmatpush1.bf16.msra.mxu0 %v1426
  %1521 = vmatprep.subr.bf16.mxu0 %v1423
  %1522 = vmatpush1.bf16.msra.mxu0 %v1422
  %1523 = vmatprep.subr.bf16.mxu0 %v1419
  %1524 = vmatpush1.bf16.msra.mxu0 %v1418
  %1525 = vmatprep.subr.bf16.mxu0 %v1415
  %1526 = vmatpush1.bf16.msra.mxu0 %v1414
  %1527 = vmatprep.subr.bf16.mxu0 %v1411
  %1528 = vmatpush1.bf16.msra.mxu0 %v1410
  %1529 = vmatprep.subr.bf16.mxu0 0
  %1530 = vmatpush2.bf16.msra.mxu0 0
  %1531 = vmatprep.subr.bf16.mxu0 0
  %1532 = vmatpush2.bf16.msra.mxu0 0
  %1533 = vmatprep.subr.bf16.mxu0 0
  %1534 = vmatpush2.bf16.msra.mxu0 0
  %1535 = vmatprep.subr.bf16.mxu0 0
  %1536 = vmatpush2.bf16.msra.mxu0 0
  %1537 = vmatprep.subr.bf16.mxu0 0
  %1538 = vmatpush2.bf16.msra.mxu0 0
  %1539 = vmatprep.subr.bf16.mxu0 0
  %1540 = vmatpush2.bf16.msra.mxu0 0
  %1541 = vmatprep.subr.bf16.mxu0 0
  %1542 = vmatpush2.bf16.msra.mxu0 0
  %1543 = vmatprep.subr.bf16.mxu0 0
  %1544 = vmatpush2.bf16.msra.mxu0 0
  %1545 = vmatprep.mubr.bf16.mxu0 0
  %1546 = vmatmul.mubr.bf16.gmra.mxu0 %v1279
  %v1547 = vpop.f32.mrf.mxu0
  %v1548 = vadd.f32 0.0, %v1547
  %v1549 = vpop.f32.mrf.mxu0
  %v1550 = vadd.f32 0.0, %v1549
  %v1551 = vpop.f32.mrf.mxu0
  %v1552 = vpop.f32.mrf.mxu0
  %1553 = vdwg.mxu0
  %v1554 = vadd.f32 %v1275, %v1507
  %v1555 = vadd.f32 %v1276, %v1509
  %v1556 = vadd.f32 %v1277, %v1548
  %v1557 = vadd.f32 %v1278, %v1550
  %v1558 = vxor.u32 %v1554, 2147483648
  %v1559 = vmul.f32 %v1558, 1.442695
  %v1560 = vpow.pop %v1559
  %v1561 = vadd.f32 %v1560, 1.0
  %v1562 = vrcp.pop %v1561
  %v1563 = vmul.f32 1.0, %v1562
  %v1564 = vxor.u32 %v1555, 2147483648
  %v1565 = vmul.f32 %v1564, 1.442695
  %v1566 = vpow.pop %v1565
  %v1567 = vadd.f32 %v1566, 1.0
  %v1568 = vrcp.pop %v1567
  %v1569 = vmul.f32 1.0, %v1568
  %v1570 = vtanh.pop %v1556
  %v1571 = vxor.u32 %v1557, 2147483648
  %v1572 = vmul.f32 %v1571, 1.442695
  %v1573 = vpow.pop %v1572
  %v1574 = vadd.f32 %v1573, 1.0
  %v1575 = vrcp.pop %v1574
  %v1576 = vmul.f32 1.0, %v1575
  %v1577 = vmul.f32 %v1569, %v1273
  %v1578 = vmul.f32 %v1563, %v1570
  %v1579 = vadd.f32 %v1577, %v1578
  %v1580 = vtanh.pop %v1579
  %v1581 = vmul.f32 %v1576, %v1580
  %1582 = vst [vmem:[#allocation3] sm:$0xff] %v1579
  %1583 = vst [vmem:[#allocation2] sm:$0xff] %v1581
  %s1584 = scalar_lea.vmem %s2, 32
  %1585 = vst [vmem:[%s1584] sm:$0xff] %v1581
  %v1586 = vld [vmem:[#allocation2] sm:$0xff]
  %v1587 = vld [vmem:[#allocation3] sm:$0xff]
  %s1588 = scalar_lea.vmem %s0, 160
  %v1589 = vld [vmem:[%s1588] sm:$0xff]
  %v1590 = vld [vmem:[%s1588 + $0x8] sm:$0xff]
  %v1591 = vld [vmem:[%s1588 + $0x10] sm:$0xff]
  %v1592 = vld [vmem:[%s1588 + $0x18] sm:$0xff]
  %v1593 = vpack.c.bf16 %v1586, %v1586
  %v1594 = vld [vmem:[%s1] sm:$0xff]
  %v1595 = vld [vmem:[%s1 + $0x8] sm:$0xff]
  %v1596 = vld [vmem:[%s1 + $0x10] sm:$0xff]
  %v1597 = vld [vmem:[%s1 + $0x18] sm:$0xff]
  %v1598 = vld [vmem:[%s1 + $0x20] sm:$0xff]
  %v1599 = vld [vmem:[%s1 + $0x28] sm:$0xff]
  %v1600 = vld [vmem:[%s1 + $0x30] sm:$0xff]
  %v1601 = vld [vmem:[%s1 + $0x38] sm:$0xff]
  %v1602 = vld [vmem:[%s1 + $0x40] sm:$0xff]
  %v1603 = vld [vmem:[%s1 + $0x48] sm:$0xff]
  %v1604 = vld [vmem:[%s1 + $0x50] sm:$0xff]
  %v1605 = vld [vmem:[%s1 + $0x58] sm:$0xff]
  %v1606 = vld [vmem:[%s1 + $0x60] sm:$0xff]
  %v1607 = vld [vmem:[%s1 + $0x68] sm:$0xff]
  %v1608 = vld [vmem:[%s1 + $0x70] sm:$0xff]
  %v1609 = vld [vmem:[%s1 + $0x78] sm:$0xff]
  %v1610 = vld [vmem:[%s1 + $0x80] sm:$0xff]
  %v1611 = vld [vmem:[%s1 + $0x88] sm:$0xff]
  %v1612 = vld [vmem:[%s1 + $0x90] sm:$0xff]
  %v1613 = vld [vmem:[%s1 + $0x98] sm:$0xff]
  %v1614 = vld [vmem:[%s1 + $0xa0] sm:$0xff]
  %v1615 = vld [vmem:[%s1 + $0xa8] sm:$0xff]
  %v1616 = vld [vmem:[%s1 + $0xb0] sm:$0xff]
  %v1617 = vld [vmem:[%s1 + $0xb8] sm:$0xff]
  %v1618 = vld [vmem:[%s1 + $0xc0] sm:$0xff]
  %v1619 = vld [vmem:[%s1 + $0xc8] sm:$0xff]
  %v1620 = vld [vmem:[%s1 + $0xd0] sm:$0xff]
  %v1621 = vld [vmem:[%s1 + $0xd8] sm:$0xff]
  %v1622 = vld [vmem:[%s1 + $0xe0] sm:$0xff]
  %v1623 = vld [vmem:[%s1 + $0xe8] sm:$0xff]
  %v1624 = vld [vmem:[%s1 + $0xf0] sm:$0xff]
  %v1625 = vld [vmem:[%s1 + $0xf8] sm:$0xff]
  %v1658 = vunpack.c.l.b16 %v1594
  %v1659 = vunpack.c.h.b16 %v1594
  %v1660 = vunpack.c.l.b16 %v1595
  %v1661 = vunpack.c.h.b16 %v1595
  %v1662 = vunpack.c.l.b16 %v1596
  %v1663 = vunpack.c.h.b16 %v1596
  %v1664 = vunpack.c.l.b16 %v1597
  %v1665 = vunpack.c.h.b16 %v1597
  %v1666 = vunpack.c.l.b16 %v1598
  %v1667 = vunpack.c.h.b16 %v1598
  %v1668 = vunpack.c.l.b16 %v1599
  %v1669 = vunpack.c.h.b16 %v1599
  %v1670 = vunpack.c.l.b16 %v1600
  %v1671 = vunpack.c.h.b16 %v1600
  %v1672 = vunpack.c.l.b16 %v1601
  %v1673 = vunpack.c.h.b16 %v1601
  %v1674 = vunpack.c.l.b16 %v1602
  %v1675 = vunpack.c.h.b16 %v1602
  %v1676 = vunpack.c.l.b16 %v1603
  %v1677 = vunpack.c.h.b16 %v1603
  %v1678 = vunpack.c.l.b16 %v1604
  %v1679 = vunpack.c.h.b16 %v1604
  %v1680 = vunpack.c.l.b16 %v1605
  %v1681 = vunpack.c.h.b16 %v1605
  %v1682 = vunpack.c.l.b16 %v1606
  %v1683 = vunpack.c.h.b16 %v1606
  %v1684 = vunpack.c.l.b16 %v1607
  %v1685 = vunpack.c.h.b16 %v1607
  %v1686 = vunpack.c.l.b16 %v1608
  %v1687 = vunpack.c.h.b16 %v1608
  %v1688 = vunpack.c.l.b16 %v1609
  %v1689 = vunpack.c.h.b16 %v1609
  %v1690 = vunpack.c.l.b16 %v1610
  %v1691 = vunpack.c.h.b16 %v1610
  %v1692 = vunpack.c.l.b16 %v1611
  %v1693 = vunpack.c.h.b16 %v1611
  %v1694 = vunpack.c.l.b16 %v1612
  %v1695 = vunpack.c.h.b16 %v1612
  %v1696 = vunpack.c.l.b16 %v1613
  %v1697 = vunpack.c.h.b16 %v1613
  %v1698 = vunpack.c.l.b16 %v1614
  %v1699 = vunpack.c.h.b16 %v1614
  %v1700 = vunpack.c.l.b16 %v1615
  %v1701 = vunpack.c.h.b16 %v1615
  %v1702 = vunpack.c.l.b16 %v1616
  %v1703 = vunpack.c.h.b16 %v1616
  %v1704 = vunpack.c.l.b16 %v1617
  %v1705 = vunpack.c.h.b16 %v1617
  %v1706 = vunpack.c.l.b16 %v1618
  %v1707 = vunpack.c.h.b16 %v1618
  %v1708 = vunpack.c.l.b16 %v1619
  %v1709 = vunpack.c.h.b16 %v1619
  %v1710 = vunpack.c.l.b16 %v1620
  %v1711 = vunpack.c.h.b16 %v1620
  %v1712 = vunpack.c.l.b16 %v1621
  %v1713 = vunpack.c.h.b16 %v1621
  %v1714 = vunpack.c.l.b16 %v1622
  %v1715 = vunpack.c.h.b16 %v1622
  %v1716 = vunpack.c.l.b16 %v1623
  %v1717 = vunpack.c.h.b16 %v1623
  %v1718 = vunpack.c.l.b16 %v1624
  %v1719 = vunpack.c.h.b16 %v1624
  %v1720 = vunpack.c.l.b16 %v1625
  %v1721 = vunpack.c.h.b16 %v1625
  %v1722 = vpack.c.b16 %v1662, %v1658
  %v1723 = vpack.c.b16 %v1663, %v1659
  %v1724 = vpack.c.b16 %v1664, %v1660
  %v1725 = vpack.c.b16 %v1665, %v1661
  %v1726 = vpack.c.b16 %v1670, %v1666
  %v1727 = vpack.c.b16 %v1671, %v1667
  %v1728 = vpack.c.b16 %v1672, %v1668
  %v1729 = vpack.c.b16 %v1673, %v1669
  %v1730 = vpack.c.b16 %v1678, %v1674
  %v1731 = vpack.c.b16 %v1679, %v1675
  %v1732 = vpack.c.b16 %v1680, %v1676
  %v1733 = vpack.c.b16 %v1681, %v1677
  %v1734 = vpack.c.b16 %v1686, %v1682
  %v1735 = vpack.c.b16 %v1687, %v1683
  %v1736 = vpack.c.b16 %v1688, %v1684
  %v1737 = vpack.c.b16 %v1689, %v1685
  %v1738 = vpack.c.b16 %v1694, %v1690
  %v1739 = vpack.c.b16 %v1695, %v1691
  %v1740 = vpack.c.b16 %v1696, %v1692
  %v1741 = vpack.c.b16 %v1697, %v1693
  %v1742 = vpack.c.b16 %v1702, %v1698
  %v1743 = vpack.c.b16 %v1703, %v1699
  %v1744 = vpack.c.b16 %v1704, %v1700
  %v1745 = vpack.c.b16 %v1705, %v1701
  %v1746 = vpack.c.b16 %v1710, %v1706
  %v1747 = vpack.c.b16 %v1711, %v1707
  %v1748 = vpack.c.b16 %v1712, %v1708
  %v1749 = vpack.c.b16 %v1713, %v1709
  %v1750 = vpack.c.b16 %v1718, %v1714
  %v1751 = vpack.c.b16 %v1719, %v1715
  %v1752 = vpack.c.b16 %v1720, %v1716
  %v1753 = vpack.c.b16 %v1721, %v1717
  %1786 = vmatprep.subr.bf16.mxu0 %v1751
  %1787 = vmatpush1.bf16.msra.mxu0 %v1750
  %1788 = vmatprep.subr.bf16.mxu0 %v1747
  %1789 = vmatpush1.bf16.msra.mxu0 %v1746
  %1790 = vmatprep.subr.bf16.mxu0 %v1743
  %1791 = vmatpush1.bf16.msra.mxu0 %v1742
  %1792 = vmatprep.subr.bf16.mxu0 %v1739
  %1793 = vmatpush1.bf16.msra.mxu0 %v1738
  %1794 = vmatprep.subr.bf16.mxu0 %v1735
  %1795 = vmatpush1.bf16.msra.mxu0 %v1734
  %1796 = vmatprep.subr.bf16.mxu0 %v1731
  %1797 = vmatpush1.bf16.msra.mxu0 %v1730
  %1798 = vmatprep.subr.bf16.mxu0 %v1727
  %1799 = vmatpush1.bf16.msra.mxu0 %v1726
  %1800 = vmatprep.subr.bf16.mxu0 %v1723
  %1801 = vmatpush1.bf16.msra.mxu0 %v1722
  %1802 = vmatprep.subr.bf16.mxu0 0
  %1803 = vmatpush2.bf16.msra.mxu0 0
  %1804 = vmatprep.subr.bf16.mxu0 0
  %1805 = vmatpush2.bf16.msra.mxu0 0
  %1806 = vmatprep.subr.bf16.mxu0 0
  %1807 = vmatpush2.bf16.msra.mxu0 0
  %1808 = vmatprep.subr.bf16.mxu0 0
  %1809 = vmatpush2.bf16.msra.mxu0 0
  %1810 = vmatprep.subr.bf16.mxu0 0
  %1811 = vmatpush2.bf16.msra.mxu0 0
  %1812 = vmatprep.subr.bf16.mxu0 0
  %1813 = vmatpush2.bf16.msra.mxu0 0
  %1814 = vmatprep.subr.bf16.mxu0 0
  %1815 = vmatpush2.bf16.msra.mxu0 0
  %1816 = vmatprep.subr.bf16.mxu0 0
  %1817 = vmatpush2.bf16.msra.mxu0 0
  %1818 = vmatprep.mubr.bf16.mxu0 0
  %1819 = vmatmul.mubr.bf16.gmra.mxu0 %v1593
  %v1820 = vpop.f32.mrf.mxu0
  %v1821 = vadd.f32 0.0, %v1820
  %v1822 = vpop.f32.mrf.mxu0
  %v1823 = vadd.f32 0.0, %v1822
  %v1824 = vpop.f32.mrf.mxu0
  %v1825 = vpop.f32.mrf.mxu0
  %1826 = vdwg.mxu0
  %1827 = vmatprep.subr.bf16.mxu0 %v1753
  %1828 = vmatpush1.bf16.msra.mxu0 %v1752
  %1829 = vmatprep.subr.bf16.mxu0 %v1749
  %1830 = vmatpush1.bf16.msra.mxu0 %v1748
  %1831 = vmatprep.subr.bf16.mxu0 %v1745
  %1832 = vmatpush1.bf16.msra.mxu0 %v1744
  %1833 = vmatprep.subr.bf16.mxu0 %v1741
  %1834 = vmatpush1.bf16.msra.mxu0 %v1740
  %1835 = vmatprep.subr.bf16.mxu0 %v1737
  %1836 = vmatpush1.bf16.msra.mxu0 %v1736
  %1837 = vmatprep.subr.bf16.mxu0 %v1733
  %1838 = vmatpush1.bf16.msra.mxu0 %v1732
  %1839 = vmatprep.subr.bf16.mxu0 %v1729
  %1840 = vmatpush1.bf16.msra.mxu0 %v1728
  %1841 = vmatprep.subr.bf16.mxu0 %v1725
  %1842 = vmatpush1.bf16.msra.mxu0 %v1724
  %1843 = vmatprep.subr.bf16.mxu0 0
  %1844 = vmatpush2.bf16.msra.mxu0 0
  %1845 = vmatprep.subr.bf16.mxu0 0
  %1846 = vmatpush2.bf16.msra.mxu0 0
  %1847 = vmatprep.subr.bf16.mxu0 0
  %1848 = vmatpush2.bf16.msra.mxu0 0
  %1849 = vmatprep.subr.bf16.mxu0 0
  %1850 = vmatpush2.bf16.msra.mxu0 0
  %1851 = vmatprep.subr.bf16.mxu0 0
  %1852 = vmatpush2.bf16.msra.mxu0 0
  %1853 = vmatprep.subr.bf16.mxu0 0
  %1854 = vmatpush2.bf16.msra.mxu0 0
  %1855 = vmatprep.subr.bf16.mxu0 0
  %1856 = vmatpush2.bf16.msra.mxu0 0
  %1857 = vmatprep.subr.bf16.mxu0 0
  %1858 = vmatpush2.bf16.msra.mxu0 0
  %1859 = vmatprep.mubr.bf16.mxu0 0
  %1860 = vmatmul.mubr.bf16.gmra.mxu0 %v1593
  %v1861 = vpop.f32.mrf.mxu0
  %v1862 = vadd.f32 0.0, %v1861
  %v1863 = vpop.f32.mrf.mxu0
  %v1864 = vadd.f32 0.0, %v1863
  %v1865 = vpop.f32.mrf.mxu0
  %v1866 = vpop.f32.mrf.mxu0
  %1867 = vdwg.mxu0
  %v1868 = vadd.f32 %v1589, %v1821
  %v1869 = vadd.f32 %v1590, %v1823
  %v1870 = vadd.f32 %v1591, %v1862
  %v1871 = vadd.f32 %v1592, %v1864
  %v1872 = vxor.u32 %v1868, 2147483648
  %v1873 = vmul.f32 %v1872, 1.442695
  %v1874 = vpow.pop %v1873
  %v1875 = vadd.f32 %v1874, 1.0
  %v1876 = vrcp.pop %v1875
  %v1877 = vmul.f32 1.0, %v1876
  %v1878 = vxor.u32 %v1869, 2147483648
  %v1879 = vmul.f32 %v1878, 1.442695
  %v1880 = vpow.pop %v1879
  %v1881 = vadd.f32 %v1880, 1.0
  %v1882 = vrcp.pop %v1881
  %v1883 = vmul.f32 1.0, %v1882
  %v1884 = vtanh.pop %v1870
  %v1885 = vxor.u32 %v1871, 2147483648
  %v1886 = vmul.f32 %v1885, 1.442695
  %v1887 = vpow.pop %v1886
  %v1888 = vadd.f32 %v1887, 1.0
  %v1889 = vrcp.pop %v1888
  %v1890 = vmul.f32 1.0, %v1889
  %v1891 = vmul.f32 %v1883, %v1587
  %v1892 = vmul.f32 %v1877, %v1884
  %v1893 = vadd.f32 %v1891, %v1892
  %v1894 = vtanh.pop %v1893
  %v1895 = vmul.f32 %v1890, %v1894
  %1896 = vst [vmem:[#allocation3] sm:$0xff] %v1893
  %1897 = vst [vmem:[#allocation2] sm:$0xff] %v1895
  %s1898 = scalar_lea.vmem %s2, 40
  %1899 = vst [vmem:[%s1898] sm:$0xff] %v1895
  %v1900 = vld [vmem:[#allocation2] sm:$0xff]
  %v1901 = vld [vmem:[#allocation3] sm:$0xff]
  %s1902 = scalar_lea.vmem %s0, 192
  %v1903 = vld [vmem:[%s1902] sm:$0xff]
  %v1904 = vld [vmem:[%s1902 + $0x8] sm:$0xff]
  %v1905 = vld [vmem:[%s1902 + $0x10] sm:$0xff]
  %v1906 = vld [vmem:[%s1902 + $0x18] sm:$0xff]
  %v1907 = vpack.c.bf16 %v1900, %v1900
  %v1908 = vld [vmem:[%s1] sm:$0xff]
  %v1909 = vld [vmem:[%s1 + $0x8] sm:$0xff]
  %v1910 = vld [vmem:[%s1 + $0x10] sm:$0xff]
  %v1911 = vld [vmem:[%s1 + $0x18] sm:$0xff]
  %v1912 = vld [vmem:[%s1 + $0x20] sm:$0xff]
  %v1913 = vld [vmem:[%s1 + $0x28] sm:$0xff]
  %v1914 = vld [vmem:[%s1 + $0x30] sm:$0xff]
  %v1915 = vld [vmem:[%s1 + $0x38] sm:$0xff]
  %v1916 = vld [vmem:[%s1 + $0x40] sm:$0xff]
  %v1917 = vld [vmem:[%s1 + $0x48] sm:$0xff]
  %v1918 = vld [vmem:[%s1 + $0x50] sm:$0xff]
  %v1919 = vld [vmem:[%s1 + $0x58] sm:$0xff]
  %v1920 = vld [vmem:[%s1 + $0x60] sm:$0xff]
  %v1921 = vld [vmem:[%s1 + $0x68] sm:$0xff]
  %v1922 = vld [vmem:[%s1 + $0x70] sm:$0xff]
  %v1923 = vld [vmem:[%s1 + $0x78] sm:$0xff]
  %v1924 = vld [vmem:[%s1 + $0x80] sm:$0xff]
  %v1925 = vld [vmem:[%s1 + $0x88] sm:$0xff]
  %v1926 = vld [vmem:[%s1 + $0x90] sm:$0xff]
  %v1927 = vld [vmem:[%s1 + $0x98] sm:$0xff]
  %v1928 = vld [vmem:[%s1 + $0xa0] sm:$0xff]
  %v1929 = vld [vmem:[%s1 + $0xa8] sm:$0xff]
  %v1930 = vld [vmem:[%s1 + $0xb0] sm:$0xff]
  %v1931 = vld [vmem:[%s1 + $0xb8] sm:$0xff]
  %v1932 = vld [vmem:[%s1 + $0xc0] sm:$0xff]
  %v1933 = vld [vmem:[%s1 + $0xc8] sm:$0xff]
  %v1934 = vld [vmem:[%s1 + $0xd0] sm:$0xff]
  %v1935 = vld [vmem:[%s1 + $0xd8] sm:$0xff]
  %v1936 = vld [vmem:[%s1 + $0xe0] sm:$0xff]
  %v1937 = vld [vmem:[%s1 + $0xe8] sm:$0xff]
  %v1938 = vld [vmem:[%s1 + $0xf0] sm:$0xff]
  %v1939 = vld [vmem:[%s1 + $0xf8] sm:$0xff]
  %v1972 = vunpack.c.l.b16 %v1908
  %v1973 = vunpack.c.h.b16 %v1908
  %v1974 = vunpack.c.l.b16 %v1909
  %v1975 = vunpack.c.h.b16 %v1909
  %v1976 = vunpack.c.l.b16 %v1910
  %v1977 = vunpack.c.h.b16 %v1910
  %v1978 = vunpack.c.l.b16 %v1911
  %v1979 = vunpack.c.h.b16 %v1911
  %v1980 = vunpack.c.l.b16 %v1912
  %v1981 = vunpack.c.h.b16 %v1912
  %v1982 = vunpack.c.l.b16 %v1913
  %v1983 = vunpack.c.h.b16 %v1913
  %v1984 = vunpack.c.l.b16 %v1914
  %v1985 = vunpack.c.h.b16 %v1914
  %v1986 = vunpack.c.l.b16 %v1915
  %v1987 = vunpack.c.h.b16 %v1915
  %v1988 = vunpack.c.l.b16 %v1916
  %v1989 = vunpack.c.h.b16 %v1916
  %v1990 = vunpack.c.l.b16 %v1917
  %v1991 = vunpack.c.h.b16 %v1917
  %v1992 = vunpack.c.l.b16 %v1918
  %v1993 = vunpack.c.h.b16 %v1918
  %v1994 = vunpack.c.l.b16 %v1919
  %v1995 = vunpack.c.h.b16 %v1919
  %v1996 = vunpack.c.l.b16 %v1920
  %v1997 = vunpack.c.h.b16 %v1920
  %v1998 = vunpack.c.l.b16 %v1921
  %v1999 = vunpack.c.h.b16 %v1921
  %v2000 = vunpack.c.l.b16 %v1922
  %v2001 = vunpack.c.h.b16 %v1922
  %v2002 = vunpack.c.l.b16 %v1923
  %v2003 = vunpack.c.h.b16 %v1923
  %v2004 = vunpack.c.l.b16 %v1924
  %v2005 = vunpack.c.h.b16 %v1924
  %v2006 = vunpack.c.l.b16 %v1925
  %v2007 = vunpack.c.h.b16 %v1925
  %v2008 = vunpack.c.l.b16 %v1926
  %v2009 = vunpack.c.h.b16 %v1926
  %v2010 = vunpack.c.l.b16 %v1927
  %v2011 = vunpack.c.h.b16 %v1927
  %v2012 = vunpack.c.l.b16 %v1928
  %v2013 = vunpack.c.h.b16 %v1928
  %v2014 = vunpack.c.l.b16 %v1929
  %v2015 = vunpack.c.h.b16 %v1929
  %v2016 = vunpack.c.l.b16 %v1930
  %v2017 = vunpack.c.h.b16 %v1930
  %v2018 = vunpack.c.l.b16 %v1931
  %v2019 = vunpack.c.h.b16 %v1931
  %v2020 = vunpack.c.l.b16 %v1932
  %v2021 = vunpack.c.h.b16 %v1932
  %v2022 = vunpack.c.l.b16 %v1933
  %v2023 = vunpack.c.h.b16 %v1933
  %v2024 = vunpack.c.l.b16 %v1934
  %v2025 = vunpack.c.h.b16 %v1934
  %v2026 = vunpack.c.l.b16 %v1935
  %v2027 = vunpack.c.h.b16 %v1935
  %v2028 = vunpack.c.l.b16 %v1936
  %v2029 = vunpack.c.h.b16 %v1936
  %v2030 = vunpack.c.l.b16 %v1937
  %v2031 = vunpack.c.h.b16 %v1937
  %v2032 = vunpack.c.l.b16 %v1938
  %v2033 = vunpack.c.h.b16 %v1938
  %v2034 = vunpack.c.l.b16 %v1939
  %v2035 = vunpack.c.h.b16 %v1939
  %v2036 = vpack.c.b16 %v1976, %v1972
  %v2037 = vpack.c.b16 %v1977, %v1973
  %v2038 = vpack.c.b16 %v1978, %v1974
  %v2039 = vpack.c.b16 %v1979, %v1975
  %v2040 = vpack.c.b16 %v1984, %v1980
  %v2041 = vpack.c.b16 %v1985, %v1981
  %v2042 = vpack.c.b16 %v1986, %v1982
  %v2043 = vpack.c.b16 %v1987, %v1983
  %v2044 = vpack.c.b16 %v1992, %v1988
  %v2045 = vpack.c.b16 %v1993, %v1989
  %v2046 = vpack.c.b16 %v1994, %v1990
  %v2047 = vpack.c.b16 %v1995, %v1991
  %v2048 = vpack.c.b16 %v2000, %v1996
  %v2049 = vpack.c.b16 %v2001, %v1997
  %v2050 = vpack.c.b16 %v2002, %v1998
  %v2051 = vpack.c.b16 %v2003, %v1999
  %v2052 = vpack.c.b16 %v2008, %v2004
  %v2053 = vpack.c.b16 %v2009, %v2005
  %v2054 = vpack.c.b16 %v2010, %v2006
  %v2055 = vpack.c.b16 %v2011, %v2007
  %v2056 = vpack.c.b16 %v2016, %v2012
  %v2057 = vpack.c.b16 %v2017, %v2013
  %v2058 = vpack.c.b16 %v2018, %v2014
  %v2059 = vpack.c.b16 %v2019, %v2015
  %v2060 = vpack.c.b16 %v2024, %v2020
  %v2061 = vpack.c.b16 %v2025, %v2021
  %v2062 = vpack.c.b16 %v2026, %v2022
  %v2063 = vpack.c.b16 %v2027, %v2023
  %v2064 = vpack.c.b16 %v2032, %v2028
  %v2065 = vpack.c.b16 %v2033, %v2029
  %v2066 = vpack.c.b16 %v2034, %v2030
  %v2067 = vpack.c.b16 %v2035, %v2031
  %2100 = vmatprep.subr.bf16.mxu0 %v2065
  %2101 = vmatpush1.bf16.msra.mxu0 %v2064
  %2102 = vmatprep.subr.bf16.mxu0 %v2061
  %2103 = vmatpush1.bf16.msra.mxu0 %v2060
  %2104 = vmatprep.subr.bf16.mxu0 %v2057
  %2105 = vmatpush1.bf16.msra.mxu0 %v2056
  %2106 = vmatprep.subr.bf16.mxu0 %v2053
  %2107 = vmatpush1.bf16.msra.mxu0 %v2052
  %2108 = vmatprep.subr.bf16.mxu0 %v2049
  %2109 = vmatpush1.bf16.msra.mxu0 %v2048
  %2110 = vmatprep.subr.bf16.mxu0 %v2045
  %2111 = vmatpush1.bf16.msra.mxu0 %v2044
  %2112 = vmatprep.subr.bf16.mxu0 %v2041
  %2113 = vmatpush1.bf16.msra.mxu0 %v2040
  %2114 = vmatprep.subr.bf16.mxu0 %v2037
  %2115 = vmatpush1.bf16.msra.mxu0 %v2036
  %2116 = vmatprep.subr.bf16.mxu0 0
  %2117 = vmatpush2.bf16.msra.mxu0 0
  %2118 = vmatprep.subr.bf16.mxu0 0
  %2119 = vmatpush2.bf16.msra.mxu0 0
  %2120 = vmatprep.subr.bf16.mxu0 0
  %2121 = vmatpush2.bf16.msra.mxu0 0
  %2122 = vmatprep.subr.bf16.mxu0 0
  %2123 = vmatpush2.bf16.msra.mxu0 0
  %2124 = vmatprep.subr.bf16.mxu0 0
  %2125 = vmatpush2.bf16.msra.mxu0 0
  %2126 = vmatprep.subr.bf16.mxu0 0
  %2127 = vmatpush2.bf16.msra.mxu0 0
  %2128 = vmatprep.subr.bf16.mxu0 0
  %2129 = vmatpush2.bf16.msra.mxu0 0
  %2130 = vmatprep.subr.bf16.mxu0 0
  %2131 = vmatpush2.bf16.msra.mxu0 0
  %2132 = vmatprep.mubr.bf16.mxu0 0
  %2133 = vmatmul.mubr.bf16.gmra.mxu0 %v1907
  %v2134 = vpop.f32.mrf.mxu0
  %v2135 = vadd.f32 0.0, %v2134
  %v2136 = vpop.f32.mrf.mxu0
  %v2137 = vadd.f32 0.0, %v2136
  %v2138 = vpop.f32.mrf.mxu0
  %v2139 = vpop.f32.mrf.mxu0
  %2140 = vdwg.mxu0
  %2141 = vmatprep.subr.bf16.mxu0 %v2067
  %2142 = vmatpush1.bf16.msra.mxu0 %v2066
  %2143 = vmatprep.subr.bf16.mxu0 %v2063
  %2144 = vmatpush1.bf16.msra.mxu0 %v2062
  %2145 = vmatprep.subr.bf16.mxu0 %v2059
  %2146 = vmatpush1.bf16.msra.mxu0 %v2058
  %2147 = vmatprep.subr.bf16.mxu0 %v2055
  %2148 = vmatpush1.bf16.msra.mxu0 %v2054
  %2149 = vmatprep.subr.bf16.mxu0 %v2051
  %2150 = vmatpush1.bf16.msra.mxu0 %v2050
  %2151 = vmatprep.subr.bf16.mxu0 %v2047
  %2152 = vmatpush1.bf16.msra.mxu0 %v2046
  %2153 = vmatprep.subr.bf16.mxu0 %v2043
  %2154 = vmatpush1.bf16.msra.mxu0 %v2042
  %2155 = vmatprep.subr.bf16.mxu0 %v2039
  %2156 = vmatpush1.bf16.msra.mxu0 %v2038
  %2157 = vmatprep.subr.bf16.mxu0 0
  %2158 = vmatpush2.bf16.msra.mxu0 0
  %2159 = vmatprep.subr.bf16.mxu0 0
  %2160 = vmatpush2.bf16.msra.mxu0 0
  %2161 = vmatprep.subr.bf16.mxu0 0
  %2162 = vmatpush2.bf16.msra.mxu0 0
  %2163 = vmatprep.subr.bf16.mxu0 0
  %2164 = vmatpush2.bf16.msra.mxu0 0
  %2165 = vmatprep.subr.bf16.mxu0 0
  %2166 = vmatpush2.bf16.msra.mxu0 0
  %2167 = vmatprep.subr.bf16.mxu0 0
  %2168 = vmatpush2.bf16.msra.mxu0 0
  %2169 = vmatprep.subr.bf16.mxu0 0
  %2170 = vmatpush2.bf16.msra.mxu0 0
  %2171 = vmatprep.subr.bf16.mxu0 0
  %2172 = vmatpush2.bf16.msra.mxu0 0
  %2173 = vmatprep.mubr.bf16.mxu0 0
  %2174 = vmatmul.mubr.bf16.gmra.mxu0 %v1907
  %v2175 = vpop.f32.mrf.mxu0
  %v2176 = vadd.f32 0.0, %v2175
  %v2177 = vpop.f32.mrf.mxu0
  %v2178 = vadd.f32 0.0, %v2177
  %v2179 = vpop.f32.mrf.mxu0
  %v2180 = vpop.f32.mrf.mxu0
  %2181 = vdwg.mxu0
  %v2182 = vadd.f32 %v1903, %v2135
  %v2183 = vadd.f32 %v1904, %v2137
  %v2184 = vadd.f32 %v1905, %v2176
  %v2185 = vadd.f32 %v1906, %v2178
  %v2186 = vxor.u32 %v2182, 2147483648
  %v2187 = vmul.f32 %v2186, 1.442695
  %v2188 = vpow.pop %v2187
  %v2189 = vadd.f32 %v2188, 1.0
  %v2190 = vrcp.pop %v2189
  %v2191 = vmul.f32 1.0, %v2190
  %v2192 = vxor.u32 %v2183, 2147483648
  %v2193 = vmul.f32 %v2192, 1.442695
  %v2194 = vpow.pop %v2193
  %v2195 = vadd.f32 %v2194, 1.0
  %v2196 = vrcp.pop %v2195
  %v2197 = vmul.f32 1.0, %v2196
  %v2198 = vtanh.pop %v2184
  %v2199 = vxor.u32 %v2185, 2147483648
  %v2200 = vmul.f32 %v2199, 1.442695
  %v2201 = vpow.pop %v2200
  %v2202 = vadd.f32 %v2201, 1.0
  %v2203 = vrcp.pop %v2202
  %v2204 = vmul.f32 1.0, %v2203
  %v2205 = vmul.f32 %v2197, %v1901
  %v2206 = vmul.f32 %v2191, %v2198
  %v2207 = vadd.f32 %v2205, %v2206
  %v2208 = vtanh.pop %v2207
  %v2209 = vmul.f32 %v2204, %v2208
  %2210 = vst [vmem:[#allocation3] sm:$0xff] %v2207
  %2211 = vst [vmem:[#allocation2] sm:$0xff] %v2209
  %s2212 = scalar_lea.vmem %s2, 48
  %2213 = vst [vmem:[%s2212] sm:$0xff] %v2209
  %v2214 = vld [vmem:[#allocation2] sm:$0xff]
  %v2215 = vld [vmem:[#allocation3] sm:$0xff]
  %s2216 = scalar_lea.vmem %s0, 224
  %v2217 = vld [vmem:[%s2216] sm:$0xff]
  %v2218 = vld [vmem:[%s2216 + $0x8] sm:$0xff]
  %v2219 = vld [vmem:[%s2216 + $0x10] sm:$0xff]
  %v2220 = vld [vmem:[%s2216 + $0x18] sm:$0xff]
  %v2221 = vpack.c.bf16 %v2214, %v2214
  %v2222 = vld [vmem:[%s1] sm:$0xff]
  %v2223 = vld [vmem:[%s1 + $0x8] sm:$0xff]
  %v2224 = vld [vmem:[%s1 + $0x10] sm:$0xff]
  %v2225 = vld [vmem:[%s1 + $0x18] sm:$0xff]
  %v2226 = vld [vmem:[%s1 + $0x20] sm:$0xff]
  %v2227 = vld [vmem:[%s1 + $0x28] sm:$0xff]
  %v2228 = vld [vmem:[%s1 + $0x30] sm:$0xff]
  %v2229 = vld [vmem:[%s1 + $0x38] sm:$0xff]
  %v2230 = vld [vmem:[%s1 + $0x40] sm:$0xff]
  %v2231 = vld [vmem:[%s1 + $0x48] sm:$0xff]
  %v2232 = vld [vmem:[%s1 + $0x50] sm:$0xff]
  %v2233 = vld [vmem:[%s1 + $0x58] sm:$0xff]
  %v2234 = vld [vmem:[%s1 + $0x60] sm:$0xff]
  %v2235 = vld [vmem:[%s1 + $0x68] sm:$0xff]
  %v2236 = vld [vmem:[%s1 + $0x70] sm:$0xff]
  %v2237 = vld [vmem:[%s1 + $0x78] sm:$0xff]
  %v2238 = vld [vmem:[%s1 + $0x80] sm:$0xff]
  %v2239 = vld [vmem:[%s1 + $0x88] sm:$0xff]
  %v2240 = vld [vmem:[%s1 + $0x90] sm:$0xff]
  %v2241 = vld [vmem:[%s1 + $0x98] sm:$0xff]
  %v2242 = vld [vmem:[%s1 + $0xa0] sm:$0xff]
  %v2243 = vld [vmem:[%s1 + $0xa8] sm:$0xff]
  %v2244 = vld [vmem:[%s1 + $0xb0] sm:$0xff]
  %v2245 = vld [vmem:[%s1 + $0xb8] sm:$0xff]
  %v2246 = vld [vmem:[%s1 + $0xc0] sm:$0xff]
  %v2247 = vld [vmem:[%s1 + $0xc8] sm:$0xff]
  %v2248 = vld [vmem:[%s1 + $0xd0] sm:$0xff]
  %v2249 = vld [vmem:[%s1 + $0xd8] sm:$0xff]
  %v2250 = vld [vmem:[%s1 + $0xe0] sm:$0xff]
  %v2251 = vld [vmem:[%s1 + $0xe8] sm:$0xff]
  %v2252 = vld [vmem:[%s1 + $0xf0] sm:$0xff]
  %v2253 = vld [vmem:[%s1 + $0xf8] sm:$0xff]
  %v2286 = vunpack.c.l.b16 %v2222
  %v2287 = vunpack.c.h.b16 %v2222
  %v2288 = vunpack.c.l.b16 %v2223
  %v2289 = vunpack.c.h.b16 %v2223
  %v2290 = vunpack.c.l.b16 %v2224
  %v2291 = vunpack.c.h.b16 %v2224
  %v2292 = vunpack.c.l.b16 %v2225
  %v2293 = vunpack.c.h.b16 %v2225
  %v2294 = vunpack.c.l.b16 %v2226
  %v2295 = vunpack.c.h.b16 %v2226
  %v2296 = vunpack.c.l.b16 %v2227
  %v2297 = vunpack.c.h.b16 %v2227
  %v2298 = vunpack.c.l.b16 %v2228
  %v2299 = vunpack.c.h.b16 %v2228
  %v2300 = vunpack.c.l.b16 %v2229
  %v2301 = vunpack.c.h.b16 %v2229
  %v2302 = vunpack.c.l.b16 %v2230
  %v2303 = vunpack.c.h.b16 %v2230
  %v2304 = vunpack.c.l.b16 %v2231
  %v2305 = vunpack.c.h.b16 %v2231
  %v2306 = vunpack.c.l.b16 %v2232
  %v2307 = vunpack.c.h.b16 %v2232
  %v2308 = vunpack.c.l.b16 %v2233
  %v2309 = vunpack.c.h.b16 %v2233
  %v2310 = vunpack.c.l.b16 %v2234
  %v2311 = vunpack.c.h.b16 %v2234
  %v2312 = vunpack.c.l.b16 %v2235
  %v2313 = vunpack.c.h.b16 %v2235
  %v2314 = vunpack.c.l.b16 %v2236
  %v2315 = vunpack.c.h.b16 %v2236
  %v2316 = vunpack.c.l.b16 %v2237
  %v2317 = vunpack.c.h.b16 %v2237
  %v2318 = vunpack.c.l.b16 %v2238
  %v2319 = vunpack.c.h.b16 %v2238
  %v2320 = vunpack.c.l.b16 %v2239
  %v2321 = vunpack.c.h.b16 %v2239
  %v2322 = vunpack.c.l.b16 %v2240
  %v2323 = vunpack.c.h.b16 %v2240
  %v2324 = vunpack.c.l.b16 %v2241
  %v2325 = vunpack.c.h.b16 %v2241
  %v2326 = vunpack.c.l.b16 %v2242
  %v2327 = vunpack.c.h.b16 %v2242
  %v2328 = vunpack.c.l.b16 %v2243
  %v2329 = vunpack.c.h.b16 %v2243
  %v2330 = vunpack.c.l.b16 %v2244
  %v2331 = vunpack.c.h.b16 %v2244
  %v2332 = vunpack.c.l.b16 %v2245
  %v2333 = vunpack.c.h.b16 %v2245
  %v2334 = vunpack.c.l.b16 %v2246
  %v2335 = vunpack.c.h.b16 %v2246
  %v2336 = vunpack.c.l.b16 %v2247
  %v2337 = vunpack.c.h.b16 %v2247
  %v2338 = vunpack.c.l.b16 %v2248
  %v2339 = vunpack.c.h.b16 %v2248
  %v2340 = vunpack.c.l.b16 %v2249
  %v2341 = vunpack.c.h.b16 %v2249
  %v2342 = vunpack.c.l.b16 %v2250
  %v2343 = vunpack.c.h.b16 %v2250
  %v2344 = vunpack.c.l.b16 %v2251
  %v2345 = vunpack.c.h.b16 %v2251
  %v2346 = vunpack.c.l.b16 %v2252
  %v2347 = vunpack.c.h.b16 %v2252
  %v2348 = vunpack.c.l.b16 %v2253
  %v2349 = vunpack.c.h.b16 %v2253
  %v2350 = vpack.c.b16 %v2290, %v2286
  %v2351 = vpack.c.b16 %v2291, %v2287
  %v2352 = vpack.c.b16 %v2292, %v2288
  %v2353 = vpack.c.b16 %v2293, %v2289
  %v2354 = vpack.c.b16 %v2298, %v2294
  %v2355 = vpack.c.b16 %v2299, %v2295
  %v2356 = vpack.c.b16 %v2300, %v2296
  %v2357 = vpack.c.b16 %v2301, %v2297
  %v2358 = vpack.c.b16 %v2306, %v2302
  %v2359 = vpack.c.b16 %v2307, %v2303
  %v2360 = vpack.c.b16 %v2308, %v2304
  %v2361 = vpack.c.b16 %v2309, %v2305
  %v2362 = vpack.c.b16 %v2314, %v2310
  %v2363 = vpack.c.b16 %v2315, %v2311
  %v2364 = vpack.c.b16 %v2316, %v2312
  %v2365 = vpack.c.b16 %v2317, %v2313
  %v2366 = vpack.c.b16 %v2322, %v2318
  %v2367 = vpack.c.b16 %v2323, %v2319
  %v2368 = vpack.c.b16 %v2324, %v2320
  %v2369 = vpack.c.b16 %v2325, %v2321
  %v2370 = vpack.c.b16 %v2330, %v2326
  %v2371 = vpack.c.b16 %v2331, %v2327
  %v2372 = vpack.c.b16 %v2332, %v2328
  %v2373 = vpack.c.b16 %v2333, %v2329
  %v2374 = vpack.c.b16 %v2338, %v2334
  %v2375 = vpack.c.b16 %v2339, %v2335
  %v2376 = vpack.c.b16 %v2340, %v2336
  %v2377 = vpack.c.b16 %v2341, %v2337
  %v2378 = vpack.c.b16 %v2346, %v2342
  %v2379 = vpack.c.b16 %v2347, %v2343
  %v2380 = vpack.c.b16 %v2348, %v2344
  %v2381 = vpack.c.b16 %v2349, %v2345
  %2414 = vmatprep.subr.bf16.mxu0 %v2379
  %2415 = vmatpush1.bf16.msra.mxu0 %v2378
  %2416 = vmatprep.subr.bf16.mxu0 %v2375
  %2417 = vmatpush1.bf16.msra.mxu0 %v2374
  %2418 = vmatprep.subr.bf16.mxu0 %v2371
  %2419 = vmatpush1.bf16.msra.mxu0 %v2370
  %2420 = vmatprep.subr.bf16.mxu0 %v2367
  %2421 = vmatpush1.bf16.msra.mxu0 %v2366
  %2422 = vmatprep.subr.bf16.mxu0 %v2363
  %2423 = vmatpush1.bf16.msra.mxu0 %v2362
  %2424 = vmatprep.subr.bf16.mxu0 %v2359
  %2425 = vmatpush1.bf16.msra.mxu0 %v2358
  %2426 = vmatprep.subr.bf16.mxu0 %v2355
  %2427 = vmatpush1.bf16.msra.mxu0 %v2354
  %2428 = vmatprep.subr.bf16.mxu0 %v2351
  %2429 = vmatpush1.bf16.msra.mxu0 %v2350
  %2430 = vmatprep.subr.bf16.mxu0 0
  %2431 = vmatpush2.bf16.msra.mxu0 0
  %2432 = vmatprep.subr.bf16.mxu0 0
  %2433 = vmatpush2.bf16.msra.mxu0 0
  %2434 = vmatprep.subr.bf16.mxu0 0
  %2435 = vmatpush2.bf16.msra.mxu0 0
  %2436 = vmatprep.subr.bf16.mxu0 0
  %2437 = vmatpush2.bf16.msra.mxu0 0
  %2438 = vmatprep.subr.bf16.mxu0 0
  %2439 = vmatpush2.bf16.msra.mxu0 0
  %2440 = vmatprep.subr.bf16.mxu0 0
  %2441 = vmatpush2.bf16.msra.mxu0 0
  %2442 = vmatprep.subr.bf16.mxu0 0
  %2443 = vmatpush2.bf16.msra.mxu0 0
  %2444 = vmatprep.subr.bf16.mxu0 0
  %2445 = vmatpush2.bf16.msra.mxu0 0
  %2446 = vmatprep.mubr.bf16.mxu0 0
  %2447 = vmatmul.mubr.bf16.gmra.mxu0 %v2221
  %v2448 = vpop.f32.mrf.mxu0
  %v2449 = vadd.f32 0.0, %v2448
  %v2450 = vpop.f32.mrf.mxu0
  %v2451 = vadd.f32 0.0, %v2450
  %v2452 = vpop.f32.mrf.mxu0
  %v2453 = vpop.f32.mrf.mxu0
  %2454 = vdwg.mxu0
  %2455 = vmatprep.subr.bf16.mxu0 %v2381
  %2456 = vmatpush1.bf16.msra.mxu0 %v2380
  %2457 = vmatprep.subr.bf16.mxu0 %v2377
  %2458 = vmatpush1.bf16.msra.mxu0 %v2376
  %2459 = vmatprep.subr.bf16.mxu0 %v2373
  %2460 = vmatpush1.bf16.msra.mxu0 %v2372
  %2461 = vmatprep.subr.bf16.mxu0 %v2369
  %2462 = vmatpush1.bf16.msra.mxu0 %v2368
  %2463 = vmatprep.subr.bf16.mxu0 %v2365
  %2464 = vmatpush1.bf16.msra.mxu0 %v2364
  %2465 = vmatprep.subr.bf16.mxu0 %v2361
  %2466 = vmatpush1.bf16.msra.mxu0 %v2360
  %2467 = vmatprep.subr.bf16.mxu0 %v2357
  %2468 = vmatpush1.bf16.msra.mxu0 %v2356
  %2469 = vmatprep.subr.bf16.mxu0 %v2353
  %2470 = vmatpush1.bf16.msra.mxu0 %v2352
  %2471 = vmatprep.subr.bf16.mxu0 0
  %2472 = vmatpush2.bf16.msra.mxu0 0
  %2473 = vmatprep.subr.bf16.mxu0 0
  %2474 = vmatpush2.bf16.msra.mxu0 0
  %2475 = vmatprep.subr.bf16.mxu0 0
  %2476 = vmatpush2.bf16.msra.mxu0 0
  %2477 = vmatprep.subr.bf16.mxu0 0
  %2478 = vmatpush2.bf16.msra.mxu0 0
  %2479 = vmatprep.subr.bf16.mxu0 0
  %2480 = vmatpush2.bf16.msra.mxu0 0
  %2481 = vmatprep.subr.bf16.mxu0 0
  %2482 = vmatpush2.bf16.msra.mxu0 0
  %2483 = vmatprep.subr.bf16.mxu0 0
  %2484 = vmatpush2.bf16.msra.mxu0 0
  %2485 = vmatprep.subr.bf16.mxu0 0
  %2486 = vmatpush2.bf16.msra.mxu0 0
  %2487 = vmatprep.mubr.bf16.mxu0 0
  %2488 = vmatmul.mubr.bf16.gmra.mxu0 %v2221
  %v2489 = vpop.f32.mrf.mxu0
  %v2490 = vadd.f32 0.0, %v2489
  %v2491 = vpop.f32.mrf.mxu0
  %v2492 = vadd.f32 0.0, %v2491
  %v2493 = vpop.f32.mrf.mxu0
  %v2494 = vpop.f32.mrf.mxu0
  %2495 = vdwg.mxu0
  %v2496 = vadd.f32 %v2217, %v2449
  %v2497 = vadd.f32 %v2218, %v2451
  %v2498 = vadd.f32 %v2219, %v2490
  %v2499 = vadd.f32 %v2220, %v2492
  %v2500 = vxor.u32 %v2496, 2147483648
  %v2501 = vmul.f32 %v2500, 1.442695
  %v2502 = vpow.pop %v2501
  %v2503 = vadd.f32 %v2502, 1.0
  %v2504 = vrcp.pop %v2503
  %v2505 = vmul.f32 1.0, %v2504
  %v2506 = vxor.u32 %v2497, 2147483648
  %v2507 = vmul.f32 %v2506, 1.442695
  %v2508 = vpow.pop %v2507
  %v2509 = vadd.f32 %v2508, 1.0
  %v2510 = vrcp.pop %v2509
  %v2511 = vmul.f32 1.0, %v2510
  %v2512 = vtanh.pop %v2498
  %v2513 = vxor.u32 %v2499, 2147483648
  %v2514 = vmul.f32 %v2513, 1.442695
  %v2515 = vpow.pop %v2514
  %v2516 = vadd.f32 %v2515, 1.0
  %v2517 = vrcp.pop %v2516
  %v2518 = vmul.f32 1.0, %v2517
  %v2519 = vmul.f32 %v2511, %v2215
  %v2520 = vmul.f32 %v2505, %v2512
  %v2521 = vadd.f32 %v2519, %v2520
  %v2522 = vtanh.pop %v2521
  %v2523 = vmul.f32 %v2518, %v2522
  %2524 = vst [vmem:[#allocation3] sm:$0xff] %v2521
  %2525 = vst [vmem:[#allocation2] sm:$0xff] %v2523
  %s2526 = scalar_lea.vmem %s2, 56
  %2527 = vst [vmem:[%s2526] sm:$0xff] %v2523
  // Predicated region
  $region14: #{lstm_model_forward.6} parent=0 // pred_check
    _
  $region15: #{lstm_model_forward.6} parent=0 // pred_check_branch
    %2529 = sbr.rel (0) target = $region17
  $region16: #{lstm_model_forward.6} parent=0 // pred_region
    _
  $region17: #{lstm_model_forward.6} parent=0 // pred_fallthru
    _
  // Predicated region
  $region18: #{lstm_model_forward.6} parent=0 // pred_check
    _
  $region19: #{lstm_model_forward.6} parent=0 // pred_check_branch
    %2531 = sbr.rel (0) target = $region21
  $region20: #{lstm_model_forward.6} parent=0 // pred_region
    _
  $region21: #{lstm_model_forward.6} parent=0 // pred_fallthru
    _

</llo_original>
